<compile_context>
chip_gen: v5e
topology: v5e:2x2
jax: 0.10.0
libtpu: 0.0.40
codegen_flags: <defaults>
</compile_context>

<pallas_src>
import jax
import jax.numpy as jnp
from jax.experimental import pallas as pl
from jax.experimental.pallas import tpu as pltpu

# Model hyper-parameters (small, kernel-friendly instance of the module)
INPUT_SIZE = 1
HIDDEN = 128          # hidden_layer_size (module default is 256; small aligned size used here)
OUTPUT_SIZE = 1
NUM_LAYERS = 3

LANE = 128
B_PAD = 8             # batch padded to a full sublane group


def _lstm_cell_nonlin(gates, c):
    """Gate order (i, f, o, g): fused sigmoid over the first 3H lanes, tanh over the last H."""
    H = gates.shape[-1] // 4
    sig = jax.nn.sigmoid(gates[:, :3 * H])
    i_g = sig[:, 0 * H:1 * H]
    f_g = sig[:, 1 * H:2 * H]
    o_g = sig[:, 2 * H:3 * H]
    g_g = jnp.tanh(gates[:, 3 * H:])
    c_new = f_g * c + i_g * g_g
    h_new = o_g * jnp.tanh(c_new)
    return h_new, c_new


def lstm_model_kernel(x_ref, wih0_ref, whh0_ref, wm_ref, b_ref, wlin_ref, blin_ref, out_ref):
    """3-layer LSTM over all timesteps + final linear projection, single program.

    x_ref:    [B_PAD, T]       f32   input scalars (lane = time)
    wih0_ref: [B_PAD, 4H]      f32   layer-0 input->gate row, pre-broadcast over batch
    whh0_ref: [H, 4H]          bf16  layer-0 hidden->gate weight
    wm_ref:   [2, 2H, 4H]      bf16  layers 1..2 merged [W_ih; W_hh] (K = 2H)
    b_ref:    [3, B_PAD, 4H]   f32   fused gate biases (b_ih + b_hh), pre-broadcast over batch
    wlin_ref: [H, LANE]        f32   final linear weight (only column 0 is real)
    blin_ref: [1, LANE]        f32   final linear bias   (only column 0 is real)
    out_ref:  [B_PAD, LANE]    f32   predictions (column 0), padded
    """
    T = x_ref.shape[1]
    B = x_ref.shape[0]
    H = whh0_ref.shape[0]

    def dot_f32(a, w):
        return jnp.dot(a, w, preferred_element_type=jnp.float32)

    h0 = h1 = h2 = jnp.zeros((B, H), jnp.bfloat16)   # h carried in bf16 (MXU operand dtype)
    c0 = c1 = c2 = jnp.zeros((B, H), jnp.float32)    # c carried in f32
    h2_f32 = jnp.zeros((B, H), jnp.float32)

    # T == 8: fully unrolled static time loop (serial dependence; no grid / pipelining wanted).
    for t in range(T):
        x_t = x_ref[:, pl.ds(t, 1)]                                         # [B, 1]
        # layer 0: input projection is a broadcast-multiply (in_dim == 1) + one recurrent matmul.
        g0 = x_t * wih0_ref[...] + dot_f32(h0, whh0_ref[...]) + b_ref[0]
        h0_f32, c0 = _lstm_cell_nonlin(g0, c0)
        h0 = h0_f32.astype(jnp.bfloat16)
        # layer 1: single merged [W_ih; W_hh] matmul over concat(h0_t, h1_{t-1}), K = 2H.
        g1 = dot_f32(jnp.concatenate([h0, h1], axis=-1), wm_ref[0]) + b_ref[1]
        h1_f32, c1 = _lstm_cell_nonlin(g1, c1)
        h1 = h1_f32.astype(jnp.bfloat16)
        # layer 2: same merged-dot structure.
        g2 = dot_f32(jnp.concatenate([h1, h2], axis=-1), wm_ref[1]) + b_ref[2]
        h2_f32, c2 = _lstm_cell_nonlin(g2, c2)
        h2 = h2_f32.astype(jnp.bfloat16)

    # dropout(eval) == identity; linear projection of the last top-layer hidden state (f32).
    out_ref[...] = (dot_f32(h2_f32, wlin_ref[...]) + blin_ref[...]).astype(out_ref.dtype)


@jax.jit
def lstm_model_forward(x, wih0, whh0, wm, bias, wlin, blin):
    """x: [B, T, INPUT_SIZE] float32 (batch_first, like the PyTorch module). Returns [B, 1]."""
    B, T, _ = x.shape
    assert B <= B_PAD
    # Layout glue only: drop the size-1 feature dim and pad batch to a full sublane group.
    x_bt = jnp.pad(x[:, :, 0], ((0, B_PAD - B), (0, 0)))                    # [B_PAD, T]

    vmem = pl.BlockSpec(memory_space=pltpu.MemorySpace.VMEM)
    out_padded = pl.pallas_call(
        lstm_model_kernel,
        out_shape=jax.ShapeDtypeStruct((B_PAD, LANE), jnp.float32),
        in_specs=[vmem] * 7,
        out_specs=vmem,
        compiler_params=pltpu.CompilerParams(vmem_limit_bytes=8 << 20),
    )(x_bt, wih0, whh0, wm, bias, wlin, blin)

    return out_padded[:B, :OUTPUT_SIZE]                                     # [B, 1]


def _reorder_gates_ifog(w4h):
    """Reorder the 4H gate axis (axis 0) from PyTorch (i, f, g, o) to kernel (i, f, o, g)."""
    i, f, g, o = jnp.split(w4h, 4, axis=0)
    return jnp.concatenate([i, f, o, g], axis=0)


def init_params(key):
    """Deterministic PyTorch-style init: U(-1/sqrt(H), 1/sqrt(H)) for every tensor."""
    bound = 1.0 / jnp.sqrt(jnp.float32(HIDDEN))
    keys = jax.random.split(key, 4 * NUM_LAYERS + 2)

    wih0 = whh0 = None
    wm_list, b_list = [], []
    k = 0
    for layer in range(NUM_LAYERS):
        in_dim = INPUT_SIZE if layer == 0 else HIDDEN
        w_ih = jax.random.uniform(keys[k], (4 * HIDDEN, in_dim), jnp.float32, -bound, bound); k += 1
        w_hh = jax.random.uniform(keys[k], (4 * HIDDEN, HIDDEN), jnp.float32, -bound, bound); k += 1
        b_ih = jax.random.uniform(keys[k], (4 * HIDDEN,), jnp.float32, -bound, bound); k += 1
        b_hh = jax.random.uniform(keys[k], (4 * HIDDEN,), jnp.float32, -bound, bound); k += 1

        # (i,f,g,o) -> (i,f,o,g), then transpose to "x @ W" form.
        w_ih_t = _reorder_gates_ifog(w_ih).T                  # [in_dim, 4H]
        w_hh_t = _reorder_gates_ifog(w_hh).T                  # [H, 4H]
        b_fused = _reorder_gates_ifog((b_ih + b_hh)[:, None])[:, 0]         # [4H]

        if layer == 0:
            # layer-0 input row stays f32 (VPU multiply) and is pre-broadcast over the batch.
            wih0 = jnp.broadcast_to(w_ih_t, (B_PAD, 4 * HIDDEN)).astype(jnp.float32)
            whh0 = w_hh_t.astype(jnp.bfloat16)                # [H, 4H] bf16
        else:
            # merged [W_ih; W_hh] along K -> [2H, 4H] bf16 (single MXU matmul per layer per step)
            wm_list.append(jnp.concatenate([w_ih_t, w_hh_t], axis=0).astype(jnp.bfloat16))
        b_list.append(jnp.broadcast_to(b_fused[None, :], (B_PAD, 4 * HIDDEN)).astype(jnp.float32))

    wm = jnp.stack(wm_list)                                   # [2, 2H, 4H] bf16
    bias = jnp.stack(b_list)                                  # [3, B_PAD, 4H] f32

    lin_bound = 1.0 / jnp.sqrt(jnp.float32(HIDDEN))
    w_lin = jax.random.uniform(keys[k], (OUTPUT_SIZE, HIDDEN), jnp.float32, -lin_bound, lin_bound); k += 1
    b_lin = jax.random.uniform(keys[k], (OUTPUT_SIZE,), jnp.float32, -lin_bound, lin_bound); k += 1

    wlin = jnp.zeros((HIDDEN, LANE), jnp.float32).at[:, :OUTPUT_SIZE].set(w_lin.T)
    blin = jnp.zeros((1, LANE), jnp.float32).at[0, :OUTPUT_SIZE].set(b_lin)
    return wih0, whh0, wm, bias, wlin, blin


def reference_forward(x, wih0, whh0, wm, bias, wlin, blin):
    """Pure-JAX mirror of the kernel math (same merged (i,f,o,g) weights, same bf16 h carries)."""
    B, T, _ = x.shape
    H = HIDDEN
    h = [jnp.zeros((B, H), jnp.bfloat16) for _ in range(NUM_LAYERS)]
    c = [jnp.zeros((B, H), jnp.float32) for _ in range(NUM_LAYERS)]
    h2_f32 = jnp.zeros((B, H), jnp.float32)
    for t in range(T):
        x_t = x[:, t, :]                                                     # [B, 1]
        g0 = x_t * wih0[:B] + jnp.dot(h[0], whh0, preferred_element_type=jnp.float32) + bias[0, :B]
        h0_f32, c[0] = _lstm_cell_nonlin(g0, c[0])
        h[0] = h0_f32.astype(jnp.bfloat16)
        g1 = jnp.dot(jnp.concatenate([h[0], h[1]], axis=-1), wm[0],
                     preferred_element_type=jnp.float32) + bias[1, :B]
        h1_f32, c[1] = _lstm_cell_nonlin(g1, c[1])
        h[1] = h1_f32.astype(jnp.bfloat16)
        g2 = jnp.dot(jnp.concatenate([h[1], h[2]], axis=-1), wm[1],
                     preferred_element_type=jnp.float32) + bias[2, :B]
        h2_f32, c[2] = _lstm_cell_nonlin(g2, c[2])
        h[2] = h2_f32.astype(jnp.bfloat16)
    out = jnp.dot(h2_f32, wlin, preferred_element_type=jnp.float32) + blin
    return out[:, :OUTPUT_SIZE]


if __name__ == "__main__":
    key = jax.random.PRNGKey(0)
    k_param, k_x = jax.random.split(key)

    B, T = 2, 8
    x = jax.random.normal(k_x, (B, T, INPUT_SIZE), dtype=jnp.float32)

    params = init_params(k_param)

    out = lstm_model_forward(x, *params)
    out = jax.block_until_ready(out)

    ref = reference_forward(x, *params)
    assert out.shape == (B, OUTPUT_SIZE)
    assert jnp.allclose(out, ref, rtol=2e-3, atol=2e-3), (out, ref)

    print("KERNEL_OK")
</pallas_src>

<mosaic_0001>
module attributes {stable_mosaic.version = 11 : i64} {
  func.func @lstm_model_kernel(%arg0: memref<8x8xf32, #tpu.memory_space<vmem>>, %arg1: memref<8x512xf32, #tpu.memory_space<vmem>>, %arg2: memref<128x512xbf16, #tpu.memory_space<vmem>>, %arg3: memref<2x256x512xbf16, #tpu.memory_space<vmem>>, %arg4: memref<3x8x512xf32, #tpu.memory_space<vmem>>, %arg5: memref<128x128xf32, #tpu.memory_space<vmem>>, %arg6: memref<1x128xf32, #tpu.memory_space<vmem>>, %arg7: memref<8x128xf32, #tpu.memory_space<vmem>>) attributes {dimension_semantics = [], scalar_prefetch = 0 : i64, scratch_operands = 0 : i64, tpu.core_type = #tpu.core_type<tc>} {
    %cst = arith.constant 0.000000e+00 : bf16
    %0 = vector.broadcast %cst : bf16 to vector<8x128xbf16>
    %cst_0 = arith.constant 0.000000e+00 : f32
    %1 = vector.broadcast %cst_0 : f32 to vector<8x128xf32>
    %c0 = arith.constant 0 : index
    %c0_1 = arith.constant 0 : index
    %2 = vector.load %arg0[%c0, %c0_1] : memref<8x8xf32, #tpu.memory_space<vmem>>, vector<8x1xf32>
    %c0_2 = arith.constant 0 : index
    %c0_3 = arith.constant 0 : index
    %3 = vector.load %arg1[%c0_2, %c0_3] : memref<8x512xf32, #tpu.memory_space<vmem>>, vector<8x512xf32>
    %4 = vector.broadcast %2 : vector<8x1xf32> to vector<8x512xf32>
    %5 = arith.mulf %4, %3 : vector<8x512xf32>
    %c0_4 = arith.constant 0 : index
    %c0_5 = arith.constant 0 : index
    %6 = vector.load %arg2[%c0_4, %c0_5] : memref<128x512xbf16, #tpu.memory_space<vmem>>, vector<128x512xbf16>
    %cst_6 = arith.constant dense<0.000000e+00> : vector<8x512xf32>
    %7 = tpu.matmul %0, %6, %cst_6 {dimension_numbers = #tpu.dot_dimension_numbers<[1], [0], [0], [1], [0, 0, 1, 1], [], []>} : vector<8x128xbf16>, vector<128x512xbf16>, vector<8x512xf32> -> vector<8x512xf32>
    %8 = arith.addf %5, %7 : vector<8x512xf32>
    %c0_7 = arith.constant 0 : index
    %c0_8 = arith.constant 0 : index
    %c0_9 = arith.constant 0 : index
    %9 = vector.load %arg4[%c0_7, %c0_8, %c0_9] : memref<3x8x512xf32, #tpu.memory_space<vmem>>, vector<1x8x512xf32>
    %10 = vector.shape_cast %9 : vector<1x8x512xf32> to vector<8x512xf32>
    %11 = arith.addf %8, %10 : vector<8x512xf32>
    %12 = vector.extract_strided_slice %11 {offsets = [0, 0], sizes = [8, 384], strides = [1, 1]} : vector<8x512xf32> to vector<8x384xf32>
    %13 = arith.negf %12 : vector<8x384xf32>
    %14 = math.exp %13 : vector<8x384xf32>
    %cst_10 = arith.constant 1.000000e+00 : f32
    %15 = vector.broadcast %cst_10 : f32 to vector<8x384xf32>
    %16 = arith.addf %15, %14 : vector<8x384xf32>
    %17 = arith.divf %15, %16 : vector<8x384xf32>
    %18 = vector.extract_strided_slice %17 {offsets = [0, 0], sizes = [8, 128], strides = [1, 1]} : vector<8x384xf32> to vector<8x128xf32>
    %19 = vector.extract_strided_slice %17 {offsets = [0, 128], sizes = [8, 128], strides = [1, 1]} : vector<8x384xf32> to vector<8x128xf32>
    %20 = vector.extract_strided_slice %17 {offsets = [0, 256], sizes = [8, 128], strides = [1, 1]} : vector<8x384xf32> to vector<8x128xf32>
    %21 = vector.extract_strided_slice %11 {offsets = [0, 384], sizes = [8, 128], strides = [1, 1]} : vector<8x512xf32> to vector<8x128xf32>
    %22 = math.tanh %21 : vector<8x128xf32>
    %23 = arith.mulf %19, %1 : vector<8x128xf32>
    %24 = arith.mulf %18, %22 : vector<8x128xf32>
    %25 = arith.addf %23, %24 : vector<8x128xf32>
    %26 = math.tanh %25 : vector<8x128xf32>
    %27 = arith.mulf %20, %26 : vector<8x128xf32>
    %28 = arith.truncf %27 : vector<8x128xf32> to vector<8x128xbf16>
    %29 = tpu.concatenate %28, %0 in 1 : vector<8x128xbf16>, vector<8x128xbf16> -> vector<8x256xbf16>
    %c0_11 = arith.constant 0 : index
    %c0_12 = arith.constant 0 : index
    %c0_13 = arith.constant 0 : index
    %30 = vector.load %arg3[%c0_11, %c0_12, %c0_13] : memref<2x256x512xbf16, #tpu.memory_space<vmem>>, vector<1x256x512xbf16>
    %31 = vector.shape_cast %30 : vector<1x256x512xbf16> to vector<256x512xbf16>
    %cst_14 = arith.constant dense<0.000000e+00> : vector<8x512xf32>
    %32 = tpu.matmul %29, %31, %cst_14 {dimension_numbers = #tpu.dot_dimension_numbers<[1], [0], [0], [1], [0, 0, 1, 1], [], []>} : vector<8x256xbf16>, vector<256x512xbf16>, vector<8x512xf32> -> vector<8x512xf32>
    %c1 = arith.constant 1 : index
    %c0_15 = arith.constant 0 : index
    %c0_16 = arith.constant 0 : index
    %33 = vector.load %arg4[%c1, %c0_15, %c0_16] : memref<3x8x512xf32, #tpu.memory_space<vmem>>, vector<1x8x512xf32>
    %34 = vector.shape_cast %33 : vector<1x8x512xf32> to vector<8x512xf32>
    %35 = arith.addf %32, %34 : vector<8x512xf32>
    %36 = vector.extract_strided_slice %35 {offsets = [0, 0], sizes = [8, 384], strides = [1, 1]} : vector<8x512xf32> to vector<8x384xf32>
    %37 = arith.negf %36 : vector<8x384xf32>
    %38 = math.exp %37 : vector<8x384xf32>
    %cst_17 = arith.constant 1.000000e+00 : f32
    %39 = vector.broadcast %cst_17 : f32 to vector<8x384xf32>
    %40 = arith.addf %39, %38 : vector<8x384xf32>
    %41 = arith.divf %39, %40 : vector<8x384xf32>
    %42 = vector.extract_strided_slice %41 {offsets = [0, 0], sizes = [8, 128], strides = [1, 1]} : vector<8x384xf32> to vector<8x128xf32>
    %43 = vector.extract_strided_slice %41 {offsets = [0, 128], sizes = [8, 128], strides = [1, 1]} : vector<8x384xf32> to vector<8x128xf32>
    %44 = vector.extract_strided_slice %41 {offsets = [0, 256], sizes = [8, 128], strides = [1, 1]} : vector<8x384xf32> to vector<8x128xf32>
    %45 = vector.extract_strided_slice %35 {offsets = [0, 384], sizes = [8, 128], strides = [1, 1]} : vector<8x512xf32> to vector<8x128xf32>
    %46 = math.tanh %45 : vector<8x128xf32>
    %47 = arith.mulf %43, %1 : vector<8x128xf32>
    %48 = arith.mulf %42, %46 : vector<8x128xf32>
    %49 = arith.addf %47, %48 : vector<8x128xf32>
    %50 = math.tanh %49 : vector<8x128xf32>
    %51 = arith.mulf %44, %50 : vector<8x128xf32>
    %52 = arith.truncf %51 : vector<8x128xf32> to vector<8x128xbf16>
    %53 = tpu.concatenate %52, %0 in 1 : vector<8x128xbf16>, vector<8x128xbf16> -> vector<8x256xbf16>
    %c1_18 = arith.constant 1 : index
    %c0_19 = arith.constant 0 : index
    %c0_20 = arith.constant 0 : index
    %54 = vector.load %arg3[%c1_18, %c0_19, %c0_20] : memref<2x256x512xbf16, #tpu.memory_space<vmem>>, vector<1x256x512xbf16>
    %55 = vector.shape_cast %54 : vector<1x256x512xbf16> to vector<256x512xbf16>
    %cst_21 = arith.constant dense<0.000000e+00> : vector<8x512xf32>
    %56 = tpu.matmul %53, %55, %cst_21 {dimension_numbers = #tpu.dot_dimension_numbers<[1], [0], [0], [1], [0, 0, 1, 1], [], []>} : vector<8x256xbf16>, vector<256x512xbf16>, vector<8x512xf32> -> vector<8x512xf32>
    %c2 = arith.constant 2 : index
    %c0_22 = arith.constant 0 : index
    %c0_23 = arith.constant 0 : index
    %57 = vector.load %arg4[%c2, %c0_22, %c0_23] : memref<3x8x512xf32, #tpu.memory_space<vmem>>, vector<1x8x512xf32>
    %58 = vector.shape_cast %57 : vector<1x8x512xf32> to vector<8x512xf32>
    %59 = arith.addf %56, %58 : vector<8x512xf32>
    %60 = vector.extract_strided_slice %59 {offsets = [0, 0], sizes = [8, 384], strides = [1, 1]} : vector<8x512xf32> to vector<8x384xf32>
    %61 = arith.negf %60 : vector<8x384xf32>
    %62 = math.exp %61 : vector<8x384xf32>
    %cst_24 = arith.constant 1.000000e+00 : f32
    %63 = vector.broadcast %cst_24 : f32 to vector<8x384xf32>
    %64 = arith.addf %63, %62 : vector<8x384xf32>
    %65 = arith.divf %63, %64 : vector<8x384xf32>
    %66 = vector.extract_strided_slice %65 {offsets = [0, 0], sizes = [8, 128], strides = [1, 1]} : vector<8x384xf32> to vector<8x128xf32>
    %67 = vector.extract_strided_slice %65 {offsets = [0, 128], sizes = [8, 128], strides = [1, 1]} : vector<8x384xf32> to vector<8x128xf32>
    %68 = vector.extract_strided_slice %65 {offsets = [0, 256], sizes = [8, 128], strides = [1, 1]} : vector<8x384xf32> to vector<8x128xf32>
    %69 = vector.extract_strided_slice %59 {offsets = [0, 384], sizes = [8, 128], strides = [1, 1]} : vector<8x512xf32> to vector<8x128xf32>
    %70 = math.tanh %69 : vector<8x128xf32>
    %71 = arith.mulf %67, %1 : vector<8x128xf32>
    %72 = arith.mulf %66, %70 : vector<8x128xf32>
    %73 = arith.addf %71, %72 : vector<8x128xf32>
    %74 = math.tanh %73 : vector<8x128xf32>
    %75 = arith.mulf %68, %74 : vector<8x128xf32>
    %76 = arith.truncf %75 : vector<8x128xf32> to vector<8x128xbf16>
    %c0_25 = arith.constant 0 : index
    %c1_26 = arith.constant 1 : index
    %77 = vector.load %arg0[%c0_25, %c1_26] : memref<8x8xf32, #tpu.memory_space<vmem>>, vector<8x1xf32>
    %c0_27 = arith.constant 0 : index
    %c0_28 = arith.constant 0 : index
    %78 = vector.load %arg1[%c0_27, %c0_28] : memref<8x512xf32, #tpu.memory_space<vmem>>, vector<8x512xf32>
    %79 = vector.broadcast %77 : vector<8x1xf32> to vector<8x512xf32>
    %80 = arith.mulf %79, %78 : vector<8x512xf32>
    %c0_29 = arith.constant 0 : index
    %c0_30 = arith.constant 0 : index
    %81 = vector.load %arg2[%c0_29, %c0_30] : memref<128x512xbf16, #tpu.memory_space<vmem>>, vector<128x512xbf16>
    %cst_31 = arith.constant dense<0.000000e+00> : vector<8x512xf32>
    %82 = tpu.matmul %28, %81, %cst_31 {dimension_numbers = #tpu.dot_dimension_numbers<[1], [0], [0], [1], [0, 0, 1, 1], [], []>} : vector<8x128xbf16>, vector<128x512xbf16>, vector<8x512xf32> -> vector<8x512xf32>
    %83 = arith.addf %80, %82 : vector<8x512xf32>
    %c0_32 = arith.constant 0 : index
    %c0_33 = arith.constant 0 : index
    %c0_34 = arith.constant 0 : index
    %84 = vector.load %arg4[%c0_32, %c0_33, %c0_34] : memref<3x8x512xf32, #tpu.memory_space<vmem>>, vector<1x8x512xf32>
    %85 = vector.shape_cast %84 : vector<1x8x512xf32> to vector<8x512xf32>
    %86 = arith.addf %83, %85 : vector<8x512xf32>
    %87 = vector.extract_strided_slice %86 {offsets = [0, 0], sizes = [8, 384], strides = [1, 1]} : vector<8x512xf32> to vector<8x384xf32>
    %88 = arith.negf %87 : vector<8x384xf32>
    %89 = math.exp %88 : vector<8x384xf32>
    %cst_35 = arith.constant 1.000000e+00 : f32
    %90 = vector.broadcast %cst_35 : f32 to vector<8x384xf32>
    %91 = arith.addf %90, %89 : vector<8x384xf32>
    %92 = arith.divf %90, %91 : vector<8x384xf32>
    %93 = vector.extract_strided_slice %92 {offsets = [0, 0], sizes = [8, 128], strides = [1, 1]} : vector<8x384xf32> to vector<8x128xf32>
    %94 = vector.extract_strided_slice %92 {offsets = [0, 128], sizes = [8, 128], strides = [1, 1]} : vector<8x384xf32> to vector<8x128xf32>
    %95 = vector.extract_strided_slice %92 {offsets = [0, 256], sizes = [8, 128], strides = [1, 1]} : vector<8x384xf32> to vector<8x128xf32>
    %96 = vector.extract_strided_slice %86 {offsets = [0, 384], sizes = [8, 128], strides = [1, 1]} : vector<8x512xf32> to vector<8x128xf32>
    %97 = math.tanh %96 : vector<8x128xf32>
    %98 = arith.mulf %94, %25 : vector<8x128xf32>
    %99 = arith.mulf %93, %97 : vector<8x128xf32>
    %100 = arith.addf %98, %99 : vector<8x128xf32>
    %101 = math.tanh %100 : vector<8x128xf32>
    %102 = arith.mulf %95, %101 : vector<8x128xf32>
    %103 = arith.truncf %102 : vector<8x128xf32> to vector<8x128xbf16>
    %104 = tpu.concatenate %103, %52 in 1 : vector<8x128xbf16>, vector<8x128xbf16> -> vector<8x256xbf16>
    %c0_36 = arith.constant 0 : index
    %c0_37 = arith.constant 0 : index
    %c0_38 = arith.constant 0 : index
    %105 = vector.load %arg3[%c0_36, %c0_37, %c0_38] : memref<2x256x512xbf16, #tpu.memory_space<vmem>>, vector<1x256x512xbf16>
    %106 = vector.shape_cast %105 : vector<1x256x512xbf16> to vector<256x512xbf16>
    %cst_39 = arith.constant dense<0.000000e+00> : vector<8x512xf32>
    %107 = tpu.matmul %104, %106, %cst_39 {dimension_numbers = #tpu.dot_dimension_numbers<[1], [0], [0], [1], [0, 0, 1, 1], [], []>} : vector<8x256xbf16>, vector<256x512xbf16>, vector<8x512xf32> -> vector<8x512xf32>
    %c1_40 = arith.constant 1 : index
    %c0_41 = arith.constant 0 : index
    %c0_42 = arith.constant 0 : index
    %108 = vector.load %arg4[%c1_40, %c0_41, %c0_42] : memref<3x8x512xf32, #tpu.memory_space<vmem>>, vector<1x8x512xf32>
    %109 = vector.shape_cast %108 : vector<1x8x512xf32> to vector<8x512xf32>
    %110 = arith.addf %107, %109 : vector<8x512xf32>
    %111 = vector.extract_strided_slice %110 {offsets = [0, 0], sizes = [8, 384], strides = [1, 1]} : vector<8x512xf32> to vector<8x384xf32>
    %112 = arith.negf %111 : vector<8x384xf32>
    %113 = math.exp %112 : vector<8x384xf32>
    %cst_43 = arith.constant 1.000000e+00 : f32
    %114 = vector.broadcast %cst_43 : f32 to vector<8x384xf32>
    %115 = arith.addf %114, %113 : vector<8x384xf32>
    %116 = arith.divf %114, %115 : vector<8x384xf32>
    %117 = vector.extract_strided_slice %116 {offsets = [0, 0], sizes = [8, 128], strides = [1, 1]} : vector<8x384xf32> to vector<8x128xf32>
    %118 = vector.extract_strided_slice %116 {offsets = [0, 128], sizes = [8, 128], strides = [1, 1]} : vector<8x384xf32> to vector<8x128xf32>
    %119 = vector.extract_strided_slice %116 {offsets = [0, 256], sizes = [8, 128], strides = [1, 1]} : vector<8x384xf32> to vector<8x128xf32>
    %120 = vector.extract_strided_slice %110 {offsets = [0, 384], sizes = [8, 128], strides = [1, 1]} : vector<8x512xf32> to vector<8x128xf32>
    %121 = math.tanh %120 : vector<8x128xf32>
    %122 = arith.mulf %118, %49 : vector<8x128xf32>
    %123 = arith.mulf %117, %121 : vector<8x128xf32>
    %124 = arith.addf %122, %123 : vector<8x128xf32>
    %125 = math.tanh %124 : vector<8x128xf32>
    %126 = arith.mulf %119, %125 : vector<8x128xf32>
    %127 = arith.truncf %126 : vector<8x128xf32> to vector<8x128xbf16>
    %128 = tpu.concatenate %127, %76 in 1 : vector<8x128xbf16>, vector<8x128xbf16> -> vector<8x256xbf16>
    %c1_44 = arith.constant 1 : index
    %c0_45 = arith.constant 0 : index
    %c0_46 = arith.constant 0 : index
    %129 = vector.load %arg3[%c1_44, %c0_45, %c0_46] : memref<2x256x512xbf16, #tpu.memory_space<vmem>>, vector<1x256x512xbf16>
    %130 = vector.shape_cast %129 : vector<1x256x512xbf16> to vector<256x512xbf16>
    %cst_47 = arith.constant dense<0.000000e+00> : vector<8x512xf32>
    %131 = tpu.matmul %128, %130, %cst_47 {dimension_numbers = #tpu.dot_dimension_numbers<[1], [0], [0], [1], [0, 0, 1, 1], [], []>} : vector<8x256xbf16>, vector<256x512xbf16>, vector<8x512xf32> -> vector<8x512xf32>
    %c2_48 = arith.constant 2 : index
    %c0_49 = arith.constant 0 : index
    %c0_50 = arith.constant 0 : index
    %132 = vector.load %arg4[%c2_48, %c0_49, %c0_50] : memref<3x8x512xf32, #tpu.memory_space<vmem>>, vector<1x8x512xf32>
    %133 = vector.shape_cast %132 : vector<1x8x512xf32> to vector<8x512xf32>
    %134 = arith.addf %131, %133 : vector<8x512xf32>
    %135 = vector.extract_strided_slice %134 {offsets = [0, 0], sizes = [8, 384], strides = [1, 1]} : vector<8x512xf32> to vector<8x384xf32>
    %136 = arith.negf %135 : vector<8x384xf32>
    %137 = math.exp %136 : vector<8x384xf32>
    %cst_51 = arith.constant 1.000000e+00 : f32
    %138 = vector.broadcast %cst_51 : f32 to vector<8x384xf32>
    %139 = arith.addf %138, %137 : vector<8x384xf32>
    %140 = arith.divf %138, %139 : vector<8x384xf32>
    %141 = vector.extract_strided_slice %140 {offsets = [0, 0], sizes = [8, 128], strides = [1, 1]} : vector<8x384xf32> to vector<8x128xf32>
    %142 = vector.extract_strided_slice %140 {offsets = [0, 128], sizes = [8, 128], strides = [1, 1]} : vector<8x384xf32> to vector<8x128xf32>
    %143 = vector.extract_strided_slice %140 {offsets = [0, 256], sizes = [8, 128], strides = [1, 1]} : vector<8x384xf32> to vector<8x128xf32>
    %144 = vector.extract_strided_slice %134 {offsets = [0, 384], sizes = [8, 128], strides = [1, 1]} : vector<8x512xf32> to vector<8x128xf32>
    %145 = math.tanh %144 : vector<8x128xf32>
    %146 = arith.mulf %142, %73 : vector<8x128xf32>
    %147 = arith.mulf %141, %145 : vector<8x128xf32>
    %148 = arith.addf %146, %147 : vector<8x128xf32>
    %149 = math.tanh %148 : vector<8x128xf32>
    %150 = arith.mulf %143, %149 : vector<8x128xf32>
    %151 = arith.truncf %150 : vector<8x128xf32> to vector<8x128xbf16>
    %c0_52 = arith.constant 0 : index
    %c2_53 = arith.constant 2 : index
    %152 = vector.load %arg0[%c0_52, %c2_53] : memref<8x8xf32, #tpu.memory_space<vmem>>, vector<8x1xf32>
    %c0_54 = arith.constant 0 : index
    %c0_55 = arith.constant 0 : index
    %153 = vector.load %arg1[%c0_54, %c0_55] : memref<8x512xf32, #tpu.memory_space<vmem>>, vector<8x512xf32>
    %154 = vector.broadcast %152 : vector<8x1xf32> to vector<8x512xf32>
    %155 = arith.mulf %154, %153 : vector<8x512xf32>
    %c0_56 = arith.constant 0 : index
    %c0_57 = arith.constant 0 : index
    %156 = vector.load %arg2[%c0_56, %c0_57] : memref<128x512xbf16, #tpu.memory_space<vmem>>, vector<128x512xbf16>
    %cst_58 = arith.constant dense<0.000000e+00> : vector<8x512xf32>
    %157 = tpu.matmul %103, %156, %cst_58 {dimension_numbers = #tpu.dot_dimension_numbers<[1], [0], [0], [1], [0, 0, 1, 1], [], []>} : vector<8x128xbf16>, vector<128x512xbf16>, vector<8x512xf32> -> vector<8x512xf32>
    %158 = arith.addf %155, %157 : vector<8x512xf32>
    %c0_59 = arith.constant 0 : index
    %c0_60 = arith.constant 0 : index
    %c0_61 = arith.constant 0 : index
    %159 = vector.load %arg4[%c0_59, %c0_60, %c0_61] : memref<3x8x512xf32, #tpu.memory_space<vmem>>, vector<1x8x512xf32>
    %160 = vector.shape_cast %159 : vector<1x8x512xf32> to vector<8x512xf32>
    %161 = arith.addf %158, %160 : vector<8x512xf32>
    %162 = vector.extract_strided_slice %161 {offsets = [0, 0], sizes = [8, 384], strides = [1, 1]} : vector<8x512xf32> to vector<8x384xf32>
    %163 = arith.negf %162 : vector<8x384xf32>
    %164 = math.exp %163 : vector<8x384xf32>
    %cst_62 = arith.constant 1.000000e+00 : f32
    %165 = vector.broadcast %cst_62 : f32 to vector<8x384xf32>
    %166 = arith.addf %165, %164 : vector<8x384xf32>
    %167 = arith.divf %165, %166 : vector<8x384xf32>
    %168 = vector.extract_strided_slice %167 {offsets = [0, 0], sizes = [8, 128], strides = [1, 1]} : vector<8x384xf32> to vector<8x128xf32>
    %169 = vector.extract_strided_slice %167 {offsets = [0, 128], sizes = [8, 128], strides = [1, 1]} : vector<8x384xf32> to vector<8x128xf32>
    %170 = vector.extract_strided_slice %167 {offsets = [0, 256], sizes = [8, 128], strides = [1, 1]} : vector<8x384xf32> to vector<8x128xf32>
    %171 = vector.extract_strided_slice %161 {offsets = [0, 384], sizes = [8, 128], strides = [1, 1]} : vector<8x512xf32> to vector<8x128xf32>
    %172 = math.tanh %171 : vector<8x128xf32>
    %173 = arith.mulf %169, %100 : vector<8x128xf32>
    %174 = arith.mulf %168, %172 : vector<8x128xf32>
    %175 = arith.addf %173, %174 : vector<8x128xf32>
    %176 = math.tanh %175 : vector<8x128xf32>
    %177 = arith.mulf %170, %176 : vector<8x128xf32>
    %178 = arith.truncf %177 : vector<8x128xf32> to vector<8x128xbf16>
    %179 = tpu.concatenate %178, %127 in 1 : vector<8x128xbf16>, vector<8x128xbf16> -> vector<8x256xbf16>
    %c0_63 = arith.constant 0 : index
    %c0_64 = arith.constant 0 : index
    %c0_65 = arith.constant 0 : index
    %180 = vector.load %arg3[%c0_63, %c0_64, %c0_65] : memref<2x256x512xbf16, #tpu.memory_space<vmem>>, vector<1x256x512xbf16>
    %181 = vector.shape_cast %180 : vector<1x256x512xbf16> to vector<256x512xbf16>
    %cst_66 = arith.constant dense<0.000000e+00> : vector<8x512xf32>
    %182 = tpu.matmul %179, %181, %cst_66 {dimension_numbers = #tpu.dot_dimension_numbers<[1], [0], [0], [1], [0, 0, 1, 1], [], []>} : vector<8x256xbf16>, vector<256x512xbf16>, vector<8x512xf32> -> vector<8x512xf32>
    %c1_67 = arith.constant 1 : index
    %c0_68 = arith.constant 0 : index
    %c0_69 = arith.constant 0 : index
    %183 = vector.load %arg4[%c1_67, %c0_68, %c0_69] : memref<3x8x512xf32, #tpu.memory_space<vmem>>, vector<1x8x512xf32>
    %184 = vector.shape_cast %183 : vector<1x8x512xf32> to vector<8x512xf32>
    %185 = arith.addf %182, %184 : vector<8x512xf32>
    %186 = vector.extract_strided_slice %185 {offsets = [0, 0], sizes = [8, 384], strides = [1, 1]} : vector<8x512xf32> to vector<8x384xf32>
    %187 = arith.negf %186 : vector<8x384xf32>
    %188 = math.exp %187 : vector<8x384xf32>
    %cst_70 = arith.constant 1.000000e+00 : f32
    %189 = vector.broadcast %cst_70 : f32 to vector<8x384xf32>
    %190 = arith.addf %189, %188 : vector<8x384xf32>
    %191 = arith.divf %189, %190 : vector<8x384xf32>
    %192 = vector.extract_strided_slice %191 {offsets = [0, 0], sizes = [8, 128], strides = [1, 1]} : vector<8x384xf32> to vector<8x128xf32>
    %193 = vector.extract_strided_slice %191 {offsets = [0, 128], sizes = [8, 128], strides = [1, 1]} : vector<8x384xf32> to vector<8x128xf32>
    %194 = vector.extract_strided_slice %191 {offsets = [0, 256], sizes = [8, 128], strides = [1, 1]} : vector<8x384xf32> to vector<8x128xf32>
    %195 = vector.extract_strided_slice %185 {offsets = [0, 384], sizes = [8, 128], strides = [1, 1]} : vector<8x512xf32> to vector<8x128xf32>
    %196 = math.tanh %195 : vector<8x128xf32>
    %197 = arith.mulf %193, %124 : vector<8x128xf32>
    %198 = arith.mulf %192, %196 : vector<8x128xf32>
    %199 = arith.addf %197, %198 : vector<8x128xf32>
    %200 = math.tanh %199 : vector<8x128xf32>
    %201 = arith.mulf %194, %200 : vector<8x128xf32>
    %202 = arith.truncf %201 : vector<8x128xf32> to vector<8x128xbf16>
    %203 = tpu.concatenate %202, %151 in 1 : vector<8x128xbf16>, vector<8x128xbf16> -> vector<8x256xbf16>
    %c1_71 = arith.constant 1 : index
    %c0_72 = arith.constant 0 : index
    %c0_73 = arith.constant 0 : index
    %204 = vector.load %arg3[%c1_71, %c0_72, %c0_73] : memref<2x256x512xbf16, #tpu.memory_space<vmem>>, vector<1x256x512xbf16>
    %205 = vector.shape_cast %204 : vector<1x256x512xbf16> to vector<256x512xbf16>
    %cst_74 = arith.constant dense<0.000000e+00> : vector<8x512xf32>
    %206 = tpu.matmul %203, %205, %cst_74 {dimension_numbers = #tpu.dot_dimension_numbers<[1], [0], [0], [1], [0, 0, 1, 1], [], []>} : vector<8x256xbf16>, vector<256x512xbf16>, vector<8x512xf32> -> vector<8x512xf32>
    %c2_75 = arith.constant 2 : index
    %c0_76 = arith.constant 0 : index
    %c0_77 = arith.constant 0 : index
    %207 = vector.load %arg4[%c2_75, %c0_76, %c0_77] : memref<3x8x512xf32, #tpu.memory_space<vmem>>, vector<1x8x512xf32>
    %208 = vector.shape_cast %207 : vector<1x8x512xf32> to vector<8x512xf32>
    %209 = arith.addf %206, %208 : vector<8x512xf32>
    %210 = vector.extract_strided_slice %209 {offsets = [0, 0], sizes = [8, 384], strides = [1, 1]} : vector<8x512xf32> to vector<8x384xf32>
    %211 = arith.negf %210 : vector<8x384xf32>
    %212 = math.exp %211 : vector<8x384xf32>
    %cst_78 = arith.constant 1.000000e+00 : f32
    %213 = vector.broadcast %cst_78 : f32 to vector<8x384xf32>
    %214 = arith.addf %213, %212 : vector<8x384xf32>
    %215 = arith.divf %213, %214 : vector<8x384xf32>
    %216 = vector.extract_strided_slice %215 {offsets = [0, 0], sizes = [8, 128], strides = [1, 1]} : vector<8x384xf32> to vector<8x128xf32>
    %217 = vector.extract_strided_slice %215 {offsets = [0, 128], sizes = [8, 128], strides = [1, 1]} : vector<8x384xf32> to vector<8x128xf32>
    %218 = vector.extract_strided_slice %215 {offsets = [0, 256], sizes = [8, 128], strides = [1, 1]} : vector<8x384xf32> to vector<8x128xf32>
    %219 = vector.extract_strided_slice %209 {offsets = [0, 384], sizes = [8, 128], strides = [1, 1]} : vector<8x512xf32> to vector<8x128xf32>
    %220 = math.tanh %219 : vector<8x128xf32>
    %221 = arith.mulf %217, %148 : vector<8x128xf32>
    %222 = arith.mulf %216, %220 : vector<8x128xf32>
    %223 = arith.addf %221, %222 : vector<8x128xf32>
    %224 = math.tanh %223 : vector<8x128xf32>
    %225 = arith.mulf %218, %224 : vector<8x128xf32>
    %226 = arith.truncf %225 : vector<8x128xf32> to vector<8x128xbf16>
    %c0_79 = arith.constant 0 : index
    %c3 = arith.constant 3 : index
    %227 = vector.load %arg0[%c0_79, %c3] : memref<8x8xf32, #tpu.memory_space<vmem>>, vector<8x1xf32>
    %c0_80 = arith.constant 0 : index
    %c0_81 = arith.constant 0 : index
    %228 = vector.load %arg1[%c0_80, %c0_81] : memref<8x512xf32, #tpu.memory_space<vmem>>, vector<8x512xf32>
    %229 = vector.broadcast %227 : vector<8x1xf32> to vector<8x512xf32>
    %230 = arith.mulf %229, %228 : vector<8x512xf32>
    %c0_82 = arith.constant 0 : index
    %c0_83 = arith.constant 0 : index
    %231 = vector.load %arg2[%c0_82, %c0_83] : memref<128x512xbf16, #tpu.memory_space<vmem>>, vector<128x512xbf16>
    %cst_84 = arith.constant dense<0.000000e+00> : vector<8x512xf32>
    %232 = tpu.matmul %178, %231, %cst_84 {dimension_numbers = #tpu.dot_dimension_numbers<[1], [0], [0], [1], [0, 0, 1, 1], [], []>} : vector<8x128xbf16>, vector<128x512xbf16>, vector<8x512xf32> -> vector<8x512xf32>
    %233 = arith.addf %230, %232 : vector<8x512xf32>
    %c0_85 = arith.constant 0 : index
    %c0_86 = arith.constant 0 : index
    %c0_87 = arith.constant 0 : index
    %234 = vector.load %arg4[%c0_85, %c0_86, %c0_87] : memref<3x8x512xf32, #tpu.memory_space<vmem>>, vector<1x8x512xf32>
    %235 = vector.shape_cast %234 : vector<1x8x512xf32> to vector<8x512xf32>
    %236 = arith.addf %233, %235 : vector<8x512xf32>
    %237 = vector.extract_strided_slice %236 {offsets = [0, 0], sizes = [8, 384], strides = [1, 1]} : vector<8x512xf32> to vector<8x384xf32>
    %238 = arith.negf %237 : vector<8x384xf32>
    %239 = math.exp %238 : vector<8x384xf32>
    %cst_88 = arith.constant 1.000000e+00 : f32
    %240 = vector.broadcast %cst_88 : f32 to vector<8x384xf32>
    %241 = arith.addf %240, %239 : vector<8x384xf32>
    %242 = arith.divf %240, %241 : vector<8x384xf32>
    %243 = vector.extract_strided_slice %242 {offsets = [0, 0], sizes = [8, 128], strides = [1, 1]} : vector<8x384xf32> to vector<8x128xf32>
    %244 = vector.extract_strided_slice %242 {offsets = [0, 128], sizes = [8, 128], strides = [1, 1]} : vector<8x384xf32> to vector<8x128xf32>
    %245 = vector.extract_strided_slice %242 {offsets = [0, 256], sizes = [8, 128], strides = [1, 1]} : vector<8x384xf32> to vector<8x128xf32>
    %246 = vector.extract_strided_slice %236 {offsets = [0, 384], sizes = [8, 128], strides = [1, 1]} : vector<8x512xf32> to vector<8x128xf32>
    %247 = math.tanh %246 : vector<8x128xf32>
    %248 = arith.mulf %244, %175 : vector<8x128xf32>
    %249 = arith.mulf %243, %247 : vector<8x128xf32>
    %250 = arith.addf %248, %249 : vector<8x128xf32>
    %251 = math.tanh %250 : vector<8x128xf32>
    %252 = arith.mulf %245, %251 : vector<8x128xf32>
    %253 = arith.truncf %252 : vector<8x128xf32> to vector<8x128xbf16>
    %254 = tpu.concatenate %253, %202 in 1 : vector<8x128xbf16>, vector<8x128xbf16> -> vector<8x256xbf16>
    %c0_89 = arith.constant 0 : index
    %c0_90 = arith.constant 0 : index
    %c0_91 = arith.constant 0 : index
    %255 = vector.load %arg3[%c0_89, %c0_90, %c0_91] : memref<2x256x512xbf16, #tpu.memory_space<vmem>>, vector<1x256x512xbf16>
    %256 = vector.shape_cast %255 : vector<1x256x512xbf16> to vector<256x512xbf16>
    %cst_92 = arith.constant dense<0.000000e+00> : vector<8x512xf32>
    %257 = tpu.matmul %254, %256, %cst_92 {dimension_numbers = #tpu.dot_dimension_numbers<[1], [0], [0], [1], [0, 0, 1, 1], [], []>} : vector<8x256xbf16>, vector<256x512xbf16>, vector<8x512xf32> -> vector<8x512xf32>
    %c1_93 = arith.constant 1 : index
    %c0_94 = arith.constant 0 : index
    %c0_95 = arith.constant 0 : index
    %258 = vector.load %arg4[%c1_93, %c0_94, %c0_95] : memref<3x8x512xf32, #tpu.memory_space<vmem>>, vector<1x8x512xf32>
    %259 = vector.shape_cast %258 : vector<1x8x512xf32> to vector<8x512xf32>
    %260 = arith.addf %257, %259 : vector<8x512xf32>
    %261 = vector.extract_strided_slice %260 {offsets = [0, 0], sizes = [8, 384], strides = [1, 1]} : vector<8x512xf32> to vector<8x384xf32>
    %262 = arith.negf %261 : vector<8x384xf32>
    %263 = math.exp %262 : vector<8x384xf32>
    %cst_96 = arith.constant 1.000000e+00 : f32
    %264 = vector.broadcast %cst_96 : f32 to vector<8x384xf32>
    %265 = arith.addf %264, %263 : vector<8x384xf32>
    %266 = arith.divf %264, %265 : vector<8x384xf32>
    %267 = vector.extract_strided_slice %266 {offsets = [0, 0], sizes = [8, 128], strides = [1, 1]} : vector<8x384xf32> to vector<8x128xf32>
    %268 = vector.extract_strided_slice %266 {offsets = [0, 128], sizes = [8, 128], strides = [1, 1]} : vector<8x384xf32> to vector<8x128xf32>
    %269 = vector.extract_strided_slice %266 {offsets = [0, 256], sizes = [8, 128], strides = [1, 1]} : vector<8x384xf32> to vector<8x128xf32>
    %270 = vector.extract_strided_slice %260 {offsets = [0, 384], sizes = [8, 128], strides = [1, 1]} : vector<8x512xf32> to vector<8x128xf32>
    %271 = math.tanh %270 : vector<8x128xf32>
    %272 = arith.mulf %268, %199 : vector<8x128xf32>
    %273 = arith.mulf %267, %271 : vector<8x128xf32>
    %274 = arith.addf %272, %273 : vector<8x128xf32>
    %275 = math.tanh %274 : vector<8x128xf32>
    %276 = arith.mulf %269, %275 : vector<8x128xf32>
    %277 = arith.truncf %276 : vector<8x128xf32> to vector<8x128xbf16>
    %278 = tpu.concatenate %277, %226 in 1 : vector<8x128xbf16>, vector<8x128xbf16> -> vector<8x256xbf16>
    %c1_97 = arith.constant 1 : index
    %c0_98 = arith.constant 0 : index
    %c0_99 = arith.constant 0 : index
    %279 = vector.load %arg3[%c1_97, %c0_98, %c0_99] : memref<2x256x512xbf16, #tpu.memory_space<vmem>>, vector<1x256x512xbf16>
    %280 = vector.shape_cast %279 : vector<1x256x512xbf16> to vector<256x512xbf16>
    %cst_100 = arith.constant dense<0.000000e+00> : vector<8x512xf32>
    %281 = tpu.matmul %278, %280, %cst_100 {dimension_numbers = #tpu.dot_dimension_numbers<[1], [0], [0], [1], [0, 0, 1, 1], [], []>} : vector<8x256xbf16>, vector<256x512xbf16>, vector<8x512xf32> -> vector<8x512xf32>
    %c2_101 = arith.constant 2 : index
    %c0_102 = arith.constant 0 : index
    %c0_103 = arith.constant 0 : index
    %282 = vector.load %arg4[%c2_101, %c0_102, %c0_103] : memref<3x8x512xf32, #tpu.memory_space<vmem>>, vector<1x8x512xf32>
    %283 = vector.shape_cast %282 : vector<1x8x512xf32> to vector<8x512xf32>
    %284 = arith.addf %281, %283 : vector<8x512xf32>
    %285 = vector.extract_strided_slice %284 {offsets = [0, 0], sizes = [8, 384], strides = [1, 1]} : vector<8x512xf32> to vector<8x384xf32>
    %286 = arith.negf %285 : vector<8x384xf32>
    %287 = math.exp %286 : vector<8x384xf32>
    %cst_104 = arith.constant 1.000000e+00 : f32
    %288 = vector.broadcast %cst_104 : f32 to vector<8x384xf32>
    %289 = arith.addf %288, %287 : vector<8x384xf32>
    %290 = arith.divf %288, %289 : vector<8x384xf32>
    %291 = vector.extract_strided_slice %290 {offsets = [0, 0], sizes = [8, 128], strides = [1, 1]} : vector<8x384xf32> to vector<8x128xf32>
    %292 = vector.extract_strided_slice %290 {offsets = [0, 128], sizes = [8, 128], strides = [1, 1]} : vector<8x384xf32> to vector<8x128xf32>
    %293 = vector.extract_strided_slice %290 {offsets = [0, 256], sizes = [8, 128], strides = [1, 1]} : vector<8x384xf32> to vector<8x128xf32>
    %294 = vector.extract_strided_slice %284 {offsets = [0, 384], sizes = [8, 128], strides = [1, 1]} : vector<8x512xf32> to vector<8x128xf32>
    %295 = math.tanh %294 : vector<8x128xf32>
    %296 = arith.mulf %292, %223 : vector<8x128xf32>
    %297 = arith.mulf %291, %295 : vector<8x128xf32>
    %298 = arith.addf %296, %297 : vector<8x128xf32>
    %299 = math.tanh %298 : vector<8x128xf32>
    %300 = arith.mulf %293, %299 : vector<8x128xf32>
    %301 = arith.truncf %300 : vector<8x128xf32> to vector<8x128xbf16>
    %c0_105 = arith.constant 0 : index
    %c4 = arith.constant 4 : index
    %302 = vector.load %arg0[%c0_105, %c4] : memref<8x8xf32, #tpu.memory_space<vmem>>, vector<8x1xf32>
    %c0_106 = arith.constant 0 : index
    %c0_107 = arith.constant 0 : index
    %303 = vector.load %arg1[%c0_106, %c0_107] : memref<8x512xf32, #tpu.memory_space<vmem>>, vector<8x512xf32>
    %304 = vector.broadcast %302 : vector<8x1xf32> to vector<8x512xf32>
    %305 = arith.mulf %304, %303 : vector<8x512xf32>
    %c0_108 = arith.constant 0 : index
    %c0_109 = arith.constant 0 : index
    %306 = vector.load %arg2[%c0_108, %c0_109] : memref<128x512xbf16, #tpu.memory_space<vmem>>, vector<128x512xbf16>
    %cst_110 = arith.constant dense<0.000000e+00> : vector<8x512xf32>
    %307 = tpu.matmul %253, %306, %cst_110 {dimension_numbers = #tpu.dot_dimension_numbers<[1], [0], [0], [1], [0, 0, 1, 1], [], []>} : vector<8x128xbf16>, vector<128x512xbf16>, vector<8x512xf32> -> vector<8x512xf32>
    %308 = arith.addf %305, %307 : vector<8x512xf32>
    %c0_111 = arith.constant 0 : index
    %c0_112 = arith.constant 0 : index
    %c0_113 = arith.constant 0 : index
    %309 = vector.load %arg4[%c0_111, %c0_112, %c0_113] : memref<3x8x512xf32, #tpu.memory_space<vmem>>, vector<1x8x512xf32>
    %310 = vector.shape_cast %309 : vector<1x8x512xf32> to vector<8x512xf32>
    %311 = arith.addf %308, %310 : vector<8x512xf32>
    %312 = vector.extract_strided_slice %311 {offsets = [0, 0], sizes = [8, 384], strides = [1, 1]} : vector<8x512xf32> to vector<8x384xf32>
    %313 = arith.negf %312 : vector<8x384xf32>
    %314 = math.exp %313 : vector<8x384xf32>
    %cst_114 = arith.constant 1.000000e+00 : f32
    %315 = vector.broadcast %cst_114 : f32 to vector<8x384xf32>
    %316 = arith.addf %315, %314 : vector<8x384xf32>
    %317 = arith.divf %315, %316 : vector<8x384xf32>
    %318 = vector.extract_strided_slice %317 {offsets = [0, 0], sizes = [8, 128], strides = [1, 1]} : vector<8x384xf32> to vector<8x128xf32>
    %319 = vector.extract_strided_slice %317 {offsets = [0, 128], sizes = [8, 128], strides = [1, 1]} : vector<8x384xf32> to vector<8x128xf32>
    %320 = vector.extract_strided_slice %317 {offsets = [0, 256], sizes = [8, 128], strides = [1, 1]} : vector<8x384xf32> to vector<8x128xf32>
    %321 = vector.extract_strided_slice %311 {offsets = [0, 384], sizes = [8, 128], strides = [1, 1]} : vector<8x512xf32> to vector<8x128xf32>
    %322 = math.tanh %321 : vector<8x128xf32>
    %323 = arith.mulf %319, %250 : vector<8x128xf32>
    %324 = arith.mulf %318, %322 : vector<8x128xf32>
    %325 = arith.addf %323, %324 : vector<8x128xf32>
    %326 = math.tanh %325 : vector<8x128xf32>
    %327 = arith.mulf %320, %326 : vector<8x128xf32>
    %328 = arith.truncf %327 : vector<8x128xf32> to vector<8x128xbf16>
    %329 = tpu.concatenate %328, %277 in 1 : vector<8x128xbf16>, vector<8x128xbf16> -> vector<8x256xbf16>
    %c0_115 = arith.constant 0 : index
    %c0_116 = arith.constant 0 : index
    %c0_117 = arith.constant 0 : index
    %330 = vector.load %arg3[%c0_115, %c0_116, %c0_117] : memref<2x256x512xbf16, #tpu.memory_space<vmem>>, vector<1x256x512xbf16>
    %331 = vector.shape_cast %330 : vector<1x256x512xbf16> to vector<256x512xbf16>
    %cst_118 = arith.constant dense<0.000000e+00> : vector<8x512xf32>
    %332 = tpu.matmul %329, %331, %cst_118 {dimension_numbers = #tpu.dot_dimension_numbers<[1], [0], [0], [1], [0, 0, 1, 1], [], []>} : vector<8x256xbf16>, vector<256x512xbf16>, vector<8x512xf32> -> vector<8x512xf32>
    %c1_119 = arith.constant 1 : index
    %c0_120 = arith.constant 0 : index
    %c0_121 = arith.constant 0 : index
    %333 = vector.load %arg4[%c1_119, %c0_120, %c0_121] : memref<3x8x512xf32, #tpu.memory_space<vmem>>, vector<1x8x512xf32>
    %334 = vector.shape_cast %333 : vector<1x8x512xf32> to vector<8x512xf32>
    %335 = arith.addf %332, %334 : vector<8x512xf32>
    %336 = vector.extract_strided_slice %335 {offsets = [0, 0], sizes = [8, 384], strides = [1, 1]} : vector<8x512xf32> to vector<8x384xf32>
    %337 = arith.negf %336 : vector<8x384xf32>
    %338 = math.exp %337 : vector<8x384xf32>
    %cst_122 = arith.constant 1.000000e+00 : f32
    %339 = vector.broadcast %cst_122 : f32 to vector<8x384xf32>
    %340 = arith.addf %339, %338 : vector<8x384xf32>
    %341 = arith.divf %339, %340 : vector<8x384xf32>
    %342 = vector.extract_strided_slice %341 {offsets = [0, 0], sizes = [8, 128], strides = [1, 1]} : vector<8x384xf32> to vector<8x128xf32>
    %343 = vector.extract_strided_slice %341 {offsets = [0, 128], sizes = [8, 128], strides = [1, 1]} : vector<8x384xf32> to vector<8x128xf32>
    %344 = vector.extract_strided_slice %341 {offsets = [0, 256], sizes = [8, 128], strides = [1, 1]} : vector<8x384xf32> to vector<8x128xf32>
    %345 = vector.extract_strided_slice %335 {offsets = [0, 384], sizes = [8, 128], strides = [1, 1]} : vector<8x512xf32> to vector<8x128xf32>
    %346 = math.tanh %345 : vector<8x128xf32>
    %347 = arith.mulf %343, %274 : vector<8x128xf32>
    %348 = arith.mulf %342, %346 : vector<8x128xf32>
    %349 = arith.addf %347, %348 : vector<8x128xf32>
    %350 = math.tanh %349 : vector<8x128xf32>
    %351 = arith.mulf %344, %350 : vector<8x128xf32>
    %352 = arith.truncf %351 : vector<8x128xf32> to vector<8x128xbf16>
    %353 = tpu.concatenate %352, %301 in 1 : vector<8x128xbf16>, vector<8x128xbf16> -> vector<8x256xbf16>
    %c1_123 = arith.constant 1 : index
    %c0_124 = arith.constant 0 : index
    %c0_125 = arith.constant 0 : index
    %354 = vector.load %arg3[%c1_123, %c0_124, %c0_125] : memref<2x256x512xbf16, #tpu.memory_space<vmem>>, vector<1x256x512xbf16>
    %355 = vector.shape_cast %354 : vector<1x256x512xbf16> to vector<256x512xbf16>
    %cst_126 = arith.constant dense<0.000000e+00> : vector<8x512xf32>
    %356 = tpu.matmul %353, %355, %cst_126 {dimension_numbers = #tpu.dot_dimension_numbers<[1], [0], [0], [1], [0, 0, 1, 1], [], []>} : vector<8x256xbf16>, vector<256x512xbf16>, vector<8x512xf32> -> vector<8x512xf32>
    %c2_127 = arith.constant 2 : index
    %c0_128 = arith.constant 0 : index
    %c0_129 = arith.constant 0 : index
    %357 = vector.load %arg4[%c2_127, %c0_128, %c0_129] : memref<3x8x512xf32, #tpu.memory_space<vmem>>, vector<1x8x512xf32>
    %358 = vector.shape_cast %357 : vector<1x8x512xf32> to vector<8x512xf32>
    %359 = arith.addf %356, %358 : vector<8x512xf32>
    %360 = vector.extract_strided_slice %359 {offsets = [0, 0], sizes = [8, 384], strides = [1, 1]} : vector<8x512xf32> to vector<8x384xf32>
    %361 = arith.negf %360 : vector<8x384xf32>
    %362 = math.exp %361 : vector<8x384xf32>
    %cst_130 = arith.constant 1.000000e+00 : f32
    %363 = vector.broadcast %cst_130 : f32 to vector<8x384xf32>
    %364 = arith.addf %363, %362 : vector<8x384xf32>
    %365 = arith.divf %363, %364 : vector<8x384xf32>
    %366 = vector.extract_strided_slice %365 {offsets = [0, 0], sizes = [8, 128], strides = [1, 1]} : vector<8x384xf32> to vector<8x128xf32>
    %367 = vector.extract_strided_slice %365 {offsets = [0, 128], sizes = [8, 128], strides = [1, 1]} : vector<8x384xf32> to vector<8x128xf32>
    %368 = vector.extract_strided_slice %365 {offsets = [0, 256], sizes = [8, 128], strides = [1, 1]} : vector<8x384xf32> to vector<8x128xf32>
    %369 = vector.extract_strided_slice %359 {offsets = [0, 384], sizes = [8, 128], strides = [1, 1]} : vector<8x512xf32> to vector<8x128xf32>
    %370 = math.tanh %369 : vector<8x128xf32>
    %371 = arith.mulf %367, %298 : vector<8x128xf32>
    %372 = arith.mulf %366, %370 : vector<8x128xf32>
    %373 = arith.addf %371, %372 : vector<8x128xf32>
    %374 = math.tanh %373 : vector<8x128xf32>
    %375 = arith.mulf %368, %374 : vector<8x128xf32>
    %376 = arith.truncf %375 : vector<8x128xf32> to vector<8x128xbf16>
    %c0_131 = arith.constant 0 : index
    %c5 = arith.constant 5 : index
    %377 = vector.load %arg0[%c0_131, %c5] : memref<8x8xf32, #tpu.memory_space<vmem>>, vector<8x1xf32>
    %c0_132 = arith.constant 0 : index
    %c0_133 = arith.constant 0 : index
    %378 = vector.load %arg1[%c0_132, %c0_133] : memref<8x512xf32, #tpu.memory_space<vmem>>, vector<8x512xf32>
    %379 = vector.broadcast %377 : vector<8x1xf32> to vector<8x512xf32>
    %380 = arith.mulf %379, %378 : vector<8x512xf32>
    %c0_134 = arith.constant 0 : index
    %c0_135 = arith.constant 0 : index
    %381 = vector.load %arg2[%c0_134, %c0_135] : memref<128x512xbf16, #tpu.memory_space<vmem>>, vector<128x512xbf16>
    %cst_136 = arith.constant dense<0.000000e+00> : vector<8x512xf32>
    %382 = tpu.matmul %328, %381, %cst_136 {dimension_numbers = #tpu.dot_dimension_numbers<[1], [0], [0], [1], [0, 0, 1, 1], [], []>} : vector<8x128xbf16>, vector<128x512xbf16>, vector<8x512xf32> -> vector<8x512xf32>
    %383 = arith.addf %380, %382 : vector<8x512xf32>
    %c0_137 = arith.constant 0 : index
    %c0_138 = arith.constant 0 : index
    %c0_139 = arith.constant 0 : index
    %384 = vector.load %arg4[%c0_137, %c0_138, %c0_139] : memref<3x8x512xf32, #tpu.memory_space<vmem>>, vector<1x8x512xf32>
    %385 = vector.shape_cast %384 : vector<1x8x512xf32> to vector<8x512xf32>
    %386 = arith.addf %383, %385 : vector<8x512xf32>
    %387 = vector.extract_strided_slice %386 {offsets = [0, 0], sizes = [8, 384], strides = [1, 1]} : vector<8x512xf32> to vector<8x384xf32>
    %388 = arith.negf %387 : vector<8x384xf32>
    %389 = math.exp %388 : vector<8x384xf32>
    %cst_140 = arith.constant 1.000000e+00 : f32
    %390 = vector.broadcast %cst_140 : f32 to vector<8x384xf32>
    %391 = arith.addf %390, %389 : vector<8x384xf32>
    %392 = arith.divf %390, %391 : vector<8x384xf32>
    %393 = vector.extract_strided_slice %392 {offsets = [0, 0], sizes = [8, 128], strides = [1, 1]} : vector<8x384xf32> to vector<8x128xf32>
    %394 = vector.extract_strided_slice %392 {offsets = [0, 128], sizes = [8, 128], strides = [1, 1]} : vector<8x384xf32> to vector<8x128xf32>
    %395 = vector.extract_strided_slice %392 {offsets = [0, 256], sizes = [8, 128], strides = [1, 1]} : vector<8x384xf32> to vector<8x128xf32>
    %396 = vector.extract_strided_slice %386 {offsets = [0, 384], sizes = [8, 128], strides = [1, 1]} : vector<8x512xf32> to vector<8x128xf32>
    %397 = math.tanh %396 : vector<8x128xf32>
    %398 = arith.mulf %394, %325 : vector<8x128xf32>
    %399 = arith.mulf %393, %397 : vector<8x128xf32>
    %400 = arith.addf %398, %399 : vector<8x128xf32>
    %401 = math.tanh %400 : vector<8x128xf32>
    %402 = arith.mulf %395, %401 : vector<8x128xf32>
    %403 = arith.truncf %402 : vector<8x128xf32> to vector<8x128xbf16>
    %404 = tpu.concatenate %403, %352 in 1 : vector<8x128xbf16>, vector<8x128xbf16> -> vector<8x256xbf16>
    %c0_141 = arith.constant 0 : index
    %c0_142 = arith.constant 0 : index
    %c0_143 = arith.constant 0 : index
    %405 = vector.load %arg3[%c0_141, %c0_142, %c0_143] : memref<2x256x512xbf16, #tpu.memory_space<vmem>>, vector<1x256x512xbf16>
    %406 = vector.shape_cast %405 : vector<1x256x512xbf16> to vector<256x512xbf16>
    %cst_144 = arith.constant dense<0.000000e+00> : vector<8x512xf32>
    %407 = tpu.matmul %404, %406, %cst_144 {dimension_numbers = #tpu.dot_dimension_numbers<[1], [0], [0], [1], [0, 0, 1, 1], [], []>} : vector<8x256xbf16>, vector<256x512xbf16>, vector<8x512xf32> -> vector<8x512xf32>
    %c1_145 = arith.constant 1 : index
    %c0_146 = arith.constant 0 : index
    %c0_147 = arith.constant 0 : index
    %408 = vector.load %arg4[%c1_145, %c0_146, %c0_147] : memref<3x8x512xf32, #tpu.memory_space<vmem>>, vector<1x8x512xf32>
    %409 = vector.shape_cast %408 : vector<1x8x512xf32> to vector<8x512xf32>
    %410 = arith.addf %407, %409 : vector<8x512xf32>
    %411 = vector.extract_strided_slice %410 {offsets = [0, 0], sizes = [8, 384], strides = [1, 1]} : vector<8x512xf32> to vector<8x384xf32>
    %412 = arith.negf %411 : vector<8x384xf32>
    %413 = math.exp %412 : vector<8x384xf32>
    %cst_148 = arith.constant 1.000000e+00 : f32
    %414 = vector.broadcast %cst_148 : f32 to vector<8x384xf32>
    %415 = arith.addf %414, %413 : vector<8x384xf32>
    %416 = arith.divf %414, %415 : vector<8x384xf32>
    %417 = vector.extract_strided_slice %416 {offsets = [0, 0], sizes = [8, 128], strides = [1, 1]} : vector<8x384xf32> to vector<8x128xf32>
    %418 = vector.extract_strided_slice %416 {offsets = [0, 128], sizes = [8, 128], strides = [1, 1]} : vector<8x384xf32> to vector<8x128xf32>
    %419 = vector.extract_strided_slice %416 {offsets = [0, 256], sizes = [8, 128], strides = [1, 1]} : vector<8x384xf32> to vector<8x128xf32>
    %420 = vector.extract_strided_slice %410 {offsets = [0, 384], sizes = [8, 128], strides = [1, 1]} : vector<8x512xf32> to vector<8x128xf32>
    %421 = math.tanh %420 : vector<8x128xf32>
    %422 = arith.mulf %418, %349 : vector<8x128xf32>
    %423 = arith.mulf %417, %421 : vector<8x128xf32>
    %424 = arith.addf %422, %423 : vector<8x128xf32>
    %425 = math.tanh %424 : vector<8x128xf32>
    %426 = arith.mulf %419, %425 : vector<8x128xf32>
    %427 = arith.truncf %426 : vector<8x128xf32> to vector<8x128xbf16>
    %428 = tpu.concatenate %427, %376 in 1 : vector<8x128xbf16>, vector<8x128xbf16> -> vector<8x256xbf16>
    %c1_149 = arith.constant 1 : index
    %c0_150 = arith.constant 0 : index
    %c0_151 = arith.constant 0 : index
    %429 = vector.load %arg3[%c1_149, %c0_150, %c0_151] : memref<2x256x512xbf16, #tpu.memory_space<vmem>>, vector<1x256x512xbf16>
    %430 = vector.shape_cast %429 : vector<1x256x512xbf16> to vector<256x512xbf16>
    %cst_152 = arith.constant dense<0.000000e+00> : vector<8x512xf32>
    %431 = tpu.matmul %428, %430, %cst_152 {dimension_numbers = #tpu.dot_dimension_numbers<[1], [0], [0], [1], [0, 0, 1, 1], [], []>} : vector<8x256xbf16>, vector<256x512xbf16>, vector<8x512xf32> -> vector<8x512xf32>
    %c2_153 = arith.constant 2 : index
    %c0_154 = arith.constant 0 : index
    %c0_155 = arith.constant 0 : index
    %432 = vector.load %arg4[%c2_153, %c0_154, %c0_155] : memref<3x8x512xf32, #tpu.memory_space<vmem>>, vector<1x8x512xf32>
    %433 = vector.shape_cast %432 : vector<1x8x512xf32> to vector<8x512xf32>
    %434 = arith.addf %431, %433 : vector<8x512xf32>
    %435 = vector.extract_strided_slice %434 {offsets = [0, 0], sizes = [8, 384], strides = [1, 1]} : vector<8x512xf32> to vector<8x384xf32>
    %436 = arith.negf %435 : vector<8x384xf32>
    %437 = math.exp %436 : vector<8x384xf32>
    %cst_156 = arith.constant 1.000000e+00 : f32
    %438 = vector.broadcast %cst_156 : f32 to vector<8x384xf32>
    %439 = arith.addf %438, %437 : vector<8x384xf32>
    %440 = arith.divf %438, %439 : vector<8x384xf32>
    %441 = vector.extract_strided_slice %440 {offsets = [0, 0], sizes = [8, 128], strides = [1, 1]} : vector<8x384xf32> to vector<8x128xf32>
    %442 = vector.extract_strided_slice %440 {offsets = [0, 128], sizes = [8, 128], strides = [1, 1]} : vector<8x384xf32> to vector<8x128xf32>
    %443 = vector.extract_strided_slice %440 {offsets = [0, 256], sizes = [8, 128], strides = [1, 1]} : vector<8x384xf32> to vector<8x128xf32>
    %444 = vector.extract_strided_slice %434 {offsets = [0, 384], sizes = [8, 128], strides = [1, 1]} : vector<8x512xf32> to vector<8x128xf32>
    %445 = math.tanh %444 : vector<8x128xf32>
    %446 = arith.mulf %442, %373 : vector<8x128xf32>
    %447 = arith.mulf %441, %445 : vector<8x128xf32>
    %448 = arith.addf %446, %447 : vector<8x128xf32>
    %449 = math.tanh %448 : vector<8x128xf32>
    %450 = arith.mulf %443, %449 : vector<8x128xf32>
    %451 = arith.truncf %450 : vector<8x128xf32> to vector<8x128xbf16>
    %c0_157 = arith.constant 0 : index
    %c6 = arith.constant 6 : index
    %452 = vector.load %arg0[%c0_157, %c6] : memref<8x8xf32, #tpu.memory_space<vmem>>, vector<8x1xf32>
    %c0_158 = arith.constant 0 : index
    %c0_159 = arith.constant 0 : index
    %453 = vector.load %arg1[%c0_158, %c0_159] : memref<8x512xf32, #tpu.memory_space<vmem>>, vector<8x512xf32>
    %454 = vector.broadcast %452 : vector<8x1xf32> to vector<8x512xf32>
    %455 = arith.mulf %454, %453 : vector<8x512xf32>
    %c0_160 = arith.constant 0 : index
    %c0_161 = arith.constant 0 : index
    %456 = vector.load %arg2[%c0_160, %c0_161] : memref<128x512xbf16, #tpu.memory_space<vmem>>, vector<128x512xbf16>
    %cst_162 = arith.constant dense<0.000000e+00> : vector<8x512xf32>
    %457 = tpu.matmul %403, %456, %cst_162 {dimension_numbers = #tpu.dot_dimension_numbers<[1], [0], [0], [1], [0, 0, 1, 1], [], []>} : vector<8x128xbf16>, vector<128x512xbf16>, vector<8x512xf32> -> vector<8x512xf32>
    %458 = arith.addf %455, %457 : vector<8x512xf32>
    %c0_163 = arith.constant 0 : index
    %c0_164 = arith.constant 0 : index
    %c0_165 = arith.constant 0 : index
    %459 = vector.load %arg4[%c0_163, %c0_164, %c0_165] : memref<3x8x512xf32, #tpu.memory_space<vmem>>, vector<1x8x512xf32>
    %460 = vector.shape_cast %459 : vector<1x8x512xf32> to vector<8x512xf32>
    %461 = arith.addf %458, %460 : vector<8x512xf32>
    %462 = vector.extract_strided_slice %461 {offsets = [0, 0], sizes = [8, 384], strides = [1, 1]} : vector<8x512xf32> to vector<8x384xf32>
    %463 = arith.negf %462 : vector<8x384xf32>
    %464 = math.exp %463 : vector<8x384xf32>
    %cst_166 = arith.constant 1.000000e+00 : f32
    %465 = vector.broadcast %cst_166 : f32 to vector<8x384xf32>
    %466 = arith.addf %465, %464 : vector<8x384xf32>
    %467 = arith.divf %465, %466 : vector<8x384xf32>
    %468 = vector.extract_strided_slice %467 {offsets = [0, 0], sizes = [8, 128], strides = [1, 1]} : vector<8x384xf32> to vector<8x128xf32>
    %469 = vector.extract_strided_slice %467 {offsets = [0, 128], sizes = [8, 128], strides = [1, 1]} : vector<8x384xf32> to vector<8x128xf32>
    %470 = vector.extract_strided_slice %467 {offsets = [0, 256], sizes = [8, 128], strides = [1, 1]} : vector<8x384xf32> to vector<8x128xf32>
    %471 = vector.extract_strided_slice %461 {offsets = [0, 384], sizes = [8, 128], strides = [1, 1]} : vector<8x512xf32> to vector<8x128xf32>
    %472 = math.tanh %471 : vector<8x128xf32>
    %473 = arith.mulf %469, %400 : vector<8x128xf32>
    %474 = arith.mulf %468, %472 : vector<8x128xf32>
    %475 = arith.addf %473, %474 : vector<8x128xf32>
    %476 = math.tanh %475 : vector<8x128xf32>
    %477 = arith.mulf %470, %476 : vector<8x128xf32>
    %478 = arith.truncf %477 : vector<8x128xf32> to vector<8x128xbf16>
    %479 = tpu.concatenate %478, %427 in 1 : vector<8x128xbf16>, vector<8x128xbf16> -> vector<8x256xbf16>
    %c0_167 = arith.constant 0 : index
    %c0_168 = arith.constant 0 : index
    %c0_169 = arith.constant 0 : index
    %480 = vector.load %arg3[%c0_167, %c0_168, %c0_169] : memref<2x256x512xbf16, #tpu.memory_space<vmem>>, vector<1x256x512xbf16>
    %481 = vector.shape_cast %480 : vector<1x256x512xbf16> to vector<256x512xbf16>
    %cst_170 = arith.constant dense<0.000000e+00> : vector<8x512xf32>
    %482 = tpu.matmul %479, %481, %cst_170 {dimension_numbers = #tpu.dot_dimension_numbers<[1], [0], [0], [1], [0, 0, 1, 1], [], []>} : vector<8x256xbf16>, vector<256x512xbf16>, vector<8x512xf32> -> vector<8x512xf32>
    %c1_171 = arith.constant 1 : index
    %c0_172 = arith.constant 0 : index
    %c0_173 = arith.constant 0 : index
    %483 = vector.load %arg4[%c1_171, %c0_172, %c0_173] : memref<3x8x512xf32, #tpu.memory_space<vmem>>, vector<1x8x512xf32>
    %484 = vector.shape_cast %483 : vector<1x8x512xf32> to vector<8x512xf32>
    %485 = arith.addf %482, %484 : vector<8x512xf32>
    %486 = vector.extract_strided_slice %485 {offsets = [0, 0], sizes = [8, 384], strides = [1, 1]} : vector<8x512xf32> to vector<8x384xf32>
    %487 = arith.negf %486 : vector<8x384xf32>
    %488 = math.exp %487 : vector<8x384xf32>
    %cst_174 = arith.constant 1.000000e+00 : f32
    %489 = vector.broadcast %cst_174 : f32 to vector<8x384xf32>
    %490 = arith.addf %489, %488 : vector<8x384xf32>
    %491 = arith.divf %489, %490 : vector<8x384xf32>
    %492 = vector.extract_strided_slice %491 {offsets = [0, 0], sizes = [8, 128], strides = [1, 1]} : vector<8x384xf32> to vector<8x128xf32>
    %493 = vector.extract_strided_slice %491 {offsets = [0, 128], sizes = [8, 128], strides = [1, 1]} : vector<8x384xf32> to vector<8x128xf32>
    %494 = vector.extract_strided_slice %491 {offsets = [0, 256], sizes = [8, 128], strides = [1, 1]} : vector<8x384xf32> to vector<8x128xf32>
    %495 = vector.extract_strided_slice %485 {offsets = [0, 384], sizes = [8, 128], strides = [1, 1]} : vector<8x512xf32> to vector<8x128xf32>
    %496 = math.tanh %495 : vector<8x128xf32>
    %497 = arith.mulf %493, %424 : vector<8x128xf32>
    %498 = arith.mulf %492, %496 : vector<8x128xf32>
    %499 = arith.addf %497, %498 : vector<8x128xf32>
    %500 = math.tanh %499 : vector<8x128xf32>
    %501 = arith.mulf %494, %500 : vector<8x128xf32>
    %502 = arith.truncf %501 : vector<8x128xf32> to vector<8x128xbf16>
    %503 = tpu.concatenate %502, %451 in 1 : vector<8x128xbf16>, vector<8x128xbf16> -> vector<8x256xbf16>
    %c1_175 = arith.constant 1 : index
    %c0_176 = arith.constant 0 : index
    %c0_177 = arith.constant 0 : index
    %504 = vector.load %arg3[%c1_175, %c0_176, %c0_177] : memref<2x256x512xbf16, #tpu.memory_space<vmem>>, vector<1x256x512xbf16>
    %505 = vector.shape_cast %504 : vector<1x256x512xbf16> to vector<256x512xbf16>
    %cst_178 = arith.constant dense<0.000000e+00> : vector<8x512xf32>
    %506 = tpu.matmul %503, %505, %cst_178 {dimension_numbers = #tpu.dot_dimension_numbers<[1], [0], [0], [1], [0, 0, 1, 1], [], []>} : vector<8x256xbf16>, vector<256x512xbf16>, vector<8x512xf32> -> vector<8x512xf32>
    %c2_179 = arith.constant 2 : index
    %c0_180 = arith.constant 0 : index
    %c0_181 = arith.constant 0 : index
    %507 = vector.load %arg4[%c2_179, %c0_180, %c0_181] : memref<3x8x512xf32, #tpu.memory_space<vmem>>, vector<1x8x512xf32>
    %508 = vector.shape_cast %507 : vector<1x8x512xf32> to vector<8x512xf32>
    %509 = arith.addf %506, %508 : vector<8x512xf32>
    %510 = vector.extract_strided_slice %509 {offsets = [0, 0], sizes = [8, 384], strides = [1, 1]} : vector<8x512xf32> to vector<8x384xf32>
    %511 = arith.negf %510 : vector<8x384xf32>
    %512 = math.exp %511 : vector<8x384xf32>
    %cst_182 = arith.constant 1.000000e+00 : f32
    %513 = vector.broadcast %cst_182 : f32 to vector<8x384xf32>
    %514 = arith.addf %513, %512 : vector<8x384xf32>
    %515 = arith.divf %513, %514 : vector<8x384xf32>
    %516 = vector.extract_strided_slice %515 {offsets = [0, 0], sizes = [8, 128], strides = [1, 1]} : vector<8x384xf32> to vector<8x128xf32>
    %517 = vector.extract_strided_slice %515 {offsets = [0, 128], sizes = [8, 128], strides = [1, 1]} : vector<8x384xf32> to vector<8x128xf32>
    %518 = vector.extract_strided_slice %515 {offsets = [0, 256], sizes = [8, 128], strides = [1, 1]} : vector<8x384xf32> to vector<8x128xf32>
    %519 = vector.extract_strided_slice %509 {offsets = [0, 384], sizes = [8, 128], strides = [1, 1]} : vector<8x512xf32> to vector<8x128xf32>
    %520 = math.tanh %519 : vector<8x128xf32>
    %521 = arith.mulf %517, %448 : vector<8x128xf32>
    %522 = arith.mulf %516, %520 : vector<8x128xf32>
    %523 = arith.addf %521, %522 : vector<8x128xf32>
    %524 = math.tanh %523 : vector<8x128xf32>
    %525 = arith.mulf %518, %524 : vector<8x128xf32>
    %526 = arith.truncf %525 : vector<8x128xf32> to vector<8x128xbf16>
    %c0_183 = arith.constant 0 : index
    %c7 = arith.constant 7 : index
    %527 = vector.load %arg0[%c0_183, %c7] : memref<8x8xf32, #tpu.memory_space<vmem>>, vector<8x1xf32>
    %c0_184 = arith.constant 0 : index
    %c0_185 = arith.constant 0 : index
    %528 = vector.load %arg1[%c0_184, %c0_185] : memref<8x512xf32, #tpu.memory_space<vmem>>, vector<8x512xf32>
    %529 = vector.broadcast %527 : vector<8x1xf32> to vector<8x512xf32>
    %530 = arith.mulf %529, %528 : vector<8x512xf32>
    %c0_186 = arith.constant 0 : index
    %c0_187 = arith.constant 0 : index
    %531 = vector.load %arg2[%c0_186, %c0_187] : memref<128x512xbf16, #tpu.memory_space<vmem>>, vector<128x512xbf16>
    %cst_188 = arith.constant dense<0.000000e+00> : vector<8x512xf32>
    %532 = tpu.matmul %478, %531, %cst_188 {dimension_numbers = #tpu.dot_dimension_numbers<[1], [0], [0], [1], [0, 0, 1, 1], [], []>} : vector<8x128xbf16>, vector<128x512xbf16>, vector<8x512xf32> -> vector<8x512xf32>
    %533 = arith.addf %530, %532 : vector<8x512xf32>
    %c0_189 = arith.constant 0 : index
    %c0_190 = arith.constant 0 : index
    %c0_191 = arith.constant 0 : index
    %534 = vector.load %arg4[%c0_189, %c0_190, %c0_191] : memref<3x8x512xf32, #tpu.memory_space<vmem>>, vector<1x8x512xf32>
    %535 = vector.shape_cast %534 : vector<1x8x512xf32> to vector<8x512xf32>
    %536 = arith.addf %533, %535 : vector<8x512xf32>
    %537 = vector.extract_strided_slice %536 {offsets = [0, 0], sizes = [8, 384], strides = [1, 1]} : vector<8x512xf32> to vector<8x384xf32>
    %538 = arith.negf %537 : vector<8x384xf32>
    %539 = math.exp %538 : vector<8x384xf32>
    %cst_192 = arith.constant 1.000000e+00 : f32
    %540 = vector.broadcast %cst_192 : f32 to vector<8x384xf32>
    %541 = arith.addf %540, %539 : vector<8x384xf32>
    %542 = arith.divf %540, %541 : vector<8x384xf32>
    %543 = vector.extract_strided_slice %542 {offsets = [0, 0], sizes = [8, 128], strides = [1, 1]} : vector<8x384xf32> to vector<8x128xf32>
    %544 = vector.extract_strided_slice %542 {offsets = [0, 128], sizes = [8, 128], strides = [1, 1]} : vector<8x384xf32> to vector<8x128xf32>
    %545 = vector.extract_strided_slice %542 {offsets = [0, 256], sizes = [8, 128], strides = [1, 1]} : vector<8x384xf32> to vector<8x128xf32>
    %546 = vector.extract_strided_slice %536 {offsets = [0, 384], sizes = [8, 128], strides = [1, 1]} : vector<8x512xf32> to vector<8x128xf32>
    %547 = math.tanh %546 : vector<8x128xf32>
    %548 = arith.mulf %544, %475 : vector<8x128xf32>
    %549 = arith.mulf %543, %547 : vector<8x128xf32>
    %550 = arith.addf %548, %549 : vector<8x128xf32>
    %551 = math.tanh %550 : vector<8x128xf32>
    %552 = arith.mulf %545, %551 : vector<8x128xf32>
    %553 = arith.truncf %552 : vector<8x128xf32> to vector<8x128xbf16>
    %554 = tpu.concatenate %553, %502 in 1 : vector<8x128xbf16>, vector<8x128xbf16> -> vector<8x256xbf16>
    %c0_193 = arith.constant 0 : index
    %c0_194 = arith.constant 0 : index
    %c0_195 = arith.constant 0 : index
    %555 = vector.load %arg3[%c0_193, %c0_194, %c0_195] : memref<2x256x512xbf16, #tpu.memory_space<vmem>>, vector<1x256x512xbf16>
    %556 = vector.shape_cast %555 : vector<1x256x512xbf16> to vector<256x512xbf16>
    %cst_196 = arith.constant dense<0.000000e+00> : vector<8x512xf32>
    %557 = tpu.matmul %554, %556, %cst_196 {dimension_numbers = #tpu.dot_dimension_numbers<[1], [0], [0], [1], [0, 0, 1, 1], [], []>} : vector<8x256xbf16>, vector<256x512xbf16>, vector<8x512xf32> -> vector<8x512xf32>
    %c1_197 = arith.constant 1 : index
    %c0_198 = arith.constant 0 : index
    %c0_199 = arith.constant 0 : index
    %558 = vector.load %arg4[%c1_197, %c0_198, %c0_199] : memref<3x8x512xf32, #tpu.memory_space<vmem>>, vector<1x8x512xf32>
    %559 = vector.shape_cast %558 : vector<1x8x512xf32> to vector<8x512xf32>
    %560 = arith.addf %557, %559 : vector<8x512xf32>
    %561 = vector.extract_strided_slice %560 {offsets = [0, 0], sizes = [8, 384], strides = [1, 1]} : vector<8x512xf32> to vector<8x384xf32>
    %562 = arith.negf %561 : vector<8x384xf32>
    %563 = math.exp %562 : vector<8x384xf32>
    %cst_200 = arith.constant 1.000000e+00 : f32
    %564 = vector.broadcast %cst_200 : f32 to vector<8x384xf32>
    %565 = arith.addf %564, %563 : vector<8x384xf32>
    %566 = arith.divf %564, %565 : vector<8x384xf32>
    %567 = vector.extract_strided_slice %566 {offsets = [0, 0], sizes = [8, 128], strides = [1, 1]} : vector<8x384xf32> to vector<8x128xf32>
    %568 = vector.extract_strided_slice %566 {offsets = [0, 128], sizes = [8, 128], strides = [1, 1]} : vector<8x384xf32> to vector<8x128xf32>
    %569 = vector.extract_strided_slice %566 {offsets = [0, 256], sizes = [8, 128], strides = [1, 1]} : vector<8x384xf32> to vector<8x128xf32>
    %570 = vector.extract_strided_slice %560 {offsets = [0, 384], sizes = [8, 128], strides = [1, 1]} : vector<8x512xf32> to vector<8x128xf32>
    %571 = math.tanh %570 : vector<8x128xf32>
    %572 = arith.mulf %568, %499 : vector<8x128xf32>
    %573 = arith.mulf %567, %571 : vector<8x128xf32>
    %574 = arith.addf %572, %573 : vector<8x128xf32>
    %575 = math.tanh %574 : vector<8x128xf32>
    %576 = arith.mulf %569, %575 : vector<8x128xf32>
    %577 = arith.truncf %576 : vector<8x128xf32> to vector<8x128xbf16>
    %578 = tpu.concatenate %577, %526 in 1 : vector<8x128xbf16>, vector<8x128xbf16> -> vector<8x256xbf16>
    %c1_201 = arith.constant 1 : index
    %c0_202 = arith.constant 0 : index
    %c0_203 = arith.constant 0 : index
    %579 = vector.load %arg3[%c1_201, %c0_202, %c0_203] : memref<2x256x512xbf16, #tpu.memory_space<vmem>>, vector<1x256x512xbf16>
    %580 = vector.shape_cast %579 : vector<1x256x512xbf16> to vector<256x512xbf16>
    %cst_204 = arith.constant dense<0.000000e+00> : vector<8x512xf32>
    %581 = tpu.matmul %578, %580, %cst_204 {dimension_numbers = #tpu.dot_dimension_numbers<[1], [0], [0], [1], [0, 0, 1, 1], [], []>} : vector<8x256xbf16>, vector<256x512xbf16>, vector<8x512xf32> -> vector<8x512xf32>
    %c2_205 = arith.constant 2 : index
    %c0_206 = arith.constant 0 : index
    %c0_207 = arith.constant 0 : index
    %582 = vector.load %arg4[%c2_205, %c0_206, %c0_207] : memref<3x8x512xf32, #tpu.memory_space<vmem>>, vector<1x8x512xf32>
    %583 = vector.shape_cast %582 : vector<1x8x512xf32> to vector<8x512xf32>
    %584 = arith.addf %581, %583 : vector<8x512xf32>
    %585 = vector.extract_strided_slice %584 {offsets = [0, 0], sizes = [8, 384], strides = [1, 1]} : vector<8x512xf32> to vector<8x384xf32>
    %586 = arith.negf %585 : vector<8x384xf32>
    %587 = math.exp %586 : vector<8x384xf32>
    %cst_208 = arith.constant 1.000000e+00 : f32
    %588 = vector.broadcast %cst_208 : f32 to vector<8x384xf32>
    %589 = arith.addf %588, %587 : vector<8x384xf32>
    %590 = arith.divf %588, %589 : vector<8x384xf32>
    %591 = vector.extract_strided_slice %590 {offsets = [0, 0], sizes = [8, 128], strides = [1, 1]} : vector<8x384xf32> to vector<8x128xf32>
    %592 = vector.extract_strided_slice %590 {offsets = [0, 128], sizes = [8, 128], strides = [1, 1]} : vector<8x384xf32> to vector<8x128xf32>
    %593 = vector.extract_strided_slice %590 {offsets = [0, 256], sizes = [8, 128], strides = [1, 1]} : vector<8x384xf32> to vector<8x128xf32>
    %594 = vector.extract_strided_slice %584 {offsets = [0, 384], sizes = [8, 128], strides = [1, 1]} : vector<8x512xf32> to vector<8x128xf32>
    %595 = math.tanh %594 : vector<8x128xf32>
    %596 = arith.mulf %592, %523 : vector<8x128xf32>
    %597 = arith.mulf %591, %595 : vector<8x128xf32>
    %598 = arith.addf %596, %597 : vector<8x128xf32>
    %599 = math.tanh %598 : vector<8x128xf32>
    %600 = arith.mulf %593, %599 : vector<8x128xf32>
    %c0_209 = arith.constant 0 : index
    %c0_210 = arith.constant 0 : index
    %601 = vector.load %arg5[%c0_209, %c0_210] : memref<128x128xf32, #tpu.memory_space<vmem>>, vector<128x128xf32>
    %cst_211 = arith.constant dense<0.000000e+00> : vector<8x128xf32>
    %602 = tpu.matmul %600, %601, %cst_211 {dimension_numbers = #tpu.dot_dimension_numbers<[1], [0], [0], [1], [0, 0, 1, 1], [], []>} : vector<8x128xf32>, vector<128x128xf32>, vector<8x128xf32> -> vector<8x128xf32>
    %c0_212 = arith.constant 0 : index
    %c0_213 = arith.constant 0 : index
    %603 = vector.load %arg6[%c0_212, %c0_213] : memref<1x128xf32, #tpu.memory_space<vmem>>, vector<1x128xf32>
    %604 = vector.broadcast %603 : vector<1x128xf32> to vector<8x128xf32>
    %605 = arith.addf %602, %604 : vector<8x128xf32>
    %c0_214 = arith.constant 0 : index
    %c0_215 = arith.constant 0 : index
    %606 = vector.load %arg7[%c0_214, %c0_215] : memref<8x128xf32, #tpu.memory_space<vmem>>, vector<8x128xf32>
    tpu.vector_store %arg7[%c0_214, %c0_215], %605 {strides = array<i32>} : memref<8x128xf32, #tpu.memory_space<vmem>>, vector<8x128xf32>,
    return
  }
}

</mosaic_0001>

<llo_original>
// kernel: lstm_model_forward.1
$region0: #{lstm_model_forward.1}
  #allocation0 [shape = 'u32[]', space=smem, size = 0x4, offset = 0x4, fixed_abs, tag = 'smem constant byte address 0x4 - core index']
  #allocation1 [shape = 'u32[72,128]{1,0:T(1,128)}', space=vmem, size = 0x9000, scoped, tag = 'internal scratch']
  %s0 = inlined_call_operand.vmem [shape: f32[8,8], index: 0, kind: input, shape index: {}]
  %s1 = inlined_call_operand.hbm [shape: f32[8,512], index: 1, kind: input, shape index: {}]
  %s2 = inlined_call_operand.hbm [shape: bf16[128,512], index: 2, kind: input, shape index: {}]
  %s3 = inlined_call_operand.hbm [shape: bf16[2,256,512], index: 3, kind: input, shape index: {}]
  %s4 = inlined_call_operand.hbm [shape: f32[3,8,512], index: 4, kind: input, shape index: {}]
  %s5 = inlined_call_operand.hbm [shape: f32[128,128], index: 5, kind: input, shape index: {}]
  %s6 = inlined_call_operand.vmem [shape: f32[1,128], index: 6, kind: input, shape index: {}]
  %s7 = inlined_call_operand.vmem [shape: f32[8,128], index: 7, kind: output, shape index: {}]
  %s8 = sld [smem:[#allocation0]]
  $region58: #{lstm_model_forward.1} parent=0
    _
  %s10 = ssub.s32 1, %s8
  %s11 = scalar_select 0, %s10, %s8
  $region1: #{lstm_model_forward.1} parent=0
    #allocation2 [shape = 'u8[16384]{0}', space=vmem, size = 0x4000, scoped, tag = 'input window, operand 1, single buffered']
    #allocation3 [shape = 's32[1]{0}', space=sflag, size = 0x4, scoped, tag = 'scoped memory for lstm_model_forward.1']
    #allocation4 [shape = 'u8[131072]{0}', space=vmem, size = 0x20000, scoped, tag = 'input window, operand 2, single buffered']
    #allocation5 [shape = 's32[1]{0}', space=sflag, size = 0x4, scoped, tag = 'scoped memory for lstm_model_forward.1']
    #allocation6 [shape = 'u8[524288]{0}', space=vmem, size = 0x80000, scoped, tag = 'input window, operand 3, single buffered']
    #allocation7 [shape = 'u8[49152]{0}', space=vmem, size = 0xc000, scoped, tag = 'input window, operand 4, single buffered']
    #allocation8 [shape = 's32[1]{0}', space=sflag, size = 0x4, scoped, tag = 'scoped memory for lstm_model_forward.1']
    #allocation9 [shape = 'u8[65536]{0}', space=vmem, size = 0x10000, scoped, tag = 'input window, operand 5, single buffered']
    %12 = vsyncpa [#allocation3], 0
    %13 = vsyncpa [#allocation5], 0
    %14 = vsyncpa [#allocation8], 0
    // Predicated region
    $region2: #{lstm_model_forward.1} parent=1 // pred_check
      _
    $region3: #{lstm_model_forward.1} parent=1 // pred_check_branch
      %16 = sbr.rel (0) target = $region5
    $region4: #{lstm_model_forward.1} parent=1 // pred_region
      _
    $region5: #{lstm_model_forward.1} parent=1 // pred_fallthru
      _
    // Predicated region
    $region6: #{lstm_model_forward.1} parent=1 // pred_check
      _
    $region7: #{lstm_model_forward.1} parent=1 // pred_check_branch
      %18 = sbr.rel (0) target = $region9
    $region8: #{lstm_model_forward.1} parent=1 // pred_region
      %20 = vsyncadd [#allocation3], 0
      %s22 = sshll.u32 %s1, 4
      %s23 = int_to_ptr.hbm [resolvable:$true] %s22
      %s24 = sshll.u32 [#allocation2], 4
      %s25 = int_to_ptr.vmem [resolvable:$true] %s24
      %27 = dma.hbm_to_vmem [thread:$0]  %s23, 512, %s25, [#allocation3]
    $region9: #{lstm_model_forward.1} parent=1 // pred_fallthru
      _
    // Predicated region
    $region10: #{lstm_model_forward.1} parent=1 // pred_check
      _
    $region11: #{lstm_model_forward.1} parent=1 // pred_check_branch
      %29 = sbr.rel (0) target = $region13
    $region12: #{lstm_model_forward.1} parent=1 // pred_region
      %31 = vsyncadd [#allocation5], 0
      %s32 = sshll.u32 %s2, 4
      %s33 = int_to_ptr.hbm [resolvable:$true] %s32
      %s34 = sshll.u32 [#allocation4], 4
      %s35 = int_to_ptr.vmem [resolvable:$true] %s34
      %40 = dma.hbm_to_vmem [thread:$0]  %s33, 4096, %s35, [#allocation5], 256, 256, 16
    $region13: #{lstm_model_forward.1} parent=1 // pred_fallthru
      _
    // Predicated region
    $region14: #{lstm_model_forward.1} parent=1 // pred_check
      _
    $region15: #{lstm_model_forward.1} parent=1 // pred_check_branch
      %42 = sbr.rel (0) target = $region17
    $region16: #{lstm_model_forward.1} parent=1 // pred_region
      %44 = vsyncadd [#allocation5], 0
      %s45 = sshll.u32 %s3, 4
      %s46 = int_to_ptr.hbm [resolvable:$true] %s45
      %s47 = sshll.u32 [#allocation6], 4
      %s48 = int_to_ptr.vmem [resolvable:$true] %s47
      %53 = dma.hbm_to_vmem [thread:$0]  %s46, 16384, %s48, [#allocation5], 256, 256, 16
    $region17: #{lstm_model_forward.1} parent=1 // pred_fallthru
      _
    // Predicated region
    $region18: #{lstm_model_forward.1} parent=1 // pred_check
      _
    $region19: #{lstm_model_forward.1} parent=1 // pred_check_branch
      %55 = sbr.rel (0) target = $region21
    $region20: #{lstm_model_forward.1} parent=1 // pred_region
      %57 = vsyncadd [#allocation8], 0
      %s58 = sshll.u32 %s4, 4
      %s59 = int_to_ptr.hbm [resolvable:$true] %s58
      %s60 = sshll.u32 [#allocation7], 4
      %s61 = int_to_ptr.vmem [resolvable:$true] %s60
      %66 = dma.hbm_to_vmem [thread:$0]  %s59, 1536, %s61, [#allocation8], 512, 512, 32
    $region21: #{lstm_model_forward.1} parent=1 // pred_fallthru
      _
    // Predicated region
    $region22: #{lstm_model_forward.1} parent=1 // pred_check
      _
    $region23: #{lstm_model_forward.1} parent=1 // pred_check_branch
      %68 = sbr.rel (0) target = $region25
    $region24: #{lstm_model_forward.1} parent=1 // pred_region
      %70 = vsyncadd [#allocation8], 0
      %s71 = sshll.u32 %s5, 4
      %s72 = int_to_ptr.hbm [resolvable:$true] %s71
      %s73 = sshll.u32 [#allocation9], 4
      %s74 = int_to_ptr.vmem [resolvable:$true] %s73
      %79 = dma.hbm_to_vmem [thread:$0]  %s72, 2048, %s74, [#allocation8], 128, 128, 8
    $region25: #{lstm_model_forward.1} parent=1 // pred_fallthru
      _
    // Predicated region
    $region26: #{lstm_model_forward.1} parent=1 // pred_check
      _
    $region27: #{lstm_model_forward.1} parent=1 // pred_check_branch
      %81 = sbr.rel (0) target = $region29
    $region28: #{lstm_model_forward.1} parent=1 // pred_region
      _
    $region29: #{lstm_model_forward.1} parent=1 // pred_fallthru
      _
    // Predicated region
    $region30: #{lstm_model_forward.1} parent=1 // pred_check
      _
    $region31: #{lstm_model_forward.1} parent=1 // pred_check_branch
      %83 = sbr.rel (0) target = $region33
    $region32: #{lstm_model_forward.1} parent=1 // pred_region
      %85 = dma.done [#allocation3], 512
    $region33: #{lstm_model_forward.1} parent=1 // pred_fallthru
      _
    // Predicated region
    $region34: #{lstm_model_forward.1} parent=1 // pred_check
      _
    $region35: #{lstm_model_forward.1} parent=1 // pred_check_branch
      %87 = sbr.rel (0) target = $region37
    $region36: #{lstm_model_forward.1} parent=1 // pred_region
      %89 = dma.done [#allocation5], 4096
    $region37: #{lstm_model_forward.1} parent=1 // pred_fallthru
      _
    // Predicated region
    $region38: #{lstm_model_forward.1} parent=1 // pred_check
      _
    $region39: #{lstm_model_forward.1} parent=1 // pred_check_branch
      %91 = sbr.rel (0) target = $region41
    $region40: #{lstm_model_forward.1} parent=1 // pred_region
      %93 = dma.done [#allocation5], 16384
    $region41: #{lstm_model_forward.1} parent=1 // pred_fallthru
      _
    // Predicated region
    $region42: #{lstm_model_forward.1} parent=1 // pred_check
      _
    $region43: #{lstm_model_forward.1} parent=1 // pred_check_branch
      %95 = sbr.rel (0) target = $region45
    $region44: #{lstm_model_forward.1} parent=1 // pred_region
      %97 = dma.done [#allocation8], 1536
    $region45: #{lstm_model_forward.1} parent=1 // pred_fallthru
      _
    // Predicated region
    $region46: #{lstm_model_forward.1} parent=1 // pred_check
      _
    $region47: #{lstm_model_forward.1} parent=1 // pred_check_branch
      %99 = sbr.rel (0) target = $region49
    $region48: #{lstm_model_forward.1} parent=1 // pred_region
      %101 = dma.done [#allocation8], 2048
    $region49: #{lstm_model_forward.1} parent=1 // pred_fallthru
      _
    %v103 = vld [vmem:[%s0] sm:$0xff]
    %v104 = vld [vmem:[#allocation2] sm:$0xff]
    %v105 = vld [vmem:[#allocation2 + $0x8] sm:$0xff]
    %v106 = vld [vmem:[#allocation2 + $0x10] sm:$0xff]
    %v107 = vld [vmem:[#allocation2 + $0x18] sm:$0xff]
    %109 = vset.pattern.permute.xlu0 0
    %110 = vperm.xlu0 %109, %v103
    %v111 = vpop.permute.xlu0 %110
    %v113 = vmul.f32 %v111, %v104
    %v114 = vmul.f32 %v111, %v105
    %v115 = vmul.f32 %v111, %v106
    %v116 = vmul.f32 %v111, %v107
    %v117 = vld [vmem:[#allocation4] sm:$0xff]
    %v118 = vld [vmem:[#allocation4 + $0x8] sm:$0xff]
    %v119 = vld [vmem:[#allocation4 + $0x10] sm:$0xff]
    %v120 = vld [vmem:[#allocation4 + $0x18] sm:$0xff]
    %v121 = vld [vmem:[#allocation4 + $0x20] sm:$0xff]
    %v122 = vld [vmem:[#allocation4 + $0x28] sm:$0xff]
    %v123 = vld [vmem:[#allocation4 + $0x30] sm:$0xff]
    %v124 = vld [vmem:[#allocation4 + $0x38] sm:$0xff]
    %v125 = vld [vmem:[#allocation4 + $0x40] sm:$0xff]
    %v126 = vld [vmem:[#allocation4 + $0x48] sm:$0xff]
    %v127 = vld [vmem:[#allocation4 + $0x50] sm:$0xff]
    %v128 = vld [vmem:[#allocation4 + $0x58] sm:$0xff]
    %v129 = vld [vmem:[#allocation4 + $0x60] sm:$0xff]
    %v130 = vld [vmem:[#allocation4 + $0x68] sm:$0xff]
    %v131 = vld [vmem:[#allocation4 + $0x70] sm:$0xff]
    %v132 = vld [vmem:[#allocation4 + $0x78] sm:$0xff]
    %v133 = vld [vmem:[#allocation4 + $0x80] sm:$0xff]
    %v134 = vld [vmem:[#allocation4 + $0x88] sm:$0xff]
    %v135 = vld [vmem:[#allocation4 + $0x90] sm:$0xff]
    %v136 = vld [vmem:[#allocation4 + $0x98] sm:$0xff]
    %v137 = vld [vmem:[#allocation4 + $0xa0] sm:$0xff]
    %v138 = vld [vmem:[#allocation4 + $0xa8] sm:$0xff]
    %v139 = vld [vmem:[#allocation4 + $0xb0] sm:$0xff]
    %v140 = vld [vmem:[#allocation4 + $0xb8] sm:$0xff]
    %v141 = vld [vmem:[#allocation4 + $0xc0] sm:$0xff]
    %v142 = vld [vmem:[#allocation4 + $0xc8] sm:$0xff]
    %v143 = vld [vmem:[#allocation4 + $0xd0] sm:$0xff]
    %v144 = vld [vmem:[#allocation4 + $0xd8] sm:$0xff]
    %v145 = vld [vmem:[#allocation4 + $0xe0] sm:$0xff]
    %v146 = vld [vmem:[#allocation4 + $0xe8] sm:$0xff]
    %v147 = vld [vmem:[#allocation4 + $0xf0] sm:$0xff]
    %v148 = vld [vmem:[#allocation4 + $0xf8] sm:$0xff]
    %v181 = vunpack.c.l.b16 %v117
    %v182 = vunpack.c.h.b16 %v117
    %v183 = vunpack.c.l.b16 %v118
    %v184 = vunpack.c.h.b16 %v118
    %v185 = vunpack.c.l.b16 %v119
    %v186 = vunpack.c.h.b16 %v119
    %v187 = vunpack.c.l.b16 %v120
    %v188 = vunpack.c.h.b16 %v120
    %v189 = vunpack.c.l.b16 %v121
    %v190 = vunpack.c.h.b16 %v121
    %v191 = vunpack.c.l.b16 %v122
    %v192 = vunpack.c.h.b16 %v122
    %v193 = vunpack.c.l.b16 %v123
    %v194 = vunpack.c.h.b16 %v123
    %v195 = vunpack.c.l.b16 %v124
    %v196 = vunpack.c.h.b16 %v124
    %v197 = vunpack.c.l.b16 %v125
    %v198 = vunpack.c.h.b16 %v125
    %v199 = vunpack.c.l.b16 %v126
    %v200 = vunpack.c.h.b16 %v126
    %v201 = vunpack.c.l.b16 %v127
    %v202 = vunpack.c.h.b16 %v127
    %v203 = vunpack.c.l.b16 %v128
    %v204 = vunpack.c.h.b16 %v128
    %v205 = vunpack.c.l.b16 %v129
    %v206 = vunpack.c.h.b16 %v129
    %v207 = vunpack.c.l.b16 %v130
    %v208 = vunpack.c.h.b16 %v130
    %v209 = vunpack.c.l.b16 %v131
    %v210 = vunpack.c.h.b16 %v131
    %v211 = vunpack.c.l.b16 %v132
    %v212 = vunpack.c.h.b16 %v132
    %v213 = vunpack.c.l.b16 %v133
    %v214 = vunpack.c.h.b16 %v133
    %v215 = vunpack.c.l.b16 %v134
    %v216 = vunpack.c.h.b16 %v134
    %v217 = vunpack.c.l.b16 %v135
    %v218 = vunpack.c.h.b16 %v135
    %v219 = vunpack.c.l.b16 %v136
    %v220 = vunpack.c.h.b16 %v136
    %v221 = vunpack.c.l.b16 %v137
    %v222 = vunpack.c.h.b16 %v137
    %v223 = vunpack.c.l.b16 %v138
    %v224 = vunpack.c.h.b16 %v138
    %v225 = vunpack.c.l.b16 %v139
    %v226 = vunpack.c.h.b16 %v139
    %v227 = vunpack.c.l.b16 %v140
    %v228 = vunpack.c.h.b16 %v140
    %v229 = vunpack.c.l.b16 %v141
    %v230 = vunpack.c.h.b16 %v141
    %v231 = vunpack.c.l.b16 %v142
    %v232 = vunpack.c.h.b16 %v142
    %v233 = vunpack.c.l.b16 %v143
    %v234 = vunpack.c.h.b16 %v143
    %v235 = vunpack.c.l.b16 %v144
    %v236 = vunpack.c.h.b16 %v144
    %v237 = vunpack.c.l.b16 %v145
    %v238 = vunpack.c.h.b16 %v145
    %v239 = vunpack.c.l.b16 %v146
    %v240 = vunpack.c.h.b16 %v146
    %v241 = vunpack.c.l.b16 %v147
    %v242 = vunpack.c.h.b16 %v147
    %v243 = vunpack.c.l.b16 %v148
    %v244 = vunpack.c.h.b16 %v148
    %v245 = vpack.c.b16 %v185, %v181
    %v246 = vpack.c.b16 %v186, %v182
    %v247 = vpack.c.b16 %v187, %v183
    %v248 = vpack.c.b16 %v188, %v184
    %v249 = vpack.c.b16 %v193, %v189
    %v250 = vpack.c.b16 %v194, %v190
    %v251 = vpack.c.b16 %v195, %v191
    %v252 = vpack.c.b16 %v196, %v192
    %v253 = vpack.c.b16 %v201, %v197
    %v254 = vpack.c.b16 %v202, %v198
    %v255 = vpack.c.b16 %v203, %v199
    %v256 = vpack.c.b16 %v204, %v200
    %v257 = vpack.c.b16 %v209, %v205
    %v258 = vpack.c.b16 %v210, %v206
    %v259 = vpack.c.b16 %v211, %v207
    %v260 = vpack.c.b16 %v212, %v208
    %v261 = vpack.c.b16 %v217, %v213
    %v262 = vpack.c.b16 %v218, %v214
    %v263 = vpack.c.b16 %v219, %v215
    %v264 = vpack.c.b16 %v220, %v216
    %v265 = vpack.c.b16 %v225, %v221
    %v266 = vpack.c.b16 %v226, %v222
    %v267 = vpack.c.b16 %v227, %v223
    %v268 = vpack.c.b16 %v228, %v224
    %v269 = vpack.c.b16 %v233, %v229
    %v270 = vpack.c.b16 %v234, %v230
    %v271 = vpack.c.b16 %v235, %v231
    %v272 = vpack.c.b16 %v236, %v232
    %v273 = vpack.c.b16 %v241, %v237
    %v274 = vpack.c.b16 %v242, %v238
    %v275 = vpack.c.b16 %v243, %v239
    %v276 = vpack.c.b16 %v244, %v240
    %309 = vmatpush.bf16.msra.mxu0 %v273
    %310 = vmatpush.bf16.msra.mxu0 %v269
    %311 = vmatpush.bf16.msra.mxu0 %v265
    %312 = vmatpush.bf16.msra.mxu0 %v261
    %313 = vmatpush.bf16.msra.mxu0 %v257
    %314 = vmatpush.bf16.msra.mxu0 %v253
    %315 = vmatpush.bf16.msra.mxu0 %v249
    %316 = vmatpush.bf16.msra.mxu0 %v245
    %317 = vmatmul.bf16.gmra.mxu0 0
    %v318 = vpop.f32.mrf.mxu0
    %v319 = vadd.f32 0.0, %v318
    %v320 = vpop.f32.mrf.mxu0
    %321 = vdwg.mxu0
    %322 = vmatpush.bf16.msra.mxu0 %v274
    %323 = vmatpush.bf16.msra.mxu0 %v270
    %324 = vmatpush.bf16.msra.mxu0 %v266
    %325 = vmatpush.bf16.msra.mxu0 %v262
    %326 = vmatpush.bf16.msra.mxu0 %v258
    %327 = vmatpush.bf16.msra.mxu0 %v254
    %328 = vmatpush.bf16.msra.mxu0 %v250
    %329 = vmatpush.bf16.msra.mxu0 %v246
    %330 = vmatmul.bf16.gmra.mxu0 0
    %v331 = vpop.f32.mrf.mxu0
    %v332 = vadd.f32 0.0, %v331
    %v333 = vpop.f32.mrf.mxu0
    %334 = vdwg.mxu0
    %335 = vmatpush.bf16.msra.mxu0 %v275
    %336 = vmatpush.bf16.msra.mxu0 %v271
    %337 = vmatpush.bf16.msra.mxu0 %v267
    %338 = vmatpush.bf16.msra.mxu0 %v263
    %339 = vmatpush.bf16.msra.mxu0 %v259
    %340 = vmatpush.bf16.msra.mxu0 %v255
    %341 = vmatpush.bf16.msra.mxu0 %v251
    %342 = vmatpush.bf16.msra.mxu0 %v247
    %343 = vmatmul.bf16.gmra.mxu0 0
    %v344 = vpop.f32.mrf.mxu0
    %v345 = vadd.f32 0.0, %v344
    %v346 = vpop.f32.mrf.mxu0
    %347 = vdwg.mxu0
    %348 = vmatpush.bf16.msra.mxu0 %v276
    %349 = vmatpush.bf16.msra.mxu0 %v272
    %350 = vmatpush.bf16.msra.mxu0 %v268
    %351 = vmatpush.bf16.msra.mxu0 %v264
    %352 = vmatpush.bf16.msra.mxu0 %v260
    %353 = vmatpush.bf16.msra.mxu0 %v256
    %354 = vmatpush.bf16.msra.mxu0 %v252
    %355 = vmatpush.bf16.msra.mxu0 %v248
    %356 = vmatmul.bf16.gmra.mxu0 0
    %v357 = vpop.f32.mrf.mxu0
    %v358 = vadd.f32 0.0, %v357
    %v359 = vpop.f32.mrf.mxu0
    %360 = vdwg.mxu0
    %v361 = vadd.f32 %v113, %v319
    %v362 = vadd.f32 %v114, %v332
    %v363 = vadd.f32 %v115, %v345
    %v364 = vadd.f32 %v116, %v358
    %v365 = vld [vmem:[#allocation7] sm:$0xff]
    %v366 = vld [vmem:[#allocation7 + $0x8] sm:$0xff]
    %v367 = vld [vmem:[#allocation7 + $0x10] sm:$0xff]
    %v368 = vld [vmem:[#allocation7 + $0x18] sm:$0xff]
    %v369 = vadd.f32 %v361, %v365
    %v370 = vadd.f32 %v362, %v366
    %v371 = vadd.f32 %v363, %v367
    %v372 = vadd.f32 %v364, %v368
    %v373 = vxor.u32 %v369, 2147483648
    %v374 = vxor.u32 %v370, 2147483648
    %v375 = vxor.u32 %v371, 2147483648
    %v376 = vmul.f32 %v373, 1.442695
    %v377 = vpow.pop %v376
    %v378 = vmul.f32 %v374, 1.442695
    %v379 = vpow.pop %v378
    %v380 = vmul.f32 %v375, 1.442695
    %v381 = vpow.pop %v380
    %v382 = vadd.f32 %v377, 1.0
    %v383 = vadd.f32 %v379, 1.0
    %v384 = vadd.f32 %v381, 1.0
    %v385 = vrcp.pop %v382
    %v386 = vmul.f32 %v382, %v385
    %v387 = vsub.f32 1.0, %v386
    %v388 = vmul.f32 %v385, %v387
    %v389 = vadd.f32 %v385, %v388
    %vm390 = vweird.f32 %v382
    %vm391 = vweird.f32 %v385
    %vm392 = vmor %vm390, %vm391
    %v393 = vsel %vm392, %v385, %v389
    %v394 = vand.u32 2147483647, %v382
    %vm395 = vcmp.eq.f32.partialorder %v394, 8.507059e+37
    %v396 = vand.u32 %v382, 2147483648
    %v397 = vor.u32 1.1754944e-38, %v396
    %v398 = vsel %vm395, %v397, %v393
    %v399 = vmul.f32 1.0, %v398
    %v400 = vrcp.pop %v383
    %v401 = vmul.f32 %v383, %v400
    %v402 = vsub.f32 1.0, %v401
    %v403 = vmul.f32 %v400, %v402
    %v404 = vadd.f32 %v400, %v403
    %vm405 = vweird.f32 %v383
    %vm406 = vweird.f32 %v400
    %vm407 = vmor %vm405, %vm406
    %v408 = vsel %vm407, %v400, %v404
    %v409 = vand.u32 2147483647, %v383
    %vm410 = vcmp.eq.f32.partialorder %v409, 8.507059e+37
    %v411 = vand.u32 %v383, 2147483648
    %v412 = vor.u32 1.1754944e-38, %v411
    %v413 = vsel %vm410, %v412, %v408
    %v414 = vmul.f32 1.0, %v413
    %v415 = vrcp.pop %v384
    %v416 = vmul.f32 %v384, %v415
    %v417 = vsub.f32 1.0, %v416
    %v418 = vmul.f32 %v415, %v417
    %v419 = vadd.f32 %v415, %v418
    %vm420 = vweird.f32 %v384
    %vm421 = vweird.f32 %v415
    %vm422 = vmor %vm420, %vm421
    %v423 = vsel %vm422, %v415, %v419
    %v424 = vand.u32 2147483647, %v384
    %vm425 = vcmp.eq.f32.partialorder %v424, 8.507059e+37
    %v426 = vand.u32 %v384, 2147483648
    %v427 = vor.u32 1.1754944e-38, %v426
    %v428 = vsel %vm425, %v427, %v423
    %v429 = vmul.f32 1.0, %v428
    %v430 = vtanh.pop %v372
    %v431 = vmul.f32 %v414, 0.0
    %v432 = vmul.f32 %v399, %v430
    %v433 = vadd.f32 %v431, %v432
    %v434 = vtanh.pop %v433
    %v435 = vmul.f32 %v429, %v434
    %v436 = vpack.c.bf16 %v435, %v435
    %v437 = vld [vmem:[#allocation6] sm:$0xff]
    %v438 = vld [vmem:[#allocation6 + $0x8] sm:$0xff]
    %v439 = vld [vmem:[#allocation6 + $0x10] sm:$0xff]
    %v440 = vld [vmem:[#allocation6 + $0x18] sm:$0xff]
    %v441 = vld [vmem:[#allocation6 + $0x20] sm:$0xff]
    %v442 = vld [vmem:[#allocation6 + $0x28] sm:$0xff]
    %v443 = vld [vmem:[#allocation6 + $0x30] sm:$0xff]
    %v444 = vld [vmem:[#allocation6 + $0x38] sm:$0xff]
    %v445 = vld [vmem:[#allocation6 + $0x40] sm:$0xff]
    %v446 = vld [vmem:[#allocation6 + $0x48] sm:$0xff]
    %v447 = vld [vmem:[#allocation6 + $0x50] sm:$0xff]
    %v448 = vld [vmem:[#allocation6 + $0x58] sm:$0xff]
    %v449 = vld [vmem:[#allocation6 + $0x60] sm:$0xff]
    %v450 = vld [vmem:[#allocation6 + $0x68] sm:$0xff]
    %v451 = vld [vmem:[#allocation6 + $0x70] sm:$0xff]
    %v452 = vld [vmem:[#allocation6 + $0x78] sm:$0xff]
    %v453 = vld [vmem:[#allocation6 + $0x80] sm:$0xff]
    %v454 = vld [vmem:[#allocation6 + $0x88] sm:$0xff]
    %v455 = vld [vmem:[#allocation6 + $0x90] sm:$0xff]
    %v456 = vld [vmem:[#allocation6 + $0x98] sm:$0xff]
    %v457 = vld [vmem:[#allocation6 + $0xa0] sm:$0xff]
    %v458 = vld [vmem:[#allocation6 + $0xa8] sm:$0xff]
    %v459 = vld [vmem:[#allocation6 + $0xb0] sm:$0xff]
    %v460 = vld [vmem:[#allocation6 + $0xb8] sm:$0xff]
    %v461 = vld [vmem:[#allocation6 + $0xc0] sm:$0xff]
    %v462 = vld [vmem:[#allocation6 + $0xc8] sm:$0xff]
    %v463 = vld [vmem:[#allocation6 + $0xd0] sm:$0xff]
    %v464 = vld [vmem:[#allocation6 + $0xd8] sm:$0xff]
    %v465 = vld [vmem:[#allocation6 + $0xe0] sm:$0xff]
    %v466 = vld [vmem:[#allocation6 + $0xe8] sm:$0xff]
    %v467 = vld [vmem:[#allocation6 + $0xf0] sm:$0xff]
    %v468 = vld [vmem:[#allocation6 + $0xf8] sm:$0xff]
    %v469 = vld [vmem:[#allocation6 + $0x100] sm:$0xff]
    %v470 = vld [vmem:[#allocation6 + $0x108] sm:$0xff]
    %v471 = vld [vmem:[#allocation6 + $0x110] sm:$0xff]
    %v472 = vld [vmem:[#allocation6 + $0x118] sm:$0xff]
    %v473 = vld [vmem:[#allocation6 + $0x120] sm:$0xff]
    %v474 = vld [vmem:[#allocation6 + $0x128] sm:$0xff]
    %v475 = vld [vmem:[#allocation6 + $0x130] sm:$0xff]
    %v476 = vld [vmem:[#allocation6 + $0x138] sm:$0xff]
    %v477 = vld [vmem:[#allocation6 + $0x140] sm:$0xff]
    %v478 = vld [vmem:[#allocation6 + $0x148] sm:$0xff]
    %v479 = vld [vmem:[#allocation6 + $0x150] sm:$0xff]
    %v480 = vld [vmem:[#allocation6 + $0x158] sm:$0xff]
    %v481 = vld [vmem:[#allocation6 + $0x160] sm:$0xff]
    %v482 = vld [vmem:[#allocation6 + $0x168] sm:$0xff]
    %v483 = vld [vmem:[#allocation6 + $0x170] sm:$0xff]
    %v484 = vld [vmem:[#allocation6 + $0x178] sm:$0xff]
    %v485 = vld [vmem:[#allocation6 + $0x180] sm:$0xff]
    %v486 = vld [vmem:[#allocation6 + $0x188] sm:$0xff]
    %v487 = vld [vmem:[#allocation6 + $0x190] sm:$0xff]
    %v488 = vld [vmem:[#allocation6 + $0x198] sm:$0xff]
    %v489 = vld [vmem:[#allocation6 + $0x1a0] sm:$0xff]
    %v490 = vld [vmem:[#allocation6 + $0x1a8] sm:$0xff]
    %v491 = vld [vmem:[#allocation6 + $0x1b0] sm:$0xff]
    %v492 = vld [vmem:[#allocation6 + $0x1b8] sm:$0xff]
    %v493 = vld [vmem:[#allocation6 + $0x1c0] sm:$0xff]
    %v494 = vld [vmem:[#allocation6 + $0x1c8] sm:$0xff]
    %v495 = vld [vmem:[#allocation6 + $0x1d0] sm:$0xff]
    %v496 = vld [vmem:[#allocation6 + $0x1d8] sm:$0xff]
    %v497 = vld [vmem:[#allocation6 + $0x1e0] sm:$0xff]
    %v498 = vld [vmem:[#allocation6 + $0x1e8] sm:$0xff]
    %v499 = vld [vmem:[#allocation6 + $0x1f0] sm:$0xff]
    %v500 = vld [vmem:[#allocation6 + $0x1f8] sm:$0xff]
    %s501 = scalar_lea.vmem [#allocation7], 32
    %v502 = vld [vmem:[%s501] sm:$0xff]
    %v503 = vld [vmem:[%s501 + $0x8] sm:$0xff]
    %v504 = vld [vmem:[%s501 + $0x10] sm:$0xff]
    %v505 = vld [vmem:[%s501 + $0x18] sm:$0xff]
    %v570 = vunpack.c.l.b16 %v437
    %v571 = vunpack.c.h.b16 %v437
    %v572 = vunpack.c.l.b16 %v438
    %v573 = vunpack.c.h.b16 %v438
    %v574 = vunpack.c.l.b16 %v439
    %v575 = vunpack.c.h.b16 %v439
    %v576 = vunpack.c.l.b16 %v440
    %v577 = vunpack.c.h.b16 %v440
    %v578 = vunpack.c.l.b16 %v441
    %v579 = vunpack.c.h.b16 %v441
    %v580 = vunpack.c.l.b16 %v442
    %v581 = vunpack.c.h.b16 %v442
    %v582 = vunpack.c.l.b16 %v443
    %v583 = vunpack.c.h.b16 %v443
    %v584 = vunpack.c.l.b16 %v444
    %v585 = vunpack.c.h.b16 %v444
    %v586 = vunpack.c.l.b16 %v445
    %v587 = vunpack.c.h.b16 %v445
    %v588 = vunpack.c.l.b16 %v446
    %v589 = vunpack.c.h.b16 %v446
    %v590 = vunpack.c.l.b16 %v447
    %v591 = vunpack.c.h.b16 %v447
    %v592 = vunpack.c.l.b16 %v448
    %v593 = vunpack.c.h.b16 %v448
    %v594 = vunpack.c.l.b16 %v449
    %v595 = vunpack.c.h.b16 %v449
    %v596 = vunpack.c.l.b16 %v450
    %v597 = vunpack.c.h.b16 %v450
    %v598 = vunpack.c.l.b16 %v451
    %v599 = vunpack.c.h.b16 %v451
    %v600 = vunpack.c.l.b16 %v452
    %v601 = vunpack.c.h.b16 %v452
    %v602 = vunpack.c.l.b16 %v453
    %v603 = vunpack.c.h.b16 %v453
    %v604 = vunpack.c.l.b16 %v454
    %v605 = vunpack.c.h.b16 %v454
    %v606 = vunpack.c.l.b16 %v455
    %v607 = vunpack.c.h.b16 %v455
    %v608 = vunpack.c.l.b16 %v456
    %v609 = vunpack.c.h.b16 %v456
    %v610 = vunpack.c.l.b16 %v457
    %v611 = vunpack.c.h.b16 %v457
    %v612 = vunpack.c.l.b16 %v458
    %v613 = vunpack.c.h.b16 %v458
    %v614 = vunpack.c.l.b16 %v459
    %v615 = vunpack.c.h.b16 %v459
    %v616 = vunpack.c.l.b16 %v460
    %v617 = vunpack.c.h.b16 %v460
    %v618 = vunpack.c.l.b16 %v461
    %v619 = vunpack.c.h.b16 %v461
    %v620 = vunpack.c.l.b16 %v462
    %v621 = vunpack.c.h.b16 %v462
    %v622 = vunpack.c.l.b16 %v463
    %v623 = vunpack.c.h.b16 %v463
    %v624 = vunpack.c.l.b16 %v464
    %v625 = vunpack.c.h.b16 %v464
    %v626 = vunpack.c.l.b16 %v465
    %v627 = vunpack.c.h.b16 %v465
    %v628 = vunpack.c.l.b16 %v466
    %v629 = vunpack.c.h.b16 %v466
    %v630 = vunpack.c.l.b16 %v467
    %v631 = vunpack.c.h.b16 %v467
    %v632 = vunpack.c.l.b16 %v468
    %v633 = vunpack.c.h.b16 %v468
    %v634 = vunpack.c.l.b16 %v469
    %v635 = vunpack.c.h.b16 %v469
    %v636 = vunpack.c.l.b16 %v470
    %v637 = vunpack.c.h.b16 %v470
    %v638 = vunpack.c.l.b16 %v471
    %v639 = vunpack.c.h.b16 %v471
    %v640 = vunpack.c.l.b16 %v472
    %v641 = vunpack.c.h.b16 %v472
    %v642 = vunpack.c.l.b16 %v473
    %v643 = vunpack.c.h.b16 %v473
    %v644 = vunpack.c.l.b16 %v474
    %v645 = vunpack.c.h.b16 %v474
    %v646 = vunpack.c.l.b16 %v475
    %v647 = vunpack.c.h.b16 %v475
    %v648 = vunpack.c.l.b16 %v476
    %v649 = vunpack.c.h.b16 %v476
    %v650 = vunpack.c.l.b16 %v477
    %v651 = vunpack.c.h.b16 %v477
    %v652 = vunpack.c.l.b16 %v478
    %v653 = vunpack.c.h.b16 %v478
    %v654 = vunpack.c.l.b16 %v479
    %v655 = vunpack.c.h.b16 %v479
    %v656 = vunpack.c.l.b16 %v480
    %v657 = vunpack.c.h.b16 %v480
    %v658 = vunpack.c.l.b16 %v481
    %v659 = vunpack.c.h.b16 %v481
    %v660 = vunpack.c.l.b16 %v482
    %v661 = vunpack.c.h.b16 %v482
    %v662 = vunpack.c.l.b16 %v483
    %v663 = vunpack.c.h.b16 %v483
    %v664 = vunpack.c.l.b16 %v484
    %v665 = vunpack.c.h.b16 %v484
    %v666 = vunpack.c.l.b16 %v485
    %v667 = vunpack.c.h.b16 %v485
    %v668 = vunpack.c.l.b16 %v486
    %v669 = vunpack.c.h.b16 %v486
    %v670 = vunpack.c.l.b16 %v487
    %v671 = vunpack.c.h.b16 %v487
    %v672 = vunpack.c.l.b16 %v488
    %v673 = vunpack.c.h.b16 %v488
    %v674 = vunpack.c.l.b16 %v489
    %v675 = vunpack.c.h.b16 %v489
    %v676 = vunpack.c.l.b16 %v490
    %v677 = vunpack.c.h.b16 %v490
    %v678 = vunpack.c.l.b16 %v491
    %v679 = vunpack.c.h.b16 %v491
    %v680 = vunpack.c.l.b16 %v492
    %v681 = vunpack.c.h.b16 %v492
    %v682 = vunpack.c.l.b16 %v493
    %v683 = vunpack.c.h.b16 %v493
    %v684 = vunpack.c.l.b16 %v494
    %v685 = vunpack.c.h.b16 %v494
    %v686 = vunpack.c.l.b16 %v495
    %v687 = vunpack.c.h.b16 %v495
    %v688 = vunpack.c.l.b16 %v496
    %v689 = vunpack.c.h.b16 %v496
    %v690 = vunpack.c.l.b16 %v497
    %v691 = vunpack.c.h.b16 %v497
    %v692 = vunpack.c.l.b16 %v498
    %v693 = vunpack.c.h.b16 %v498
    %v694 = vunpack.c.l.b16 %v499
    %v695 = vunpack.c.h.b16 %v499
    %v696 = vunpack.c.l.b16 %v500
    %v697 = vunpack.c.h.b16 %v500
    %v698 = vpack.c.b16 %v574, %v570
    %v699 = vpack.c.b16 %v575, %v571
    %v700 = vpack.c.b16 %v576, %v572
    %v701 = vpack.c.b16 %v577, %v573
    %v702 = vpack.c.b16 %v582, %v578
    %v703 = vpack.c.b16 %v583, %v579
    %v704 = vpack.c.b16 %v584, %v580
    %v705 = vpack.c.b16 %v585, %v581
    %v706 = vpack.c.b16 %v590, %v586
    %v707 = vpack.c.b16 %v591, %v587
    %v708 = vpack.c.b16 %v592, %v588
    %v709 = vpack.c.b16 %v593, %v589
    %v710 = vpack.c.b16 %v598, %v594
    %v711 = vpack.c.b16 %v599, %v595
    %v712 = vpack.c.b16 %v600, %v596
    %v713 = vpack.c.b16 %v601, %v597
    %v714 = vpack.c.b16 %v606, %v602
    %v715 = vpack.c.b16 %v607, %v603
    %v716 = vpack.c.b16 %v608, %v604
    %v717 = vpack.c.b16 %v609, %v605
    %v718 = vpack.c.b16 %v614, %v610
    %v719 = vpack.c.b16 %v615, %v611
    %v720 = vpack.c.b16 %v616, %v612
    %v721 = vpack.c.b16 %v617, %v613
    %v722 = vpack.c.b16 %v622, %v618
    %v723 = vpack.c.b16 %v623, %v619
    %v724 = vpack.c.b16 %v624, %v620
    %v725 = vpack.c.b16 %v625, %v621
    %v726 = vpack.c.b16 %v630, %v626
    %v727 = vpack.c.b16 %v631, %v627
    %v728 = vpack.c.b16 %v632, %v628
    %v729 = vpack.c.b16 %v633, %v629
    %v730 = vpack.c.b16 %v638, %v634
    %v731 = vpack.c.b16 %v639, %v635
    %v732 = vpack.c.b16 %v640, %v636
    %v733 = vpack.c.b16 %v641, %v637
    %v734 = vpack.c.b16 %v646, %v642
    %v735 = vpack.c.b16 %v647, %v643
    %v736 = vpack.c.b16 %v648, %v644
    %v737 = vpack.c.b16 %v649, %v645
    %v738 = vpack.c.b16 %v654, %v650
    %v739 = vpack.c.b16 %v655, %v651
    %v740 = vpack.c.b16 %v656, %v652
    %v741 = vpack.c.b16 %v657, %v653
    %v742 = vpack.c.b16 %v662, %v658
    %v743 = vpack.c.b16 %v663, %v659
    %v744 = vpack.c.b16 %v664, %v660
    %v745 = vpack.c.b16 %v665, %v661
    %v746 = vpack.c.b16 %v670, %v666
    %v747 = vpack.c.b16 %v671, %v667
    %v748 = vpack.c.b16 %v672, %v668
    %v749 = vpack.c.b16 %v673, %v669
    %v750 = vpack.c.b16 %v678, %v674
    %v751 = vpack.c.b16 %v679, %v675
    %v752 = vpack.c.b16 %v680, %v676
    %v753 = vpack.c.b16 %v681, %v677
    %v754 = vpack.c.b16 %v686, %v682
    %v755 = vpack.c.b16 %v687, %v683
    %v756 = vpack.c.b16 %v688, %v684
    %v757 = vpack.c.b16 %v689, %v685
    %v758 = vpack.c.b16 %v694, %v690
    %v759 = vpack.c.b16 %v695, %v691
    %v760 = vpack.c.b16 %v696, %v692
    %v761 = vpack.c.b16 %v697, %v693
    %826 = vmatpush.bf16.msra.mxu0 %v726
    %827 = vmatpush.bf16.msra.mxu0 %v722
    %828 = vmatpush.bf16.msra.mxu0 %v718
    %829 = vmatpush.bf16.msra.mxu0 %v714
    %830 = vmatpush.bf16.msra.mxu0 %v710
    %831 = vmatpush.bf16.msra.mxu0 %v706
    %832 = vmatpush.bf16.msra.mxu0 %v702
    %833 = vmatpush.bf16.msra.mxu0 %v698
    %834 = vmatmul.bf16.gmra.mxu0 %v436
    %v835 = vpop.f32.mrf.mxu0
    %v836 = vadd.f32 %v502, %v835
    %v837 = vpop.f32.mrf.mxu0
    %838 = vdwg.mxu0
    %839 = vmatpush.bf16.msra.mxu0 %v758
    %840 = vmatpush.bf16.msra.mxu0 %v754
    %841 = vmatpush.bf16.msra.mxu0 %v750
    %842 = vmatpush.bf16.msra.mxu0 %v746
    %843 = vmatpush.bf16.msra.mxu0 %v742
    %844 = vmatpush.bf16.msra.mxu0 %v738
    %845 = vmatpush.bf16.msra.mxu0 %v734
    %846 = vmatpush.bf16.msra.mxu0 %v730
    %847 = vmatmul.bf16.gmra.mxu0 0
    %v848 = vpop.f32.mrf.mxu0
    %v849 = vadd.f32 %v836, %v848
    %v850 = vpop.f32.mrf.mxu0
    %851 = vdwg.mxu0
    %852 = vmatpush.bf16.msra.mxu0 %v727
    %853 = vmatpush.bf16.msra.mxu0 %v723
    %854 = vmatpush.bf16.msra.mxu0 %v719
    %855 = vmatpush.bf16.msra.mxu0 %v715
    %856 = vmatpush.bf16.msra.mxu0 %v711
    %857 = vmatpush.bf16.msra.mxu0 %v707
    %858 = vmatpush.bf16.msra.mxu0 %v703
    %859 = vmatpush.bf16.msra.mxu0 %v699
    %860 = vmatmul.bf16.gmra.mxu0 %v436
    %v861 = vpop.f32.mrf.mxu0
    %v862 = vadd.f32 %v503, %v861
    %v863 = vpop.f32.mrf.mxu0
    %864 = vdwg.mxu0
    %865 = vmatpush.bf16.msra.mxu0 %v759
    %866 = vmatpush.bf16.msra.mxu0 %v755
    %867 = vmatpush.bf16.msra.mxu0 %v751
    %868 = vmatpush.bf16.msra.mxu0 %v747
    %869 = vmatpush.bf16.msra.mxu0 %v743
    %870 = vmatpush.bf16.msra.mxu0 %v739
    %871 = vmatpush.bf16.msra.mxu0 %v735
    %872 = vmatpush.bf16.msra.mxu0 %v731
    %873 = vmatmul.bf16.gmra.mxu0 0
    %v874 = vpop.f32.mrf.mxu0
    %v875 = vadd.f32 %v862, %v874
    %v876 = vpop.f32.mrf.mxu0
    %877 = vdwg.mxu0
    %878 = vmatpush.bf16.msra.mxu0 %v728
    %879 = vmatpush.bf16.msra.mxu0 %v724
    %880 = vmatpush.bf16.msra.mxu0 %v720
    %881 = vmatpush.bf16.msra.mxu0 %v716
    %882 = vmatpush.bf16.msra.mxu0 %v712
    %883 = vmatpush.bf16.msra.mxu0 %v708
    %884 = vmatpush.bf16.msra.mxu0 %v704
    %885 = vmatpush.bf16.msra.mxu0 %v700
    %886 = vmatmul.bf16.gmra.mxu0 %v436
    %v887 = vpop.f32.mrf.mxu0
    %v888 = vadd.f32 %v504, %v887
    %v889 = vpop.f32.mrf.mxu0
    %890 = vdwg.mxu0
    %891 = vmatpush.bf16.msra.mxu0 %v760
    %892 = vmatpush.bf16.msra.mxu0 %v756
    %893 = vmatpush.bf16.msra.mxu0 %v752
    %894 = vmatpush.bf16.msra.mxu0 %v748
    %895 = vmatpush.bf16.msra.mxu0 %v744
    %896 = vmatpush.bf16.msra.mxu0 %v740
    %897 = vmatpush.bf16.msra.mxu0 %v736
    %898 = vmatpush.bf16.msra.mxu0 %v732
    %899 = vmatmul.bf16.gmra.mxu0 0
    %v900 = vpop.f32.mrf.mxu0
    %v901 = vadd.f32 %v888, %v900
    %v902 = vpop.f32.mrf.mxu0
    %903 = vdwg.mxu0
    %904 = vmatpush.bf16.msra.mxu0 %v729
    %905 = vmatpush.bf16.msra.mxu0 %v725
    %906 = vmatpush.bf16.msra.mxu0 %v721
    %907 = vmatpush.bf16.msra.mxu0 %v717
    %908 = vmatpush.bf16.msra.mxu0 %v713
    %909 = vmatpush.bf16.msra.mxu0 %v709
    %910 = vmatpush.bf16.msra.mxu0 %v705
    %911 = vmatpush.bf16.msra.mxu0 %v701
    %912 = vmatmul.bf16.gmra.mxu0 %v436
    %v913 = vpop.f32.mrf.mxu0
    %v914 = vadd.f32 %v505, %v913
    %v915 = vpop.f32.mrf.mxu0
    %916 = vdwg.mxu0
    %917 = vmatpush.bf16.msra.mxu0 %v761
    %918 = vmatpush.bf16.msra.mxu0 %v757
    %919 = vmatpush.bf16.msra.mxu0 %v753
    %920 = vmatpush.bf16.msra.mxu0 %v749
    %921 = vmatpush.bf16.msra.mxu0 %v745
    %922 = vmatpush.bf16.msra.mxu0 %v741
    %923 = vmatpush.bf16.msra.mxu0 %v737
    %924 = vmatpush.bf16.msra.mxu0 %v733
    %925 = vmatmul.bf16.gmra.mxu0 0
    %v926 = vpop.f32.mrf.mxu0
    %v927 = vadd.f32 %v914, %v926
    %v928 = vpop.f32.mrf.mxu0
    %929 = vdwg.mxu0
    %v930 = vxor.u32 %v849, 2147483648
    %v931 = vxor.u32 %v875, 2147483648
    %v932 = vxor.u32 %v901, 2147483648
    %v933 = vmul.f32 %v930, 1.442695
    %v934 = vpow.pop %v933
    %v935 = vmul.f32 %v931, 1.442695
    %v936 = vpow.pop %v935
    %v937 = vmul.f32 %v932, 1.442695
    %v938 = vpow.pop %v937
    %v939 = vadd.f32 %v934, 1.0
    %v940 = vadd.f32 %v936, 1.0
    %v941 = vadd.f32 %v938, 1.0
    %v942 = vrcp.pop %v939
    %v943 = vmul.f32 %v939, %v942
    %v944 = vsub.f32 1.0, %v943
    %v945 = vmul.f32 %v942, %v944
    %v946 = vadd.f32 %v942, %v945
    %vm947 = vweird.f32 %v939
    %vm948 = vweird.f32 %v942
    %vm949 = vmor %vm947, %vm948
    %v950 = vsel %vm949, %v942, %v946
    %v951 = vand.u32 2147483647, %v939
    %vm952 = vcmp.eq.f32.partialorder %v951, 8.507059e+37
    %v953 = vand.u32 %v939, 2147483648
    %v954 = vor.u32 1.1754944e-38, %v953
    %v955 = vsel %vm952, %v954, %v950
    %v956 = vmul.f32 1.0, %v955
    %v957 = vrcp.pop %v940
    %v958 = vmul.f32 %v940, %v957
    %v959 = vsub.f32 1.0, %v958
    %v960 = vmul.f32 %v957, %v959
    %v961 = vadd.f32 %v957, %v960
    %vm962 = vweird.f32 %v940
    %vm963 = vweird.f32 %v957
    %vm964 = vmor %vm962, %vm963
    %v965 = vsel %vm964, %v957, %v961
    %v966 = vand.u32 2147483647, %v940
    %vm967 = vcmp.eq.f32.partialorder %v966, 8.507059e+37
    %v968 = vand.u32 %v940, 2147483648
    %v969 = vor.u32 1.1754944e-38, %v968
    %v970 = vsel %vm967, %v969, %v965
    %v971 = vmul.f32 1.0, %v970
    %v972 = vrcp.pop %v941
    %v973 = vmul.f32 %v941, %v972
    %v974 = vsub.f32 1.0, %v973
    %v975 = vmul.f32 %v972, %v974
    %v976 = vadd.f32 %v972, %v975
    %vm977 = vweird.f32 %v941
    %vm978 = vweird.f32 %v972
    %vm979 = vmor %vm977, %vm978
    %v980 = vsel %vm979, %v972, %v976
    %v981 = vand.u32 2147483647, %v941
    %vm982 = vcmp.eq.f32.partialorder %v981, 8.507059e+37
    %v983 = vand.u32 %v941, 2147483648
    %v984 = vor.u32 1.1754944e-38, %v983
    %v985 = vsel %vm982, %v984, %v980
    %v986 = vmul.f32 1.0, %v985
    %v987 = vtanh.pop %v927
    %v988 = vmul.f32 %v971, 0.0
    %v989 = vmul.f32 %v956, %v987
    %v990 = vadd.f32 %v988, %v989
    %v991 = vtanh.pop %v990
    %v992 = vmul.f32 %v986, %v991
    %v993 = vpack.c.bf16 %v992, %v992
    %s994 = scalar_lea.vmem [#allocation6], 512
    %v995 = vld [vmem:[%s994] sm:$0xff]
    %v996 = vld [vmem:[%s994 + $0x8] sm:$0xff]
    %v997 = vld [vmem:[%s994 + $0x10] sm:$0xff]
    %v998 = vld [vmem:[%s994 + $0x18] sm:$0xff]
    %v999 = vld [vmem:[%s994 + $0x20] sm:$0xff]
    %v1000 = vld [vmem:[%s994 + $0x28] sm:$0xff]
    %v1001 = vld [vmem:[%s994 + $0x30] sm:$0xff]
    %v1002 = vld [vmem:[%s994 + $0x38] sm:$0xff]
    %v1003 = vld [vmem:[%s994 + $0x40] sm:$0xff]
    %v1004 = vld [vmem:[%s994 + $0x48] sm:$0xff]
    %v1005 = vld [vmem:[%s994 + $0x50] sm:$0xff]
    %v1006 = vld [vmem:[%s994 + $0x58] sm:$0xff]
    %v1007 = vld [vmem:[%s994 + $0x60] sm:$0xff]
    %v1008 = vld [vmem:[%s994 + $0x68] sm:$0xff]
    %v1009 = vld [vmem:[%s994 + $0x70] sm:$0xff]
    %v1010 = vld [vmem:[%s994 + $0x78] sm:$0xff]
    %v1011 = vld [vmem:[%s994 + $0x80] sm:$0xff]
    %v1012 = vld [vmem:[%s994 + $0x88] sm:$0xff]
    %v1013 = vld [vmem:[%s994 + $0x90] sm:$0xff]
    %v1014 = vld [vmem:[%s994 + $0x98] sm:$0xff]
    %v1015 = vld [vmem:[%s994 + $0xa0] sm:$0xff]
    %v1016 = vld [vmem:[%s994 + $0xa8] sm:$0xff]
    %v1017 = vld [vmem:[%s994 + $0xb0] sm:$0xff]
    %v1018 = vld [vmem:[%s994 + $0xb8] sm:$0xff]
    %v1019 = vld [vmem:[%s994 + $0xc0] sm:$0xff]
    %v1020 = vld [vmem:[%s994 + $0xc8] sm:$0xff]
    %v1021 = vld [vmem:[%s994 + $0xd0] sm:$0xff]
    %v1022 = vld [vmem:[%s994 + $0xd8] sm:$0xff]
    %v1023 = vld [vmem:[%s994 + $0xe0] sm:$0xff]
    %v1024 = vld [vmem:[%s994 + $0xe8] sm:$0xff]
    %v1025 = vld [vmem:[%s994 + $0xf0] sm:$0xff]
    %v1026 = vld [vmem:[%s994 + $0xf8] sm:$0xff]
    %v1027 = vld [vmem:[%s994 + $0x100] sm:$0xff]
    %v1028 = vld [vmem:[%s994 + $0x108] sm:$0xff]
    %v1029 = vld [vmem:[%s994 + $0x110] sm:$0xff]
    %v1030 = vld [vmem:[%s994 + $0x118] sm:$0xff]
    %v1031 = vld [vmem:[%s994 + $0x120] sm:$0xff]
    %v1032 = vld [vmem:[%s994 + $0x128] sm:$0xff]
    %v1033 = vld [vmem:[%s994 + $0x130] sm:$0xff]
    %v1034 = vld [vmem:[%s994 + $0x138] sm:$0xff]
    %v1035 = vld [vmem:[%s994 + $0x140] sm:$0xff]
    %v1036 = vld [vmem:[%s994 + $0x148] sm:$0xff]
    %v1037 = vld [vmem:[%s994 + $0x150] sm:$0xff]
    %v1038 = vld [vmem:[%s994 + $0x158] sm:$0xff]
    %v1039 = vld [vmem:[%s994 + $0x160] sm:$0xff]
    %v1040 = vld [vmem:[%s994 + $0x168] sm:$0xff]
    %v1041 = vld [vmem:[%s994 + $0x170] sm:$0xff]
    %v1042 = vld [vmem:[%s994 + $0x178] sm:$0xff]
    %v1043 = vld [vmem:[%s994 + $0x180] sm:$0xff]
    %v1044 = vld [vmem:[%s994 + $0x188] sm:$0xff]
    %v1045 = vld [vmem:[%s994 + $0x190] sm:$0xff]
    %v1046 = vld [vmem:[%s994 + $0x198] sm:$0xff]
    %v1047 = vld [vmem:[%s994 + $0x1a0] sm:$0xff]
    %v1048 = vld [vmem:[%s994 + $0x1a8] sm:$0xff]
    %v1049 = vld [vmem:[%s994 + $0x1b0] sm:$0xff]
    %v1050 = vld [vmem:[%s994 + $0x1b8] sm:$0xff]
    %v1051 = vld [vmem:[%s994 + $0x1c0] sm:$0xff]
    %v1052 = vld [vmem:[%s994 + $0x1c8] sm:$0xff]
    %v1053 = vld [vmem:[%s994 + $0x1d0] sm:$0xff]
    %v1054 = vld [vmem:[%s994 + $0x1d8] sm:$0xff]
    %v1055 = vld [vmem:[%s994 + $0x1e0] sm:$0xff]
    %v1056 = vld [vmem:[%s994 + $0x1e8] sm:$0xff]
    %v1057 = vld [vmem:[%s994 + $0x1f0] sm:$0xff]
    %v1058 = vld [vmem:[%s994 + $0x1f8] sm:$0xff]
    %s1059 = scalar_lea.vmem [#allocation7], 64
    %v1060 = vld [vmem:[%s1059] sm:$0xff]
    %v1061 = vld [vmem:[%s1059 + $0x8] sm:$0xff]
    %v1062 = vld [vmem:[%s1059 + $0x10] sm:$0xff]
    %v1063 = vld [vmem:[%s1059 + $0x18] sm:$0xff]
    %v1128 = vunpack.c.l.b16 %v995
    %v1129 = vunpack.c.h.b16 %v995
    %v1130 = vunpack.c.l.b16 %v996
    %v1131 = vunpack.c.h.b16 %v996
    %v1132 = vunpack.c.l.b16 %v997
    %v1133 = vunpack.c.h.b16 %v997
    %v1134 = vunpack.c.l.b16 %v998
    %v1135 = vunpack.c.h.b16 %v998
    %v1136 = vunpack.c.l.b16 %v999
    %v1137 = vunpack.c.h.b16 %v999
    %v1138 = vunpack.c.l.b16 %v1000
    %v1139 = vunpack.c.h.b16 %v1000
    %v1140 = vunpack.c.l.b16 %v1001
    %v1141 = vunpack.c.h.b16 %v1001
    %v1142 = vunpack.c.l.b16 %v1002
    %v1143 = vunpack.c.h.b16 %v1002
    %v1144 = vunpack.c.l.b16 %v1003
    %v1145 = vunpack.c.h.b16 %v1003
    %v1146 = vunpack.c.l.b16 %v1004
    %v1147 = vunpack.c.h.b16 %v1004
    %v1148 = vunpack.c.l.b16 %v1005
    %v1149 = vunpack.c.h.b16 %v1005
    %v1150 = vunpack.c.l.b16 %v1006
    %v1151 = vunpack.c.h.b16 %v1006
    %v1152 = vunpack.c.l.b16 %v1007
    %v1153 = vunpack.c.h.b16 %v1007
    %v1154 = vunpack.c.l.b16 %v1008
    %v1155 = vunpack.c.h.b16 %v1008
    %v1156 = vunpack.c.l.b16 %v1009
    %v1157 = vunpack.c.h.b16 %v1009
    %v1158 = vunpack.c.l.b16 %v1010
    %v1159 = vunpack.c.h.b16 %v1010
    %v1160 = vunpack.c.l.b16 %v1011
    %v1161 = vunpack.c.h.b16 %v1011
    %v1162 = vunpack.c.l.b16 %v1012
    %v1163 = vunpack.c.h.b16 %v1012
    %v1164 = vunpack.c.l.b16 %v1013
    %v1165 = vunpack.c.h.b16 %v1013
    %v1166 = vunpack.c.l.b16 %v1014
    %v1167 = vunpack.c.h.b16 %v1014
    %v1168 = vunpack.c.l.b16 %v1015
    %v1169 = vunpack.c.h.b16 %v1015
    %v1170 = vunpack.c.l.b16 %v1016
    %v1171 = vunpack.c.h.b16 %v1016
    %v1172 = vunpack.c.l.b16 %v1017
    %v1173 = vunpack.c.h.b16 %v1017
    %v1174 = vunpack.c.l.b16 %v1018
    %v1175 = vunpack.c.h.b16 %v1018
    %v1176 = vunpack.c.l.b16 %v1019
    %v1177 = vunpack.c.h.b16 %v1019
    %v1178 = vunpack.c.l.b16 %v1020
    %v1179 = vunpack.c.h.b16 %v1020
    %v1180 = vunpack.c.l.b16 %v1021
    %v1181 = vunpack.c.h.b16 %v1021
    %v1182 = vunpack.c.l.b16 %v1022
    %v1183 = vunpack.c.h.b16 %v1022
    %v1184 = vunpack.c.l.b16 %v1023
    %v1185 = vunpack.c.h.b16 %v1023
    %v1186 = vunpack.c.l.b16 %v1024
    %v1187 = vunpack.c.h.b16 %v1024
    %v1188 = vunpack.c.l.b16 %v1025
    %v1189 = vunpack.c.h.b16 %v1025
    %v1190 = vunpack.c.l.b16 %v1026
    %v1191 = vunpack.c.h.b16 %v1026
    %v1192 = vunpack.c.l.b16 %v1027
    %v1193 = vunpack.c.h.b16 %v1027
    %v1194 = vunpack.c.l.b16 %v1028
    %v1195 = vunpack.c.h.b16 %v1028
    %v1196 = vunpack.c.l.b16 %v1029
    %v1197 = vunpack.c.h.b16 %v1029
    %v1198 = vunpack.c.l.b16 %v1030
    %v1199 = vunpack.c.h.b16 %v1030
    %v1200 = vunpack.c.l.b16 %v1031
    %v1201 = vunpack.c.h.b16 %v1031
    %v1202 = vunpack.c.l.b16 %v1032
    %v1203 = vunpack.c.h.b16 %v1032
    %v1204 = vunpack.c.l.b16 %v1033
    %v1205 = vunpack.c.h.b16 %v1033
    %v1206 = vunpack.c.l.b16 %v1034
    %v1207 = vunpack.c.h.b16 %v1034
    %v1208 = vunpack.c.l.b16 %v1035
    %v1209 = vunpack.c.h.b16 %v1035
    %v1210 = vunpack.c.l.b16 %v1036
    %v1211 = vunpack.c.h.b16 %v1036
    %v1212 = vunpack.c.l.b16 %v1037
    %v1213 = vunpack.c.h.b16 %v1037
    %v1214 = vunpack.c.l.b16 %v1038
    %v1215 = vunpack.c.h.b16 %v1038
    %v1216 = vunpack.c.l.b16 %v1039
    %v1217 = vunpack.c.h.b16 %v1039
    %v1218 = vunpack.c.l.b16 %v1040
    %v1219 = vunpack.c.h.b16 %v1040
    %v1220 = vunpack.c.l.b16 %v1041
    %v1221 = vunpack.c.h.b16 %v1041
    %v1222 = vunpack.c.l.b16 %v1042
    %v1223 = vunpack.c.h.b16 %v1042
    %v1224 = vunpack.c.l.b16 %v1043
    %v1225 = vunpack.c.h.b16 %v1043
    %v1226 = vunpack.c.l.b16 %v1044
    %v1227 = vunpack.c.h.b16 %v1044
    %v1228 = vunpack.c.l.b16 %v1045
    %v1229 = vunpack.c.h.b16 %v1045
    %v1230 = vunpack.c.l.b16 %v1046
    %v1231 = vunpack.c.h.b16 %v1046
    %v1232 = vunpack.c.l.b16 %v1047
    %v1233 = vunpack.c.h.b16 %v1047
    %v1234 = vunpack.c.l.b16 %v1048
    %v1235 = vunpack.c.h.b16 %v1048
    %v1236 = vunpack.c.l.b16 %v1049
    %v1237 = vunpack.c.h.b16 %v1049
    %v1238 = vunpack.c.l.b16 %v1050
    %v1239 = vunpack.c.h.b16 %v1050
    %v1240 = vunpack.c.l.b16 %v1051
    %v1241 = vunpack.c.h.b16 %v1051
    %v1242 = vunpack.c.l.b16 %v1052
    %v1243 = vunpack.c.h.b16 %v1052
    %v1244 = vunpack.c.l.b16 %v1053
    %v1245 = vunpack.c.h.b16 %v1053
    %v1246 = vunpack.c.l.b16 %v1054
    %v1247 = vunpack.c.h.b16 %v1054
    %v1248 = vunpack.c.l.b16 %v1055
    %v1249 = vunpack.c.h.b16 %v1055
    %v1250 = vunpack.c.l.b16 %v1056
    %v1251 = vunpack.c.h.b16 %v1056
    %v1252 = vunpack.c.l.b16 %v1057
    %v1253 = vunpack.c.h.b16 %v1057
    %v1254 = vunpack.c.l.b16 %v1058
    %v1255 = vunpack.c.h.b16 %v1058
    %v1256 = vpack.c.b16 %v1132, %v1128
    %v1257 = vpack.c.b16 %v1133, %v1129
    %v1258 = vpack.c.b16 %v1134, %v1130
    %v1259 = vpack.c.b16 %v1135, %v1131
    %v1260 = vpack.c.b16 %v1140, %v1136
    %v1261 = vpack.c.b16 %v1141, %v1137
    %v1262 = vpack.c.b16 %v1142, %v1138
    %v1263 = vpack.c.b16 %v1143, %v1139
    %v1264 = vpack.c.b16 %v1148, %v1144
    %v1265 = vpack.c.b16 %v1149, %v1145
    %v1266 = vpack.c.b16 %v1150, %v1146
    %v1267 = vpack.c.b16 %v1151, %v1147
    %v1268 = vpack.c.b16 %v1156, %v1152
    %v1269 = vpack.c.b16 %v1157, %v1153
    %v1270 = vpack.c.b16 %v1158, %v1154
    %v1271 = vpack.c.b16 %v1159, %v1155
    %v1272 = vpack.c.b16 %v1164, %v1160
    %v1273 = vpack.c.b16 %v1165, %v1161
    %v1274 = vpack.c.b16 %v1166, %v1162
    %v1275 = vpack.c.b16 %v1167, %v1163
    %v1276 = vpack.c.b16 %v1172, %v1168
    %v1277 = vpack.c.b16 %v1173, %v1169
    %v1278 = vpack.c.b16 %v1174, %v1170
    %v1279 = vpack.c.b16 %v1175, %v1171
    %v1280 = vpack.c.b16 %v1180, %v1176
    %v1281 = vpack.c.b16 %v1181, %v1177
    %v1282 = vpack.c.b16 %v1182, %v1178
    %v1283 = vpack.c.b16 %v1183, %v1179
    %v1284 = vpack.c.b16 %v1188, %v1184
    %v1285 = vpack.c.b16 %v1189, %v1185
    %v1286 = vpack.c.b16 %v1190, %v1186
    %v1287 = vpack.c.b16 %v1191, %v1187
    %v1288 = vpack.c.b16 %v1196, %v1192
    %v1289 = vpack.c.b16 %v1197, %v1193
    %v1290 = vpack.c.b16 %v1198, %v1194
    %v1291 = vpack.c.b16 %v1199, %v1195
    %v1292 = vpack.c.b16 %v1204, %v1200
    %v1293 = vpack.c.b16 %v1205, %v1201
    %v1294 = vpack.c.b16 %v1206, %v1202
    %v1295 = vpack.c.b16 %v1207, %v1203
    %v1296 = vpack.c.b16 %v1212, %v1208
    %v1297 = vpack.c.b16 %v1213, %v1209
    %v1298 = vpack.c.b16 %v1214, %v1210
    %v1299 = vpack.c.b16 %v1215, %v1211
    %v1300 = vpack.c.b16 %v1220, %v1216
    %v1301 = vpack.c.b16 %v1221, %v1217
    %v1302 = vpack.c.b16 %v1222, %v1218
    %v1303 = vpack.c.b16 %v1223, %v1219
    %v1304 = vpack.c.b16 %v1228, %v1224
    %v1305 = vpack.c.b16 %v1229, %v1225
    %v1306 = vpack.c.b16 %v1230, %v1226
    %v1307 = vpack.c.b16 %v1231, %v1227
    %v1308 = vpack.c.b16 %v1236, %v1232
    %v1309 = vpack.c.b16 %v1237, %v1233
    %v1310 = vpack.c.b16 %v1238, %v1234
    %v1311 = vpack.c.b16 %v1239, %v1235
    %v1312 = vpack.c.b16 %v1244, %v1240
    %v1313 = vpack.c.b16 %v1245, %v1241
    %v1314 = vpack.c.b16 %v1246, %v1242
    %v1315 = vpack.c.b16 %v1247, %v1243
    %v1316 = vpack.c.b16 %v1252, %v1248
    %v1317 = vpack.c.b16 %v1253, %v1249
    %v1318 = vpack.c.b16 %v1254, %v1250
    %v1319 = vpack.c.b16 %v1255, %v1251
    %1384 = vmatpush.bf16.msra.mxu0 %v1284
    %1385 = vmatpush.bf16.msra.mxu0 %v1280
    %1386 = vmatpush.bf16.msra.mxu0 %v1276
    %1387 = vmatpush.bf16.msra.mxu0 %v1272
    %1388 = vmatpush.bf16.msra.mxu0 %v1268
    %1389 = vmatpush.bf16.msra.mxu0 %v1264
    %1390 = vmatpush.bf16.msra.mxu0 %v1260
    %1391 = vmatpush.bf16.msra.mxu0 %v1256
    %1392 = vmatmul.bf16.gmra.mxu0 %v993
    %v1393 = vpop.f32.mrf.mxu0
    %v1394 = vadd.f32 %v1060, %v1393
    %v1395 = vpop.f32.mrf.mxu0
    %1396 = vdwg.mxu0
    %1397 = vmatpush.bf16.msra.mxu0 %v1316
    %1398 = vmatpush.bf16.msra.mxu0 %v1312
    %1399 = vmatpush.bf16.msra.mxu0 %v1308
    %1400 = vmatpush.bf16.msra.mxu0 %v1304
    %1401 = vmatpush.bf16.msra.mxu0 %v1300
    %1402 = vmatpush.bf16.msra.mxu0 %v1296
    %1403 = vmatpush.bf16.msra.mxu0 %v1292
    %1404 = vmatpush.bf16.msra.mxu0 %v1288
    %1405 = vmatmul.bf16.gmra.mxu0 0
    %v1406 = vpop.f32.mrf.mxu0
    %v1407 = vadd.f32 %v1394, %v1406
    %v1408 = vpop.f32.mrf.mxu0
    %1409 = vdwg.mxu0
    %1410 = vmatpush.bf16.msra.mxu0 %v1285
    %1411 = vmatpush.bf16.msra.mxu0 %v1281
    %1412 = vmatpush.bf16.msra.mxu0 %v1277
    %1413 = vmatpush.bf16.msra.mxu0 %v1273
    %1414 = vmatpush.bf16.msra.mxu0 %v1269
    %1415 = vmatpush.bf16.msra.mxu0 %v1265
    %1416 = vmatpush.bf16.msra.mxu0 %v1261
    %1417 = vmatpush.bf16.msra.mxu0 %v1257
    %1418 = vmatmul.bf16.gmra.mxu0 %v993
    %v1419 = vpop.f32.mrf.mxu0
    %v1420 = vadd.f32 %v1061, %v1419
    %v1421 = vpop.f32.mrf.mxu0
    %1422 = vdwg.mxu0
    %1423 = vmatpush.bf16.msra.mxu0 %v1317
    %1424 = vmatpush.bf16.msra.mxu0 %v1313
    %1425 = vmatpush.bf16.msra.mxu0 %v1309
    %1426 = vmatpush.bf16.msra.mxu0 %v1305
    %1427 = vmatpush.bf16.msra.mxu0 %v1301
    %1428 = vmatpush.bf16.msra.mxu0 %v1297
    %1429 = vmatpush.bf16.msra.mxu0 %v1293
    %1430 = vmatpush.bf16.msra.mxu0 %v1289
    %1431 = vmatmul.bf16.gmra.mxu0 0
    %v1432 = vpop.f32.mrf.mxu0
    %v1433 = vadd.f32 %v1420, %v1432
    %v1434 = vpop.f32.mrf.mxu0
    %1435 = vdwg.mxu0
    %1436 = vmatpush.bf16.msra.mxu0 %v1286
    %1437 = vmatpush.bf16.msra.mxu0 %v1282
    %1438 = vmatpush.bf16.msra.mxu0 %v1278
    %1439 = vmatpush.bf16.msra.mxu0 %v1274
    %1440 = vmatpush.bf16.msra.mxu0 %v1270
    %1441 = vmatpush.bf16.msra.mxu0 %v1266
    %1442 = vmatpush.bf16.msra.mxu0 %v1262
    %1443 = vmatpush.bf16.msra.mxu0 %v1258
    %1444 = vmatmul.bf16.gmra.mxu0 %v993
    %v1445 = vpop.f32.mrf.mxu0
    %v1446 = vadd.f32 %v1062, %v1445
    %v1447 = vpop.f32.mrf.mxu0
    %1448 = vdwg.mxu0
    %1449 = vmatpush.bf16.msra.mxu0 %v1318
    %1450 = vmatpush.bf16.msra.mxu0 %v1314
    %1451 = vmatpush.bf16.msra.mxu0 %v1310
    %1452 = vmatpush.bf16.msra.mxu0 %v1306
    %1453 = vmatpush.bf16.msra.mxu0 %v1302
    %1454 = vmatpush.bf16.msra.mxu0 %v1298
    %1455 = vmatpush.bf16.msra.mxu0 %v1294
    %1456 = vmatpush.bf16.msra.mxu0 %v1290
    %1457 = vmatmul.bf16.gmra.mxu0 0
    %v1458 = vpop.f32.mrf.mxu0
    %v1459 = vadd.f32 %v1446, %v1458
    %v1460 = vpop.f32.mrf.mxu0
    %1461 = vdwg.mxu0
    %1462 = vmatpush.bf16.msra.mxu0 %v1287
    %1463 = vmatpush.bf16.msra.mxu0 %v1283
    %1464 = vmatpush.bf16.msra.mxu0 %v1279
    %1465 = vmatpush.bf16.msra.mxu0 %v1275
    %1466 = vmatpush.bf16.msra.mxu0 %v1271
    %1467 = vmatpush.bf16.msra.mxu0 %v1267
    %1468 = vmatpush.bf16.msra.mxu0 %v1263
    %1469 = vmatpush.bf16.msra.mxu0 %v1259
    %1470 = vmatmul.bf16.gmra.mxu0 %v993
    %v1471 = vpop.f32.mrf.mxu0
    %v1472 = vadd.f32 %v1063, %v1471
    %v1473 = vpop.f32.mrf.mxu0
    %1474 = vdwg.mxu0
    %1475 = vmatpush.bf16.msra.mxu0 %v1319
    %1476 = vmatpush.bf16.msra.mxu0 %v1315
    %1477 = vmatpush.bf16.msra.mxu0 %v1311
    %1478 = vmatpush.bf16.msra.mxu0 %v1307
    %1479 = vmatpush.bf16.msra.mxu0 %v1303
    %1480 = vmatpush.bf16.msra.mxu0 %v1299
    %1481 = vmatpush.bf16.msra.mxu0 %v1295
    %1482 = vmatpush.bf16.msra.mxu0 %v1291
    %1483 = vmatmul.bf16.gmra.mxu0 0
    %v1484 = vpop.f32.mrf.mxu0
    %v1485 = vadd.f32 %v1472, %v1484
    %v1486 = vpop.f32.mrf.mxu0
    %1487 = vdwg.mxu0
    %v1488 = vxor.u32 %v1407, 2147483648
    %v1489 = vxor.u32 %v1433, 2147483648
    %v1490 = vxor.u32 %v1459, 2147483648
    %v1491 = vmul.f32 %v1488, 1.442695
    %v1492 = vpow.pop %v1491
    %v1493 = vmul.f32 %v1489, 1.442695
    %v1494 = vpow.pop %v1493
    %v1495 = vmul.f32 %v1490, 1.442695
    %v1496 = vpow.pop %v1495
    %v1497 = vadd.f32 %v1492, 1.0
    %v1498 = vadd.f32 %v1494, 1.0
    %v1499 = vadd.f32 %v1496, 1.0
    %v1500 = vrcp.pop %v1497
    %v1501 = vmul.f32 %v1497, %v1500
    %v1502 = vsub.f32 1.0, %v1501
    %v1503 = vmul.f32 %v1500, %v1502
    %v1504 = vadd.f32 %v1500, %v1503
    %vm1505 = vweird.f32 %v1497
    %vm1506 = vweird.f32 %v1500
    %vm1507 = vmor %vm1505, %vm1506
    %v1508 = vsel %vm1507, %v1500, %v1504
    %v1509 = vand.u32 2147483647, %v1497
    %vm1510 = vcmp.eq.f32.partialorder %v1509, 8.507059e+37
    %v1511 = vand.u32 %v1497, 2147483648
    %v1512 = vor.u32 1.1754944e-38, %v1511
    %v1513 = vsel %vm1510, %v1512, %v1508
    %v1514 = vmul.f32 1.0, %v1513
    %v1515 = vrcp.pop %v1498
    %v1516 = vmul.f32 %v1498, %v1515
    %v1517 = vsub.f32 1.0, %v1516
    %v1518 = vmul.f32 %v1515, %v1517
    %v1519 = vadd.f32 %v1515, %v1518
    %vm1520 = vweird.f32 %v1498
    %vm1521 = vweird.f32 %v1515
    %vm1522 = vmor %vm1520, %vm1521
    %v1523 = vsel %vm1522, %v1515, %v1519
    %v1524 = vand.u32 2147483647, %v1498
    %vm1525 = vcmp.eq.f32.partialorder %v1524, 8.507059e+37
    %v1526 = vand.u32 %v1498, 2147483648
    %v1527 = vor.u32 1.1754944e-38, %v1526
    %v1528 = vsel %vm1525, %v1527, %v1523
    %v1529 = vmul.f32 1.0, %v1528
    %v1530 = vrcp.pop %v1499
    %v1531 = vmul.f32 %v1499, %v1530
    %v1532 = vsub.f32 1.0, %v1531
    %v1533 = vmul.f32 %v1530, %v1532
    %v1534 = vadd.f32 %v1530, %v1533
    %vm1535 = vweird.f32 %v1499
    %vm1536 = vweird.f32 %v1530
    %vm1537 = vmor %vm1535, %vm1536
    %v1538 = vsel %vm1537, %v1530, %v1534
    %v1539 = vand.u32 2147483647, %v1499
    %vm1540 = vcmp.eq.f32.partialorder %v1539, 8.507059e+37
    %v1541 = vand.u32 %v1499, 2147483648
    %v1542 = vor.u32 1.1754944e-38, %v1541
    %v1543 = vsel %vm1540, %v1542, %v1538
    %v1544 = vmul.f32 1.0, %v1543
    %v1545 = vtanh.pop %v1485
    %v1546 = vmul.f32 %v1529, 0.0
    %v1547 = vmul.f32 %v1514, %v1545
    %v1548 = vadd.f32 %v1546, %v1547
    %v1549 = vtanh.pop %v1548
    %v1550 = vmul.f32 %v1544, %v1549
    %v1551 = vpack.c.bf16 %v1550, %v1550
    %1552 = vset.pattern.permute.xlu0 1
    %1553 = vperm.xlu0 %1552, %v103
    %v1554 = vpop.permute.xlu0 %1553
    %v1556 = vmul.f32 %v1554, %v104
    %v1557 = vmul.f32 %v1554, %v105
    %v1558 = vmul.f32 %v1554, %v106
    %v1559 = vmul.f32 %v1554, %v107
    %1560 = vmatpush.bf16.msra.mxu0 %v273
    %1561 = vmatpush.bf16.msra.mxu0 %v269
    %1562 = vmatpush.bf16.msra.mxu0 %v265
    %1563 = vmatpush.bf16.msra.mxu0 %v261
    %1564 = vmatpush.bf16.msra.mxu0 %v257
    %1565 = vmatpush.bf16.msra.mxu0 %v253
    %1566 = vmatpush.bf16.msra.mxu0 %v249
    %1567 = vmatpush.bf16.msra.mxu0 %v245
    %1568 = vmatmul.bf16.gmra.mxu0 %v436
    %v1569 = vpop.f32.mrf.mxu0
    %v1570 = vadd.f32 0.0, %v1569
    %v1571 = vpop.f32.mrf.mxu0
    %1572 = vdwg.mxu0
    %1573 = vmatpush.bf16.msra.mxu0 %v274
    %1574 = vmatpush.bf16.msra.mxu0 %v270
    %1575 = vmatpush.bf16.msra.mxu0 %v266
    %1576 = vmatpush.bf16.msra.mxu0 %v262
    %1577 = vmatpush.bf16.msra.mxu0 %v258
    %1578 = vmatpush.bf16.msra.mxu0 %v254
    %1579 = vmatpush.bf16.msra.mxu0 %v250
    %1580 = vmatpush.bf16.msra.mxu0 %v246
    %1581 = vmatmul.bf16.gmra.mxu0 %v436
    %v1582 = vpop.f32.mrf.mxu0
    %v1583 = vadd.f32 0.0, %v1582
    %v1584 = vpop.f32.mrf.mxu0
    %1585 = vdwg.mxu0
    %1586 = vmatpush.bf16.msra.mxu0 %v275
    %1587 = vmatpush.bf16.msra.mxu0 %v271
    %1588 = vmatpush.bf16.msra.mxu0 %v267
    %1589 = vmatpush.bf16.msra.mxu0 %v263
    %1590 = vmatpush.bf16.msra.mxu0 %v259
    %1591 = vmatpush.bf16.msra.mxu0 %v255
    %1592 = vmatpush.bf16.msra.mxu0 %v251
    %1593 = vmatpush.bf16.msra.mxu0 %v247
    %1594 = vmatmul.bf16.gmra.mxu0 %v436
    %v1595 = vpop.f32.mrf.mxu0
    %v1596 = vadd.f32 0.0, %v1595
    %v1597 = vpop.f32.mrf.mxu0
    %1598 = vdwg.mxu0
    %1599 = vmatpush.bf16.msra.mxu0 %v276
    %1600 = vmatpush.bf16.msra.mxu0 %v272
    %1601 = vmatpush.bf16.msra.mxu0 %v268
    %1602 = vmatpush.bf16.msra.mxu0 %v264
    %1603 = vmatpush.bf16.msra.mxu0 %v260
    %1604 = vmatpush.bf16.msra.mxu0 %v256
    %1605 = vmatpush.bf16.msra.mxu0 %v252
    %1606 = vmatpush.bf16.msra.mxu0 %v248
    %1607 = vmatmul.bf16.gmra.mxu0 %v436
    %v1608 = vpop.f32.mrf.mxu0
    %v1609 = vadd.f32 0.0, %v1608
    %v1610 = vpop.f32.mrf.mxu0
    %1611 = vdwg.mxu0
    %v1612 = vadd.f32 %v1556, %v1570
    %v1613 = vadd.f32 %v1557, %v1583
    %v1614 = vadd.f32 %v1558, %v1596
    %v1615 = vadd.f32 %v1559, %v1609
    %v1616 = vadd.f32 %v1612, %v365
    %v1617 = vadd.f32 %v1613, %v366
    %v1618 = vadd.f32 %v1614, %v367
    %v1619 = vadd.f32 %v1615, %v368
    %v1620 = vxor.u32 %v1616, 2147483648
    %v1621 = vxor.u32 %v1617, 2147483648
    %v1622 = vxor.u32 %v1618, 2147483648
    %v1623 = vmul.f32 %v1620, 1.442695
    %v1624 = vpow.pop %v1623
    %v1625 = vmul.f32 %v1621, 1.442695
    %v1626 = vpow.pop %v1625
    %v1627 = vmul.f32 %v1622, 1.442695
    %v1628 = vpow.pop %v1627
    %v1629 = vadd.f32 %v1624, 1.0
    %v1630 = vadd.f32 %v1626, 1.0
    %v1631 = vadd.f32 %v1628, 1.0
    %v1632 = vrcp.pop %v1629
    %v1633 = vmul.f32 %v1629, %v1632
    %v1634 = vsub.f32 1.0, %v1633
    %v1635 = vmul.f32 %v1632, %v1634
    %v1636 = vadd.f32 %v1632, %v1635
    %vm1637 = vweird.f32 %v1629
    %vm1638 = vweird.f32 %v1632
    %vm1639 = vmor %vm1637, %vm1638
    %v1640 = vsel %vm1639, %v1632, %v1636
    %v1641 = vand.u32 2147483647, %v1629
    %vm1642 = vcmp.eq.f32.partialorder %v1641, 8.507059e+37
    %v1643 = vand.u32 %v1629, 2147483648
    %v1644 = vor.u32 1.1754944e-38, %v1643
    %v1645 = vsel %vm1642, %v1644, %v1640
    %v1646 = vmul.f32 1.0, %v1645
    %v1647 = vrcp.pop %v1630
    %v1648 = vmul.f32 %v1630, %v1647
    %v1649 = vsub.f32 1.0, %v1648
    %v1650 = vmul.f32 %v1647, %v1649
    %v1651 = vadd.f32 %v1647, %v1650
    %vm1652 = vweird.f32 %v1630
    %vm1653 = vweird.f32 %v1647
    %vm1654 = vmor %vm1652, %vm1653
    %v1655 = vsel %vm1654, %v1647, %v1651
    %v1656 = vand.u32 2147483647, %v1630
    %vm1657 = vcmp.eq.f32.partialorder %v1656, 8.507059e+37
    %v1658 = vand.u32 %v1630, 2147483648
    %v1659 = vor.u32 1.1754944e-38, %v1658
    %v1660 = vsel %vm1657, %v1659, %v1655
    %v1661 = vmul.f32 1.0, %v1660
    %v1662 = vrcp.pop %v1631
    %v1663 = vmul.f32 %v1631, %v1662
    %v1664 = vsub.f32 1.0, %v1663
    %v1665 = vmul.f32 %v1662, %v1664
    %v1666 = vadd.f32 %v1662, %v1665
    %vm1667 = vweird.f32 %v1631
    %vm1668 = vweird.f32 %v1662
    %vm1669 = vmor %vm1667, %vm1668
    %v1670 = vsel %vm1669, %v1662, %v1666
    %v1671 = vand.u32 2147483647, %v1631
    %vm1672 = vcmp.eq.f32.partialorder %v1671, 8.507059e+37
    %v1673 = vand.u32 %v1631, 2147483648
    %v1674 = vor.u32 1.1754944e-38, %v1673
    %v1675 = vsel %vm1672, %v1674, %v1670
    %v1676 = vmul.f32 1.0, %v1675
    %v1677 = vtanh.pop %v1619
    %v1678 = vmul.f32 %v1661, %v433
    %v1679 = vmul.f32 %v1646, %v1677
    %v1680 = vadd.f32 %v1678, %v1679
    %v1681 = vtanh.pop %v1680
    %v1682 = vmul.f32 %v1676, %v1681
    %v1683 = vpack.c.bf16 %v1682, %v1682
    %1684 = vmatpush.bf16.msra.mxu0 %v726
    %1685 = vmatpush.bf16.msra.mxu0 %v722
    %1686 = vmatpush.bf16.msra.mxu0 %v718
    %1687 = vmatpush.bf16.msra.mxu0 %v714
    %1688 = vmatpush.bf16.msra.mxu0 %v710
    %1689 = vmatpush.bf16.msra.mxu0 %v706
    %1690 = vmatpush.bf16.msra.mxu0 %v702
    %1691 = vmatpush.bf16.msra.mxu0 %v698
    %1692 = vmatmul.bf16.gmra.mxu0 %v1683
    %v1693 = vpop.f32.mrf.mxu0
    %v1694 = vadd.f32 %v502, %v1693
    %v1695 = vpop.f32.mrf.mxu0
    %1696 = vdwg.mxu0
    %1697 = vmatpush.bf16.msra.mxu0 %v758
    %1698 = vmatpush.bf16.msra.mxu0 %v754
    %1699 = vmatpush.bf16.msra.mxu0 %v750
    %1700 = vmatpush.bf16.msra.mxu0 %v746
    %1701 = vmatpush.bf16.msra.mxu0 %v742
    %1702 = vmatpush.bf16.msra.mxu0 %v738
    %1703 = vmatpush.bf16.msra.mxu0 %v734
    %1704 = vmatpush.bf16.msra.mxu0 %v730
    %1705 = vmatmul.bf16.gmra.mxu0 %v993
    %v1706 = vpop.f32.mrf.mxu0
    %v1707 = vadd.f32 %v1694, %v1706
    %v1708 = vpop.f32.mrf.mxu0
    %1709 = vdwg.mxu0
    %1710 = vmatpush.bf16.msra.mxu0 %v727
    %1711 = vmatpush.bf16.msra.mxu0 %v723
    %1712 = vmatpush.bf16.msra.mxu0 %v719
    %1713 = vmatpush.bf16.msra.mxu0 %v715
    %1714 = vmatpush.bf16.msra.mxu0 %v711
    %1715 = vmatpush.bf16.msra.mxu0 %v707
    %1716 = vmatpush.bf16.msra.mxu0 %v703
    %1717 = vmatpush.bf16.msra.mxu0 %v699
    %1718 = vmatmul.bf16.gmra.mxu0 %v1683
    %v1719 = vpop.f32.mrf.mxu0
    %v1720 = vadd.f32 %v503, %v1719
    %v1721 = vpop.f32.mrf.mxu0
    %1722 = vdwg.mxu0
    %1723 = vmatpush.bf16.msra.mxu0 %v759
    %1724 = vmatpush.bf16.msra.mxu0 %v755
    %1725 = vmatpush.bf16.msra.mxu0 %v751
    %1726 = vmatpush.bf16.msra.mxu0 %v747
    %1727 = vmatpush.bf16.msra.mxu0 %v743
    %1728 = vmatpush.bf16.msra.mxu0 %v739
    %1729 = vmatpush.bf16.msra.mxu0 %v735
    %1730 = vmatpush.bf16.msra.mxu0 %v731
    %1731 = vmatmul.bf16.gmra.mxu0 %v993
    %v1732 = vpop.f32.mrf.mxu0
    %v1733 = vadd.f32 %v1720, %v1732
    %v1734 = vpop.f32.mrf.mxu0
    %1735 = vdwg.mxu0
    %1736 = vmatpush.bf16.msra.mxu0 %v728
    %1737 = vmatpush.bf16.msra.mxu0 %v724
    %1738 = vmatpush.bf16.msra.mxu0 %v720
    %1739 = vmatpush.bf16.msra.mxu0 %v716
    %1740 = vmatpush.bf16.msra.mxu0 %v712
    %1741 = vmatpush.bf16.msra.mxu0 %v708
    %1742 = vmatpush.bf16.msra.mxu0 %v704
    %1743 = vmatpush.bf16.msra.mxu0 %v700
    %1744 = vmatmul.bf16.gmra.mxu0 %v1683
    %v1745 = vpop.f32.mrf.mxu0
    %v1746 = vadd.f32 %v504, %v1745
    %v1747 = vpop.f32.mrf.mxu0
    %1748 = vdwg.mxu0
    %1749 = vmatpush.bf16.msra.mxu0 %v760
    %1750 = vmatpush.bf16.msra.mxu0 %v756
    %1751 = vmatpush.bf16.msra.mxu0 %v752
    %1752 = vmatpush.bf16.msra.mxu0 %v748
    %1753 = vmatpush.bf16.msra.mxu0 %v744
    %1754 = vmatpush.bf16.msra.mxu0 %v740
    %1755 = vmatpush.bf16.msra.mxu0 %v736
    %1756 = vmatpush.bf16.msra.mxu0 %v732
    %1757 = vmatmul.bf16.gmra.mxu0 %v993
    %v1758 = vpop.f32.mrf.mxu0
    %v1759 = vadd.f32 %v1746, %v1758
    %v1760 = vpop.f32.mrf.mxu0
    %1761 = vdwg.mxu0
    %1762 = vmatpush.bf16.msra.mxu0 %v729
    %1763 = vmatpush.bf16.msra.mxu0 %v725
    %1764 = vmatpush.bf16.msra.mxu0 %v721
    %1765 = vmatpush.bf16.msra.mxu0 %v717
    %1766 = vmatpush.bf16.msra.mxu0 %v713
    %1767 = vmatpush.bf16.msra.mxu0 %v709
    %1768 = vmatpush.bf16.msra.mxu0 %v705
    %1769 = vmatpush.bf16.msra.mxu0 %v701
    %1770 = vmatmul.bf16.gmra.mxu0 %v1683
    %v1771 = vpop.f32.mrf.mxu0
    %v1772 = vadd.f32 %v505, %v1771
    %v1773 = vpop.f32.mrf.mxu0
    %1774 = vdwg.mxu0
    %1775 = vmatpush.bf16.msra.mxu0 %v761
    %1776 = vmatpush.bf16.msra.mxu0 %v757
    %1777 = vmatpush.bf16.msra.mxu0 %v753
    %1778 = vmatpush.bf16.msra.mxu0 %v749
    %1779 = vmatpush.bf16.msra.mxu0 %v745
    %1780 = vmatpush.bf16.msra.mxu0 %v741
    %1781 = vmatpush.bf16.msra.mxu0 %v737
    %1782 = vmatpush.bf16.msra.mxu0 %v733
    %1783 = vmatmul.bf16.gmra.mxu0 %v993
    %v1784 = vpop.f32.mrf.mxu0
    %v1785 = vadd.f32 %v1772, %v1784
    %v1786 = vpop.f32.mrf.mxu0
    %1787 = vdwg.mxu0
    %v1788 = vxor.u32 %v1707, 2147483648
    %v1789 = vxor.u32 %v1733, 2147483648
    %v1790 = vxor.u32 %v1759, 2147483648
    %v1791 = vmul.f32 %v1788, 1.442695
    %v1792 = vpow.pop %v1791
    %v1793 = vmul.f32 %v1789, 1.442695
    %v1794 = vpow.pop %v1793
    %v1795 = vmul.f32 %v1790, 1.442695
    %v1796 = vpow.pop %v1795
    %v1797 = vadd.f32 %v1792, 1.0
    %v1798 = vadd.f32 %v1794, 1.0
    %v1799 = vadd.f32 %v1796, 1.0
    %v1800 = vrcp.pop %v1797
    %v1801 = vmul.f32 %v1797, %v1800
    %v1802 = vsub.f32 1.0, %v1801
    %v1803 = vmul.f32 %v1800, %v1802
    %v1804 = vadd.f32 %v1800, %v1803
    %vm1805 = vweird.f32 %v1797
    %vm1806 = vweird.f32 %v1800
    %vm1807 = vmor %vm1805, %vm1806
    %v1808 = vsel %vm1807, %v1800, %v1804
    %v1809 = vand.u32 2147483647, %v1797
    %vm1810 = vcmp.eq.f32.partialorder %v1809, 8.507059e+37
    %v1811 = vand.u32 %v1797, 2147483648
    %v1812 = vor.u32 1.1754944e-38, %v1811
    %v1813 = vsel %vm1810, %v1812, %v1808
    %v1814 = vmul.f32 1.0, %v1813
    %v1815 = vrcp.pop %v1798
    %v1816 = vmul.f32 %v1798, %v1815
    %v1817 = vsub.f32 1.0, %v1816
    %v1818 = vmul.f32 %v1815, %v1817
    %v1819 = vadd.f32 %v1815, %v1818
    %vm1820 = vweird.f32 %v1798
    %vm1821 = vweird.f32 %v1815
    %vm1822 = vmor %vm1820, %vm1821
    %v1823 = vsel %vm1822, %v1815, %v1819
    %v1824 = vand.u32 2147483647, %v1798
    %vm1825 = vcmp.eq.f32.partialorder %v1824, 8.507059e+37
    %v1826 = vand.u32 %v1798, 2147483648
    %v1827 = vor.u32 1.1754944e-38, %v1826
    %v1828 = vsel %vm1825, %v1827, %v1823
    %v1829 = vmul.f32 1.0, %v1828
    %v1830 = vrcp.pop %v1799
    %v1831 = vmul.f32 %v1799, %v1830
    %v1832 = vsub.f32 1.0, %v1831
    %v1833 = vmul.f32 %v1830, %v1832
    %v1834 = vadd.f32 %v1830, %v1833
    %vm1835 = vweird.f32 %v1799
    %vm1836 = vweird.f32 %v1830
    %vm1837 = vmor %vm1835, %vm1836
    %v1838 = vsel %vm1837, %v1830, %v1834
    %v1839 = vand.u32 2147483647, %v1799
    %vm1840 = vcmp.eq.f32.partialorder %v1839, 8.507059e+37
    %v1841 = vand.u32 %v1799, 2147483648
    %v1842 = vor.u32 1.1754944e-38, %v1841
    %v1843 = vsel %vm1840, %v1842, %v1838
    %v1844 = vmul.f32 1.0, %v1843
    %v1845 = vtanh.pop %v1785
    %v1846 = vmul.f32 %v1829, %v990
    %v1847 = vmul.f32 %v1814, %v1845
    %v1848 = vadd.f32 %v1846, %v1847
    %v1849 = vtanh.pop %v1848
    %v1850 = vmul.f32 %v1844, %v1849
    %v1851 = vpack.c.bf16 %v1850, %v1850
    %1852 = vmatpush.bf16.msra.mxu0 %v1284
    %1853 = vmatpush.bf16.msra.mxu0 %v1280
    %1854 = vmatpush.bf16.msra.mxu0 %v1276
    %1855 = vmatpush.bf16.msra.mxu0 %v1272
    %1856 = vmatpush.bf16.msra.mxu0 %v1268
    %1857 = vmatpush.bf16.msra.mxu0 %v1264
    %1858 = vmatpush.bf16.msra.mxu0 %v1260
    %1859 = vmatpush.bf16.msra.mxu0 %v1256
    %1860 = vmatmul.bf16.gmra.mxu0 %v1851
    %v1861 = vpop.f32.mrf.mxu0
    %v1862 = vadd.f32 %v1060, %v1861
    %v1863 = vpop.f32.mrf.mxu0
    %1864 = vdwg.mxu0
    %1865 = vmatpush.bf16.msra.mxu0 %v1316
    %1866 = vmatpush.bf16.msra.mxu0 %v1312
    %1867 = vmatpush.bf16.msra.mxu0 %v1308
    %1868 = vmatpush.bf16.msra.mxu0 %v1304
    %1869 = vmatpush.bf16.msra.mxu0 %v1300
    %1870 = vmatpush.bf16.msra.mxu0 %v1296
    %1871 = vmatpush.bf16.msra.mxu0 %v1292
    %1872 = vmatpush.bf16.msra.mxu0 %v1288
    %1873 = vmatmul.bf16.gmra.mxu0 %v1551
    %v1874 = vpop.f32.mrf.mxu0
    %v1875 = vadd.f32 %v1862, %v1874
    %v1876 = vpop.f32.mrf.mxu0
    %1877 = vdwg.mxu0
    %1878 = vmatpush.bf16.msra.mxu0 %v1285
    %1879 = vmatpush.bf16.msra.mxu0 %v1281
    %1880 = vmatpush.bf16.msra.mxu0 %v1277
    %1881 = vmatpush.bf16.msra.mxu0 %v1273
    %1882 = vmatpush.bf16.msra.mxu0 %v1269
    %1883 = vmatpush.bf16.msra.mxu0 %v1265
    %1884 = vmatpush.bf16.msra.mxu0 %v1261
    %1885 = vmatpush.bf16.msra.mxu0 %v1257
    %1886 = vmatmul.bf16.gmra.mxu0 %v1851
    %v1887 = vpop.f32.mrf.mxu0
    %v1888 = vadd.f32 %v1061, %v1887
    %v1889 = vpop.f32.mrf.mxu0
    %1890 = vdwg.mxu0
    %1891 = vmatpush.bf16.msra.mxu0 %v1317
    %1892 = vmatpush.bf16.msra.mxu0 %v1313
    %1893 = vmatpush.bf16.msra.mxu0 %v1309
    %1894 = vmatpush.bf16.msra.mxu0 %v1305
    %1895 = vmatpush.bf16.msra.mxu0 %v1301
    %1896 = vmatpush.bf16.msra.mxu0 %v1297
    %1897 = vmatpush.bf16.msra.mxu0 %v1293
    %1898 = vmatpush.bf16.msra.mxu0 %v1289
    %1899 = vmatmul.bf16.gmra.mxu0 %v1551
    %v1900 = vpop.f32.mrf.mxu0
    %v1901 = vadd.f32 %v1888, %v1900
    %v1902 = vpop.f32.mrf.mxu0
    %1903 = vdwg.mxu0
    %1904 = vmatpush.bf16.msra.mxu0 %v1286
    %1905 = vmatpush.bf16.msra.mxu0 %v1282
    %1906 = vmatpush.bf16.msra.mxu0 %v1278
    %1907 = vmatpush.bf16.msra.mxu0 %v1274
    %1908 = vmatpush.bf16.msra.mxu0 %v1270
    %1909 = vmatpush.bf16.msra.mxu0 %v1266
    %1910 = vmatpush.bf16.msra.mxu0 %v1262
    %1911 = vmatpush.bf16.msra.mxu0 %v1258
    %1912 = vmatmul.bf16.gmra.mxu0 %v1851
    %v1913 = vpop.f32.mrf.mxu0
    %v1914 = vadd.f32 %v1062, %v1913
    %v1915 = vpop.f32.mrf.mxu0
    %1916 = vdwg.mxu0
    %1917 = vmatpush.bf16.msra.mxu0 %v1318
    %1918 = vmatpush.bf16.msra.mxu0 %v1314
    %1919 = vmatpush.bf16.msra.mxu0 %v1310
    %1920 = vmatpush.bf16.msra.mxu0 %v1306
    %1921 = vmatpush.bf16.msra.mxu0 %v1302
    %1922 = vmatpush.bf16.msra.mxu0 %v1298
    %1923 = vmatpush.bf16.msra.mxu0 %v1294
    %1924 = vmatpush.bf16.msra.mxu0 %v1290
    %1925 = vmatmul.bf16.gmra.mxu0 %v1551
    %v1926 = vpop.f32.mrf.mxu0
    %v1927 = vadd.f32 %v1914, %v1926
    %v1928 = vpop.f32.mrf.mxu0
    %1929 = vdwg.mxu0
    %1930 = vmatpush.bf16.msra.mxu0 %v1287
    %1931 = vmatpush.bf16.msra.mxu0 %v1283
    %1932 = vmatpush.bf16.msra.mxu0 %v1279
    %1933 = vmatpush.bf16.msra.mxu0 %v1275
    %1934 = vmatpush.bf16.msra.mxu0 %v1271
    %1935 = vmatpush.bf16.msra.mxu0 %v1267
    %1936 = vmatpush.bf16.msra.mxu0 %v1263
    %1937 = vmatpush.bf16.msra.mxu0 %v1259
    %1938 = vmatmul.bf16.gmra.mxu0 %v1851
    %v1939 = vpop.f32.mrf.mxu0
    %v1940 = vadd.f32 %v1063, %v1939
    %v1941 = vpop.f32.mrf.mxu0
    %1942 = vdwg.mxu0
    %1943 = vmatpush.bf16.msra.mxu0 %v1319
    %1944 = vmatpush.bf16.msra.mxu0 %v1315
    %1945 = vmatpush.bf16.msra.mxu0 %v1311
    %1946 = vmatpush.bf16.msra.mxu0 %v1307
    %1947 = vmatpush.bf16.msra.mxu0 %v1303
    %1948 = vmatpush.bf16.msra.mxu0 %v1299
    %1949 = vmatpush.bf16.msra.mxu0 %v1295
    %1950 = vmatpush.bf16.msra.mxu0 %v1291
    %1951 = vmatmul.bf16.gmra.mxu0 %v1551
    %v1952 = vpop.f32.mrf.mxu0
    %v1953 = vadd.f32 %v1940, %v1952
    %v1954 = vpop.f32.mrf.mxu0
    %1955 = vdwg.mxu0
    %v1956 = vxor.u32 %v1875, 2147483648
    %v1957 = vxor.u32 %v1901, 2147483648
    %v1958 = vxor.u32 %v1927, 2147483648
    %v1959 = vmul.f32 %v1956, 1.442695
    %v1960 = vpow.pop %v1959
    %v1961 = vmul.f32 %v1957, 1.442695
    %v1962 = vpow.pop %v1961
    %v1963 = vmul.f32 %v1958, 1.442695
    %v1964 = vpow.pop %v1963
    %v1965 = vadd.f32 %v1960, 1.0
    %v1966 = vadd.f32 %v1962, 1.0
    %v1967 = vadd.f32 %v1964, 1.0
    %v1968 = vrcp.pop %v1965
    %v1969 = vmul.f32 %v1965, %v1968
    %v1970 = vsub.f32 1.0, %v1969
    %v1971 = vmul.f32 %v1968, %v1970
    %v1972 = vadd.f32 %v1968, %v1971
    %vm1973 = vweird.f32 %v1965
    %vm1974 = vweird.f32 %v1968
    %vm1975 = vmor %vm1973, %vm1974
    %v1976 = vsel %vm1975, %v1968, %v1972
    %v1977 = vand.u32 2147483647, %v1965
    %vm1978 = vcmp.eq.f32.partialorder %v1977, 8.507059e+37
    %v1979 = vand.u32 %v1965, 2147483648
    %v1980 = vor.u32 1.1754944e-38, %v1979
    %v1981 = vsel %vm1978, %v1980, %v1976
    %v1982 = vmul.f32 1.0, %v1981
    %v1983 = vrcp.pop %v1966
    %v1984 = vmul.f32 %v1966, %v1983
    %v1985 = vsub.f32 1.0, %v1984
    %v1986 = vmul.f32 %v1983, %v1985
    %v1987 = vadd.f32 %v1983, %v1986
    %vm1988 = vweird.f32 %v1966
    %vm1989 = vweird.f32 %v1983
    %vm1990 = vmor %vm1988, %vm1989
    %v1991 = vsel %vm1990, %v1983, %v1987
    %v1992 = vand.u32 2147483647, %v1966
    %vm1993 = vcmp.eq.f32.partialorder %v1992, 8.507059e+37
    %v1994 = vand.u32 %v1966, 2147483648
    %v1995 = vor.u32 1.1754944e-38, %v1994
    %v1996 = vsel %vm1993, %v1995, %v1991
    %v1997 = vmul.f32 1.0, %v1996
    %v1998 = vrcp.pop %v1967
    %v1999 = vmul.f32 %v1967, %v1998
    %v2000 = vsub.f32 1.0, %v1999
    %v2001 = vmul.f32 %v1998, %v2000
    %v2002 = vadd.f32 %v1998, %v2001
    %vm2003 = vweird.f32 %v1967
    %vm2004 = vweird.f32 %v1998
    %vm2005 = vmor %vm2003, %vm2004
    %v2006 = vsel %vm2005, %v1998, %v2002
    %v2007 = vand.u32 2147483647, %v1967
    %vm2008 = vcmp.eq.f32.partialorder %v2007, 8.507059e+37
    %v2009 = vand.u32 %v1967, 2147483648
    %v2010 = vor.u32 1.1754944e-38, %v2009
    %v2011 = vsel %vm2008, %v2010, %v2006
    %v2012 = vmul.f32 1.0, %v2011
    %v2013 = vtanh.pop %v1953
    %v2014 = vmul.f32 %v1997, %v1548
    %v2015 = vmul.f32 %v1982, %v2013
    %v2016 = vadd.f32 %v2014, %v2015
    %v2017 = vtanh.pop %v2016
    %v2018 = vmul.f32 %v2012, %v2017
    %v2019 = vpack.c.bf16 %v2018, %v2018
    %2020 = vset.pattern.permute.xlu0 2
    %2021 = vperm.xlu0 %2020, %v103
    %v2022 = vpop.permute.xlu0 %2021
    %v2024 = vmul.f32 %v2022, %v104
    %v2025 = vmul.f32 %v2022, %v105
    %v2026 = vmul.f32 %v2022, %v106
    %v2027 = vmul.f32 %v2022, %v107
    %2028 = vmatpush.bf16.msra.mxu0 %v273
    %2029 = vmatpush.bf16.msra.mxu0 %v269
    %2030 = vmatpush.bf16.msra.mxu0 %v265
    %2031 = vmatpush.bf16.msra.mxu0 %v261
    %2032 = vmatpush.bf16.msra.mxu0 %v257
    %2033 = vmatpush.bf16.msra.mxu0 %v253
    %2034 = vmatpush.bf16.msra.mxu0 %v249
    %2035 = vmatpush.bf16.msra.mxu0 %v245
    %2036 = vmatmul.bf16.gmra.mxu0 %v1683
    %v2037 = vpop.f32.mrf.mxu0
    %v2038 = vadd.f32 0.0, %v2037
    %v2039 = vpop.f32.mrf.mxu0
    %2040 = vdwg.mxu0
    %2041 = vmatpush.bf16.msra.mxu0 %v274
    %2042 = vmatpush.bf16.msra.mxu0 %v270
    %2043 = vmatpush.bf16.msra.mxu0 %v266
    %2044 = vmatpush.bf16.msra.mxu0 %v262
    %2045 = vmatpush.bf16.msra.mxu0 %v258
    %2046 = vmatpush.bf16.msra.mxu0 %v254
    %2047 = vmatpush.bf16.msra.mxu0 %v250
    %2048 = vmatpush.bf16.msra.mxu0 %v246
    %2049 = vmatmul.bf16.gmra.mxu0 %v1683
    %v2050 = vpop.f32.mrf.mxu0
    %v2051 = vadd.f32 0.0, %v2050
    %v2052 = vpop.f32.mrf.mxu0
    %2053 = vdwg.mxu0
    %2054 = vmatpush.bf16.msra.mxu0 %v275
    %2055 = vmatpush.bf16.msra.mxu0 %v271
    %2056 = vmatpush.bf16.msra.mxu0 %v267
    %2057 = vmatpush.bf16.msra.mxu0 %v263
    %2058 = vmatpush.bf16.msra.mxu0 %v259
    %2059 = vmatpush.bf16.msra.mxu0 %v255
    %2060 = vmatpush.bf16.msra.mxu0 %v251
    %2061 = vmatpush.bf16.msra.mxu0 %v247
    %2062 = vmatmul.bf16.gmra.mxu0 %v1683
    %v2063 = vpop.f32.mrf.mxu0
    %v2064 = vadd.f32 0.0, %v2063
    %v2065 = vpop.f32.mrf.mxu0
    %2066 = vdwg.mxu0
    %2067 = vmatpush.bf16.msra.mxu0 %v276
    %2068 = vmatpush.bf16.msra.mxu0 %v272
    %2069 = vmatpush.bf16.msra.mxu0 %v268
    %2070 = vmatpush.bf16.msra.mxu0 %v264
    %2071 = vmatpush.bf16.msra.mxu0 %v260
    %2072 = vmatpush.bf16.msra.mxu0 %v256
    %2073 = vmatpush.bf16.msra.mxu0 %v252
    %2074 = vmatpush.bf16.msra.mxu0 %v248
    %2075 = vmatmul.bf16.gmra.mxu0 %v1683
    %v2076 = vpop.f32.mrf.mxu0
    %v2077 = vadd.f32 0.0, %v2076
    %v2078 = vpop.f32.mrf.mxu0
    %2079 = vdwg.mxu0
    %v2080 = vadd.f32 %v2024, %v2038
    %v2081 = vadd.f32 %v2025, %v2051
    %v2082 = vadd.f32 %v2026, %v2064
    %v2083 = vadd.f32 %v2027, %v2077
    %v2084 = vadd.f32 %v2080, %v365
    %v2085 = vadd.f32 %v2081, %v366
    %v2086 = vadd.f32 %v2082, %v367
    %v2087 = vadd.f32 %v2083, %v368
    %v2088 = vxor.u32 %v2084, 2147483648
    %v2089 = vxor.u32 %v2085, 2147483648
    %v2090 = vxor.u32 %v2086, 2147483648
    %v2091 = vmul.f32 %v2088, 1.442695
    %v2092 = vpow.pop %v2091
    %v2093 = vmul.f32 %v2089, 1.442695
    %v2094 = vpow.pop %v2093
    %v2095 = vmul.f32 %v2090, 1.442695
    %v2096 = vpow.pop %v2095
    %v2097 = vadd.f32 %v2092, 1.0
    %v2098 = vadd.f32 %v2094, 1.0
    %v2099 = vadd.f32 %v2096, 1.0
    %v2100 = vrcp.pop %v2097
    %v2101 = vmul.f32 %v2097, %v2100
    %v2102 = vsub.f32 1.0, %v2101
    %v2103 = vmul.f32 %v2100, %v2102
    %v2104 = vadd.f32 %v2100, %v2103
    %vm2105 = vweird.f32 %v2097
    %vm2106 = vweird.f32 %v2100
    %vm2107 = vmor %vm2105, %vm2106
    %v2108 = vsel %vm2107, %v2100, %v2104
    %v2109 = vand.u32 2147483647, %v2097
    %vm2110 = vcmp.eq.f32.partialorder %v2109, 8.507059e+37
    %v2111 = vand.u32 %v2097, 2147483648
    %v2112 = vor.u32 1.1754944e-38, %v2111
    %v2113 = vsel %vm2110, %v2112, %v2108
    %v2114 = vmul.f32 1.0, %v2113
    %v2115 = vrcp.pop %v2098
    %v2116 = vmul.f32 %v2098, %v2115
    %v2117 = vsub.f32 1.0, %v2116
    %v2118 = vmul.f32 %v2115, %v2117
    %v2119 = vadd.f32 %v2115, %v2118
    %vm2120 = vweird.f32 %v2098
    %vm2121 = vweird.f32 %v2115
    %vm2122 = vmor %vm2120, %vm2121
    %v2123 = vsel %vm2122, %v2115, %v2119
    %v2124 = vand.u32 2147483647, %v2098
    %vm2125 = vcmp.eq.f32.partialorder %v2124, 8.507059e+37
    %v2126 = vand.u32 %v2098, 2147483648
    %v2127 = vor.u32 1.1754944e-38, %v2126
    %v2128 = vsel %vm2125, %v2127, %v2123
    %v2129 = vmul.f32 1.0, %v2128
    %v2130 = vrcp.pop %v2099
    %v2131 = vmul.f32 %v2099, %v2130
    %v2132 = vsub.f32 1.0, %v2131
    %v2133 = vmul.f32 %v2130, %v2132
    %v2134 = vadd.f32 %v2130, %v2133
    %vm2135 = vweird.f32 %v2099
    %vm2136 = vweird.f32 %v2130
    %vm2137 = vmor %vm2135, %vm2136
    %v2138 = vsel %vm2137, %v2130, %v2134
    %v2139 = vand.u32 2147483647, %v2099
    %vm2140 = vcmp.eq.f32.partialorder %v2139, 8.507059e+37
    %v2141 = vand.u32 %v2099, 2147483648
    %v2142 = vor.u32 1.1754944e-38, %v2141
    %v2143 = vsel %vm2140, %v2142, %v2138
    %v2144 = vmul.f32 1.0, %v2143
    %v2145 = vtanh.pop %v2087
    %v2146 = vmul.f32 %v2129, %v1680
    %v2147 = vmul.f32 %v2114, %v2145
    %v2148 = vadd.f32 %v2146, %v2147
    %v2149 = vtanh.pop %v2148
    %v2150 = vmul.f32 %v2144, %v2149
    %v2151 = vpack.c.bf16 %v2150, %v2150
    %2152 = vmatpush.bf16.msra.mxu0 %v726
    %2153 = vmatpush.bf16.msra.mxu0 %v722
    %2154 = vmatpush.bf16.msra.mxu0 %v718
    %2155 = vmatpush.bf16.msra.mxu0 %v714
    %2156 = vmatpush.bf16.msra.mxu0 %v710
    %2157 = vmatpush.bf16.msra.mxu0 %v706
    %2158 = vmatpush.bf16.msra.mxu0 %v702
    %2159 = vmatpush.bf16.msra.mxu0 %v698
    %2160 = vmatmul.bf16.gmra.mxu0 %v2151
    %v2161 = vpop.f32.mrf.mxu0
    %v2162 = vadd.f32 %v502, %v2161
    %v2163 = vpop.f32.mrf.mxu0
    %2164 = vdwg.mxu0
    %2165 = vmatpush.bf16.msra.mxu0 %v758
    %2166 = vmatpush.bf16.msra.mxu0 %v754
    %2167 = vmatpush.bf16.msra.mxu0 %v750
    %2168 = vmatpush.bf16.msra.mxu0 %v746
    %2169 = vmatpush.bf16.msra.mxu0 %v742
    %2170 = vmatpush.bf16.msra.mxu0 %v738
    %2171 = vmatpush.bf16.msra.mxu0 %v734
    %2172 = vmatpush.bf16.msra.mxu0 %v730
    %2173 = vmatmul.bf16.gmra.mxu0 %v1851
    %v2174 = vpop.f32.mrf.mxu0
    %v2175 = vadd.f32 %v2162, %v2174
    %v2176 = vpop.f32.mrf.mxu0
    %2177 = vdwg.mxu0
    %2178 = vmatpush.bf16.msra.mxu0 %v727
    %2179 = vmatpush.bf16.msra.mxu0 %v723
    %2180 = vmatpush.bf16.msra.mxu0 %v719
    %2181 = vmatpush.bf16.msra.mxu0 %v715
    %2182 = vmatpush.bf16.msra.mxu0 %v711
    %2183 = vmatpush.bf16.msra.mxu0 %v707
    %2184 = vmatpush.bf16.msra.mxu0 %v703
    %2185 = vmatpush.bf16.msra.mxu0 %v699
    %2186 = vmatmul.bf16.gmra.mxu0 %v2151
    %v2187 = vpop.f32.mrf.mxu0
    %v2188 = vadd.f32 %v503, %v2187
    %v2189 = vpop.f32.mrf.mxu0
    %2190 = vdwg.mxu0
    %2191 = vmatpush.bf16.msra.mxu0 %v759
    %2192 = vmatpush.bf16.msra.mxu0 %v755
    %2193 = vmatpush.bf16.msra.mxu0 %v751
    %2194 = vmatpush.bf16.msra.mxu0 %v747
    %2195 = vmatpush.bf16.msra.mxu0 %v743
    %2196 = vmatpush.bf16.msra.mxu0 %v739
    %2197 = vmatpush.bf16.msra.mxu0 %v735
    %2198 = vmatpush.bf16.msra.mxu0 %v731
    %2199 = vmatmul.bf16.gmra.mxu0 %v1851
    %v2200 = vpop.f32.mrf.mxu0
    %v2201 = vadd.f32 %v2188, %v2200
    %v2202 = vpop.f32.mrf.mxu0
    %2203 = vdwg.mxu0
    %2204 = vmatpush.bf16.msra.mxu0 %v728
    %2205 = vmatpush.bf16.msra.mxu0 %v724
    %2206 = vmatpush.bf16.msra.mxu0 %v720
    %2207 = vmatpush.bf16.msra.mxu0 %v716
    %2208 = vmatpush.bf16.msra.mxu0 %v712
    %2209 = vmatpush.bf16.msra.mxu0 %v708
    %2210 = vmatpush.bf16.msra.mxu0 %v704
    %2211 = vmatpush.bf16.msra.mxu0 %v700
    %2212 = vmatmul.bf16.gmra.mxu0 %v2151
    %v2213 = vpop.f32.mrf.mxu0
    %v2214 = vadd.f32 %v504, %v2213
    %v2215 = vpop.f32.mrf.mxu0
    %2216 = vdwg.mxu0
    %2217 = vmatpush.bf16.msra.mxu0 %v760
    %2218 = vmatpush.bf16.msra.mxu0 %v756
    %2219 = vmatpush.bf16.msra.mxu0 %v752
    %2220 = vmatpush.bf16.msra.mxu0 %v748
    %2221 = vmatpush.bf16.msra.mxu0 %v744
    %2222 = vmatpush.bf16.msra.mxu0 %v740
    %2223 = vmatpush.bf16.msra.mxu0 %v736
    %2224 = vmatpush.bf16.msra.mxu0 %v732
    %2225 = vmatmul.bf16.gmra.mxu0 %v1851
    %v2226 = vpop.f32.mrf.mxu0
    %v2227 = vadd.f32 %v2214, %v2226
    %v2228 = vpop.f32.mrf.mxu0
    %2229 = vdwg.mxu0
    %2230 = vmatpush.bf16.msra.mxu0 %v729
    %2231 = vmatpush.bf16.msra.mxu0 %v725
    %2232 = vmatpush.bf16.msra.mxu0 %v721
    %2233 = vmatpush.bf16.msra.mxu0 %v717
    %2234 = vmatpush.bf16.msra.mxu0 %v713
    %2235 = vmatpush.bf16.msra.mxu0 %v709
    %2236 = vmatpush.bf16.msra.mxu0 %v705
    %2237 = vmatpush.bf16.msra.mxu0 %v701
    %2238 = vmatmul.bf16.gmra.mxu0 %v2151
    %v2239 = vpop.f32.mrf.mxu0
    %v2240 = vadd.f32 %v505, %v2239
    %v2241 = vpop.f32.mrf.mxu0
    %2242 = vdwg.mxu0
    %2243 = vmatpush.bf16.msra.mxu0 %v761
    %2244 = vmatpush.bf16.msra.mxu0 %v757
    %2245 = vmatpush.bf16.msra.mxu0 %v753
    %2246 = vmatpush.bf16.msra.mxu0 %v749
    %2247 = vmatpush.bf16.msra.mxu0 %v745
    %2248 = vmatpush.bf16.msra.mxu0 %v741
    %2249 = vmatpush.bf16.msra.mxu0 %v737
    %2250 = vmatpush.bf16.msra.mxu0 %v733
    %2251 = vmatmul.bf16.gmra.mxu0 %v1851
    %v2252 = vpop.f32.mrf.mxu0
    %v2253 = vadd.f32 %v2240, %v2252
    %v2254 = vpop.f32.mrf.mxu0
    %2255 = vdwg.mxu0
    %v2256 = vxor.u32 %v2175, 2147483648
    %v2257 = vxor.u32 %v2201, 2147483648
    %v2258 = vxor.u32 %v2227, 2147483648
    %v2259 = vmul.f32 %v2256, 1.442695
    %v2260 = vpow.pop %v2259
    %v2261 = vmul.f32 %v2257, 1.442695
    %v2262 = vpow.pop %v2261
    %v2263 = vmul.f32 %v2258, 1.442695
    %v2264 = vpow.pop %v2263
    %v2265 = vadd.f32 %v2260, 1.0
    %v2266 = vadd.f32 %v2262, 1.0
    %v2267 = vadd.f32 %v2264, 1.0
    %v2268 = vrcp.pop %v2265
    %v2269 = vmul.f32 %v2265, %v2268
    %v2270 = vsub.f32 1.0, %v2269
    %v2271 = vmul.f32 %v2268, %v2270
    %v2272 = vadd.f32 %v2268, %v2271
    %vm2273 = vweird.f32 %v2265
    %vm2274 = vweird.f32 %v2268
    %vm2275 = vmor %vm2273, %vm2274
    %v2276 = vsel %vm2275, %v2268, %v2272
    %v2277 = vand.u32 2147483647, %v2265
    %vm2278 = vcmp.eq.f32.partialorder %v2277, 8.507059e+37
    %v2279 = vand.u32 %v2265, 2147483648
    %v2280 = vor.u32 1.1754944e-38, %v2279
    %v2281 = vsel %vm2278, %v2280, %v2276
    %v2282 = vmul.f32 1.0, %v2281
    %v2283 = vrcp.pop %v2266
    %v2284 = vmul.f32 %v2266, %v2283
    %v2285 = vsub.f32 1.0, %v2284
    %v2286 = vmul.f32 %v2283, %v2285
    %v2287 = vadd.f32 %v2283, %v2286
    %vm2288 = vweird.f32 %v2266
    %vm2289 = vweird.f32 %v2283
    %vm2290 = vmor %vm2288, %vm2289
    %v2291 = vsel %vm2290, %v2283, %v2287
    %v2292 = vand.u32 2147483647, %v2266
    %vm2293 = vcmp.eq.f32.partialorder %v2292, 8.507059e+37
    %v2294 = vand.u32 %v2266, 2147483648
    %v2295 = vor.u32 1.1754944e-38, %v2294
    %v2296 = vsel %vm2293, %v2295, %v2291
    %v2297 = vmul.f32 1.0, %v2296
    %v2298 = vrcp.pop %v2267
    %v2299 = vmul.f32 %v2267, %v2298
    %v2300 = vsub.f32 1.0, %v2299
    %v2301 = vmul.f32 %v2298, %v2300
    %v2302 = vadd.f32 %v2298, %v2301
    %vm2303 = vweird.f32 %v2267
    %vm2304 = vweird.f32 %v2298
    %vm2305 = vmor %vm2303, %vm2304
    %v2306 = vsel %vm2305, %v2298, %v2302
    %v2307 = vand.u32 2147483647, %v2267
    %vm2308 = vcmp.eq.f32.partialorder %v2307, 8.507059e+37
    %v2309 = vand.u32 %v2267, 2147483648
    %v2310 = vor.u32 1.1754944e-38, %v2309
    %v2311 = vsel %vm2308, %v2310, %v2306
    %v2312 = vmul.f32 1.0, %v2311
    %v2313 = vtanh.pop %v2253
    %v2314 = vmul.f32 %v2297, %v1848
    %v2315 = vmul.f32 %v2282, %v2313
    %v2316 = vadd.f32 %v2314, %v2315
    %v2317 = vtanh.pop %v2316
    %v2318 = vmul.f32 %v2312, %v2317
    %v2319 = vpack.c.bf16 %v2318, %v2318
    %2320 = vmatpush.bf16.msra.mxu0 %v1284
    %2321 = vmatpush.bf16.msra.mxu0 %v1280
    %2322 = vmatpush.bf16.msra.mxu0 %v1276
    %2323 = vmatpush.bf16.msra.mxu0 %v1272
    %2324 = vmatpush.bf16.msra.mxu0 %v1268
    %2325 = vmatpush.bf16.msra.mxu0 %v1264
    %2326 = vmatpush.bf16.msra.mxu0 %v1260
    %2327 = vmatpush.bf16.msra.mxu0 %v1256
    %2328 = vmatmul.bf16.gmra.mxu0 %v2319
    %v2329 = vpop.f32.mrf.mxu0
    %v2330 = vadd.f32 %v1060, %v2329
    %v2331 = vpop.f32.mrf.mxu0
    %2332 = vdwg.mxu0
    %2333 = vmatpush.bf16.msra.mxu0 %v1316
    %2334 = vmatpush.bf16.msra.mxu0 %v1312
    %2335 = vmatpush.bf16.msra.mxu0 %v1308
    %2336 = vmatpush.bf16.msra.mxu0 %v1304
    %2337 = vmatpush.bf16.msra.mxu0 %v1300
    %2338 = vmatpush.bf16.msra.mxu0 %v1296
    %2339 = vmatpush.bf16.msra.mxu0 %v1292
    %2340 = vmatpush.bf16.msra.mxu0 %v1288
    %2341 = vmatmul.bf16.gmra.mxu0 %v2019
    %v2342 = vpop.f32.mrf.mxu0
    %v2343 = vadd.f32 %v2330, %v2342
    %v2344 = vpop.f32.mrf.mxu0
    %2345 = vdwg.mxu0
    %2346 = vmatpush.bf16.msra.mxu0 %v1285
    %2347 = vmatpush.bf16.msra.mxu0 %v1281
    %2348 = vmatpush.bf16.msra.mxu0 %v1277
    %2349 = vmatpush.bf16.msra.mxu0 %v1273
    %2350 = vmatpush.bf16.msra.mxu0 %v1269
    %2351 = vmatpush.bf16.msra.mxu0 %v1265
    %2352 = vmatpush.bf16.msra.mxu0 %v1261
    %2353 = vmatpush.bf16.msra.mxu0 %v1257
    %2354 = vmatmul.bf16.gmra.mxu0 %v2319
    %v2355 = vpop.f32.mrf.mxu0
    %v2356 = vadd.f32 %v1061, %v2355
    %v2357 = vpop.f32.mrf.mxu0
    %2358 = vdwg.mxu0
    %2359 = vmatpush.bf16.msra.mxu0 %v1317
    %2360 = vmatpush.bf16.msra.mxu0 %v1313
    %2361 = vmatpush.bf16.msra.mxu0 %v1309
    %2362 = vmatpush.bf16.msra.mxu0 %v1305
    %2363 = vmatpush.bf16.msra.mxu0 %v1301
    %2364 = vmatpush.bf16.msra.mxu0 %v1297
    %2365 = vmatpush.bf16.msra.mxu0 %v1293
    %2366 = vmatpush.bf16.msra.mxu0 %v1289
    %2367 = vmatmul.bf16.gmra.mxu0 %v2019
    %v2368 = vpop.f32.mrf.mxu0
    %v2369 = vadd.f32 %v2356, %v2368
    %v2370 = vpop.f32.mrf.mxu0
    %2371 = vdwg.mxu0
    %2372 = vmatpush.bf16.msra.mxu0 %v1286
    %2373 = vmatpush.bf16.msra.mxu0 %v1282
    %2374 = vmatpush.bf16.msra.mxu0 %v1278
    %2375 = vmatpush.bf16.msra.mxu0 %v1274
    %2376 = vmatpush.bf16.msra.mxu0 %v1270
    %2377 = vmatpush.bf16.msra.mxu0 %v1266
    %2378 = vmatpush.bf16.msra.mxu0 %v1262
    %2379 = vmatpush.bf16.msra.mxu0 %v1258
    %2380 = vmatmul.bf16.gmra.mxu0 %v2319
    %v2381 = vpop.f32.mrf.mxu0
    %v2382 = vadd.f32 %v1062, %v2381
    %v2383 = vpop.f32.mrf.mxu0
    %2384 = vdwg.mxu0
    %2385 = vmatpush.bf16.msra.mxu0 %v1318
    %2386 = vmatpush.bf16.msra.mxu0 %v1314
    %2387 = vmatpush.bf16.msra.mxu0 %v1310
    %2388 = vmatpush.bf16.msra.mxu0 %v1306
    %2389 = vmatpush.bf16.msra.mxu0 %v1302
    %2390 = vmatpush.bf16.msra.mxu0 %v1298
    %2391 = vmatpush.bf16.msra.mxu0 %v1294
    %2392 = vmatpush.bf16.msra.mxu0 %v1290
    %2393 = vmatmul.bf16.gmra.mxu0 %v2019
    %v2394 = vpop.f32.mrf.mxu0
    %v2395 = vadd.f32 %v2382, %v2394
    %v2396 = vpop.f32.mrf.mxu0
    %2397 = vdwg.mxu0
    %2398 = vmatpush.bf16.msra.mxu0 %v1287
    %2399 = vmatpush.bf16.msra.mxu0 %v1283
    %2400 = vmatpush.bf16.msra.mxu0 %v1279
    %2401 = vmatpush.bf16.msra.mxu0 %v1275
    %2402 = vmatpush.bf16.msra.mxu0 %v1271
    %2403 = vmatpush.bf16.msra.mxu0 %v1267
    %2404 = vmatpush.bf16.msra.mxu0 %v1263
    %2405 = vmatpush.bf16.msra.mxu0 %v1259
    %2406 = vmatmul.bf16.gmra.mxu0 %v2319
    %v2407 = vpop.f32.mrf.mxu0
    %v2408 = vadd.f32 %v1063, %v2407
    %v2409 = vpop.f32.mrf.mxu0
    %2410 = vdwg.mxu0
    %2411 = vmatpush.bf16.msra.mxu0 %v1319
    %2412 = vmatpush.bf16.msra.mxu0 %v1315
    %2413 = vmatpush.bf16.msra.mxu0 %v1311
    %2414 = vmatpush.bf16.msra.mxu0 %v1307
    %2415 = vmatpush.bf16.msra.mxu0 %v1303
    %2416 = vmatpush.bf16.msra.mxu0 %v1299
    %2417 = vmatpush.bf16.msra.mxu0 %v1295
    %2418 = vmatpush.bf16.msra.mxu0 %v1291
    %2419 = vmatmul.bf16.gmra.mxu0 %v2019
    %v2420 = vpop.f32.mrf.mxu0
    %v2421 = vadd.f32 %v2408, %v2420
    %v2422 = vpop.f32.mrf.mxu0
    %2423 = vdwg.mxu0
    %v2424 = vxor.u32 %v2343, 2147483648
    %v2425 = vxor.u32 %v2369, 2147483648
    %v2426 = vxor.u32 %v2395, 2147483648
    %v2427 = vmul.f32 %v2424, 1.442695
    %v2428 = vpow.pop %v2427
    %v2429 = vmul.f32 %v2425, 1.442695
    %v2430 = vpow.pop %v2429
    %v2431 = vmul.f32 %v2426, 1.442695
    %v2432 = vpow.pop %v2431
    %v2433 = vadd.f32 %v2428, 1.0
    %v2434 = vadd.f32 %v2430, 1.0
    %v2435 = vadd.f32 %v2432, 1.0
    %v2436 = vrcp.pop %v2433
    %v2437 = vmul.f32 %v2433, %v2436
    %v2438 = vsub.f32 1.0, %v2437
    %v2439 = vmul.f32 %v2436, %v2438
    %v2440 = vadd.f32 %v2436, %v2439
    %vm2441 = vweird.f32 %v2433
    %vm2442 = vweird.f32 %v2436
    %vm2443 = vmor %vm2441, %vm2442
    %v2444 = vsel %vm2443, %v2436, %v2440
    %v2445 = vand.u32 2147483647, %v2433
    %vm2446 = vcmp.eq.f32.partialorder %v2445, 8.507059e+37
    %v2447 = vand.u32 %v2433, 2147483648
    %v2448 = vor.u32 1.1754944e-38, %v2447
    %v2449 = vsel %vm2446, %v2448, %v2444
    %v2450 = vmul.f32 1.0, %v2449
    %v2451 = vrcp.pop %v2434
    %v2452 = vmul.f32 %v2434, %v2451
    %v2453 = vsub.f32 1.0, %v2452
    %v2454 = vmul.f32 %v2451, %v2453
    %v2455 = vadd.f32 %v2451, %v2454
    %vm2456 = vweird.f32 %v2434
    %vm2457 = vweird.f32 %v2451
    %vm2458 = vmor %vm2456, %vm2457
    %v2459 = vsel %vm2458, %v2451, %v2455
    %v2460 = vand.u32 2147483647, %v2434
    %vm2461 = vcmp.eq.f32.partialorder %v2460, 8.507059e+37
    %v2462 = vand.u32 %v2434, 2147483648
    %v2463 = vor.u32 1.1754944e-38, %v2462
    %v2464 = vsel %vm2461, %v2463, %v2459
    %v2465 = vmul.f32 1.0, %v2464
    %v2466 = vrcp.pop %v2435
    %v2467 = vmul.f32 %v2435, %v2466
    %v2468 = vsub.f32 1.0, %v2467
    %v2469 = vmul.f32 %v2466, %v2468
    %v2470 = vadd.f32 %v2466, %v2469
    %vm2471 = vweird.f32 %v2435
    %vm2472 = vweird.f32 %v2466
    %vm2473 = vmor %vm2471, %vm2472
    %v2474 = vsel %vm2473, %v2466, %v2470
    %v2475 = vand.u32 2147483647, %v2435
    %vm2476 = vcmp.eq.f32.partialorder %v2475, 8.507059e+37
    %v2477 = vand.u32 %v2435, 2147483648
    %v2478 = vor.u32 1.1754944e-38, %v2477
    %v2479 = vsel %vm2476, %v2478, %v2474
    %v2480 = vmul.f32 1.0, %v2479
    %v2481 = vtanh.pop %v2421
    %v2482 = vmul.f32 %v2465, %v2016
    %v2483 = vmul.f32 %v2450, %v2481
    %v2484 = vadd.f32 %v2482, %v2483
    %v2485 = vtanh.pop %v2484
    %v2486 = vmul.f32 %v2480, %v2485
    %v2487 = vpack.c.bf16 %v2486, %v2486
    %2488 = vset.pattern.permute.xlu0 3
    %2489 = vperm.xlu0 %2488, %v103
    %v2490 = vpop.permute.xlu0 %2489
    %v2492 = vmul.f32 %v2490, %v104
    %v2493 = vmul.f32 %v2490, %v105
    %v2494 = vmul.f32 %v2490, %v106
    %v2495 = vmul.f32 %v2490, %v107
    %2496 = vmatpush.bf16.msra.mxu0 %v273
    %2497 = vmatpush.bf16.msra.mxu0 %v269
    %2498 = vmatpush.bf16.msra.mxu0 %v265
    %2499 = vmatpush.bf16.msra.mxu0 %v261
    %2500 = vmatpush.bf16.msra.mxu0 %v257
    %2501 = vmatpush.bf16.msra.mxu0 %v253
    %2502 = vmatpush.bf16.msra.mxu0 %v249
    %2503 = vmatpush.bf16.msra.mxu0 %v245
    %2504 = vmatmul.bf16.gmra.mxu0 %v2151
    %v2505 = vpop.f32.mrf.mxu0
    %v2506 = vadd.f32 0.0, %v2505
    %v2507 = vpop.f32.mrf.mxu0
    %2508 = vdwg.mxu0
    %2509 = vmatpush.bf16.msra.mxu0 %v274
    %2510 = vmatpush.bf16.msra.mxu0 %v270
    %2511 = vmatpush.bf16.msra.mxu0 %v266
    %2512 = vmatpush.bf16.msra.mxu0 %v262
    %2513 = vmatpush.bf16.msra.mxu0 %v258
    %2514 = vmatpush.bf16.msra.mxu0 %v254
    %2515 = vmatpush.bf16.msra.mxu0 %v250
    %2516 = vmatpush.bf16.msra.mxu0 %v246
    %2517 = vmatmul.bf16.gmra.mxu0 %v2151
    %v2518 = vpop.f32.mrf.mxu0
    %v2519 = vadd.f32 0.0, %v2518
    %v2520 = vpop.f32.mrf.mxu0
    %2521 = vdwg.mxu0
    %2522 = vmatpush.bf16.msra.mxu0 %v275
    %2523 = vmatpush.bf16.msra.mxu0 %v271
    %2524 = vmatpush.bf16.msra.mxu0 %v267
    %2525 = vmatpush.bf16.msra.mxu0 %v263
    %2526 = vmatpush.bf16.msra.mxu0 %v259
    %2527 = vmatpush.bf16.msra.mxu0 %v255
    %2528 = vmatpush.bf16.msra.mxu0 %v251
    %2529 = vmatpush.bf16.msra.mxu0 %v247
    %2530 = vmatmul.bf16.gmra.mxu0 %v2151
    %v2531 = vpop.f32.mrf.mxu0
    %v2532 = vadd.f32 0.0, %v2531
    %v2533 = vpop.f32.mrf.mxu0
    %2534 = vdwg.mxu0
    %2535 = vmatpush.bf16.msra.mxu0 %v276
    %2536 = vmatpush.bf16.msra.mxu0 %v272
    %2537 = vmatpush.bf16.msra.mxu0 %v268
    %2538 = vmatpush.bf16.msra.mxu0 %v264
    %2539 = vmatpush.bf16.msra.mxu0 %v260
    %2540 = vmatpush.bf16.msra.mxu0 %v256
    %2541 = vmatpush.bf16.msra.mxu0 %v252
    %2542 = vmatpush.bf16.msra.mxu0 %v248
    %2543 = vmatmul.bf16.gmra.mxu0 %v2151
    %v2544 = vpop.f32.mrf.mxu0
    %v2545 = vadd.f32 0.0, %v2544
    %v2546 = vpop.f32.mrf.mxu0
    %2547 = vdwg.mxu0
    %v2548 = vadd.f32 %v2492, %v2506
    %v2549 = vadd.f32 %v2493, %v2519
    %v2550 = vadd.f32 %v2494, %v2532
    %v2551 = vadd.f32 %v2495, %v2545
    %v2552 = vadd.f32 %v2548, %v365
    %v2553 = vadd.f32 %v2549, %v366
    %v2554 = vadd.f32 %v2550, %v367
    %v2555 = vadd.f32 %v2551, %v368
    %v2556 = vxor.u32 %v2552, 2147483648
    %v2557 = vxor.u32 %v2553, 2147483648
    %v2558 = vxor.u32 %v2554, 2147483648
    %v2559 = vmul.f32 %v2556, 1.442695
    %v2560 = vpow.pop %v2559
    %v2561 = vmul.f32 %v2557, 1.442695
    %v2562 = vpow.pop %v2561
    %v2563 = vmul.f32 %v2558, 1.442695
    %v2564 = vpow.pop %v2563
    %v2565 = vadd.f32 %v2560, 1.0
    %v2566 = vadd.f32 %v2562, 1.0
    %v2567 = vadd.f32 %v2564, 1.0
    %v2568 = vrcp.pop %v2565
    %v2569 = vmul.f32 %v2565, %v2568
    %v2570 = vsub.f32 1.0, %v2569
    %v2571 = vmul.f32 %v2568, %v2570
    %v2572 = vadd.f32 %v2568, %v2571
    %vm2573 = vweird.f32 %v2565
    %vm2574 = vweird.f32 %v2568
    %vm2575 = vmor %vm2573, %vm2574
    %v2576 = vsel %vm2575, %v2568, %v2572
    %v2577 = vand.u32 2147483647, %v2565
    %vm2578 = vcmp.eq.f32.partialorder %v2577, 8.507059e+37
    %v2579 = vand.u32 %v2565, 2147483648
    %v2580 = vor.u32 1.1754944e-38, %v2579
    %v2581 = vsel %vm2578, %v2580, %v2576
    %v2582 = vmul.f32 1.0, %v2581
    %v2583 = vrcp.pop %v2566
    %v2584 = vmul.f32 %v2566, %v2583
    %v2585 = vsub.f32 1.0, %v2584
    %v2586 = vmul.f32 %v2583, %v2585
    %v2587 = vadd.f32 %v2583, %v2586
    %vm2588 = vweird.f32 %v2566
    %vm2589 = vweird.f32 %v2583
    %vm2590 = vmor %vm2588, %vm2589
    %v2591 = vsel %vm2590, %v2583, %v2587
    %v2592 = vand.u32 2147483647, %v2566
    %vm2593 = vcmp.eq.f32.partialorder %v2592, 8.507059e+37
    %v2594 = vand.u32 %v2566, 2147483648
    %v2595 = vor.u32 1.1754944e-38, %v2594
    %v2596 = vsel %vm2593, %v2595, %v2591
    %v2597 = vmul.f32 1.0, %v2596
    %v2598 = vrcp.pop %v2567
    %v2599 = vmul.f32 %v2567, %v2598
    %v2600 = vsub.f32 1.0, %v2599
    %v2601 = vmul.f32 %v2598, %v2600
    %v2602 = vadd.f32 %v2598, %v2601
    %vm2603 = vweird.f32 %v2567
    %vm2604 = vweird.f32 %v2598
    %vm2605 = vmor %vm2603, %vm2604
    %v2606 = vsel %vm2605, %v2598, %v2602
    %v2607 = vand.u32 2147483647, %v2567
    %vm2608 = vcmp.eq.f32.partialorder %v2607, 8.507059e+37
    %v2609 = vand.u32 %v2567, 2147483648
    %v2610 = vor.u32 1.1754944e-38, %v2609
    %v2611 = vsel %vm2608, %v2610, %v2606
    %v2612 = vmul.f32 1.0, %v2611
    %v2613 = vtanh.pop %v2555
    %v2614 = vmul.f32 %v2597, %v2148
    %v2615 = vmul.f32 %v2582, %v2613
    %v2616 = vadd.f32 %v2614, %v2615
    %v2617 = vtanh.pop %v2616
    %v2618 = vmul.f32 %v2612, %v2617
    %v2619 = vpack.c.bf16 %v2618, %v2618
    %2620 = vmatpush.bf16.msra.mxu0 %v726
    %2621 = vmatpush.bf16.msra.mxu0 %v722
    %2622 = vmatpush.bf16.msra.mxu0 %v718
    %2623 = vmatpush.bf16.msra.mxu0 %v714
    %2624 = vmatpush.bf16.msra.mxu0 %v710
    %2625 = vmatpush.bf16.msra.mxu0 %v706
    %2626 = vmatpush.bf16.msra.mxu0 %v702
    %2627 = vmatpush.bf16.msra.mxu0 %v698
    %2628 = vmatmul.bf16.gmra.mxu0 %v2619
    %v2629 = vpop.f32.mrf.mxu0
    %v2630 = vadd.f32 %v502, %v2629
    %v2631 = vpop.f32.mrf.mxu0
    %2632 = vdwg.mxu0
    %2633 = vmatpush.bf16.msra.mxu0 %v758
    %2634 = vmatpush.bf16.msra.mxu0 %v754
    %2635 = vmatpush.bf16.msra.mxu0 %v750
    %2636 = vmatpush.bf16.msra.mxu0 %v746
    %2637 = vmatpush.bf16.msra.mxu0 %v742
    %2638 = vmatpush.bf16.msra.mxu0 %v738
    %2639 = vmatpush.bf16.msra.mxu0 %v734
    %2640 = vmatpush.bf16.msra.mxu0 %v730
    %2641 = vmatmul.bf16.gmra.mxu0 %v2319
    %v2642 = vpop.f32.mrf.mxu0
    %v2643 = vadd.f32 %v2630, %v2642
    %v2644 = vpop.f32.mrf.mxu0
    %2645 = vdwg.mxu0
    %2646 = vmatpush.bf16.msra.mxu0 %v727
    %2647 = vmatpush.bf16.msra.mxu0 %v723
    %2648 = vmatpush.bf16.msra.mxu0 %v719
    %2649 = vmatpush.bf16.msra.mxu0 %v715
    %2650 = vmatpush.bf16.msra.mxu0 %v711
    %2651 = vmatpush.bf16.msra.mxu0 %v707
    %2652 = vmatpush.bf16.msra.mxu0 %v703
    %2653 = vmatpush.bf16.msra.mxu0 %v699
    %2654 = vmatmul.bf16.gmra.mxu0 %v2619
    %v2655 = vpop.f32.mrf.mxu0
    %v2656 = vadd.f32 %v503, %v2655
    %v2657 = vpop.f32.mrf.mxu0
    %2658 = vdwg.mxu0
    %2659 = vmatpush.bf16.msra.mxu0 %v759
    %2660 = vmatpush.bf16.msra.mxu0 %v755
    %2661 = vmatpush.bf16.msra.mxu0 %v751
    %2662 = vmatpush.bf16.msra.mxu0 %v747
    %2663 = vmatpush.bf16.msra.mxu0 %v743
    %2664 = vmatpush.bf16.msra.mxu0 %v739
    %2665 = vmatpush.bf16.msra.mxu0 %v735
    %2666 = vmatpush.bf16.msra.mxu0 %v731
    %2667 = vmatmul.bf16.gmra.mxu0 %v2319
    %v2668 = vpop.f32.mrf.mxu0
    %v2669 = vadd.f32 %v2656, %v2668
    %v2670 = vpop.f32.mrf.mxu0
    %2671 = vdwg.mxu0
    %2672 = vmatpush.bf16.msra.mxu0 %v728
    %2673 = vmatpush.bf16.msra.mxu0 %v724
    %2674 = vmatpush.bf16.msra.mxu0 %v720
    %2675 = vmatpush.bf16.msra.mxu0 %v716
    %2676 = vmatpush.bf16.msra.mxu0 %v712
    %2677 = vmatpush.bf16.msra.mxu0 %v708
    %2678 = vmatpush.bf16.msra.mxu0 %v704
    %2679 = vmatpush.bf16.msra.mxu0 %v700
    %2680 = vmatmul.bf16.gmra.mxu0 %v2619
    %v2681 = vpop.f32.mrf.mxu0
    %v2682 = vadd.f32 %v504, %v2681
    %v2683 = vpop.f32.mrf.mxu0
    %2684 = vdwg.mxu0
    %2685 = vmatpush.bf16.msra.mxu0 %v760
    %2686 = vmatpush.bf16.msra.mxu0 %v756
    %2687 = vmatpush.bf16.msra.mxu0 %v752
    %2688 = vmatpush.bf16.msra.mxu0 %v748
    %2689 = vmatpush.bf16.msra.mxu0 %v744
    %2690 = vmatpush.bf16.msra.mxu0 %v740
    %2691 = vmatpush.bf16.msra.mxu0 %v736
    %2692 = vmatpush.bf16.msra.mxu0 %v732
    %2693 = vmatmul.bf16.gmra.mxu0 %v2319
    %v2694 = vpop.f32.mrf.mxu0
    %v2695 = vadd.f32 %v2682, %v2694
    %v2696 = vpop.f32.mrf.mxu0
    %2697 = vdwg.mxu0
    %2698 = vmatpush.bf16.msra.mxu0 %v729
    %2699 = vmatpush.bf16.msra.mxu0 %v725
    %2700 = vmatpush.bf16.msra.mxu0 %v721
    %2701 = vmatpush.bf16.msra.mxu0 %v717
    %2702 = vmatpush.bf16.msra.mxu0 %v713
    %2703 = vmatpush.bf16.msra.mxu0 %v709
    %2704 = vmatpush.bf16.msra.mxu0 %v705
    %2705 = vmatpush.bf16.msra.mxu0 %v701
    %2706 = vmatmul.bf16.gmra.mxu0 %v2619
    %v2707 = vpop.f32.mrf.mxu0
    %v2708 = vadd.f32 %v505, %v2707
    %v2709 = vpop.f32.mrf.mxu0
    %2710 = vdwg.mxu0
    %2711 = vmatpush.bf16.msra.mxu0 %v761
    %2712 = vmatpush.bf16.msra.mxu0 %v757
    %2713 = vmatpush.bf16.msra.mxu0 %v753
    %2714 = vmatpush.bf16.msra.mxu0 %v749
    %2715 = vmatpush.bf16.msra.mxu0 %v745
    %2716 = vmatpush.bf16.msra.mxu0 %v741
    %2717 = vmatpush.bf16.msra.mxu0 %v737
    %2718 = vmatpush.bf16.msra.mxu0 %v733
    %2719 = vmatmul.bf16.gmra.mxu0 %v2319
    %v2720 = vpop.f32.mrf.mxu0
    %v2721 = vadd.f32 %v2708, %v2720
    %v2722 = vpop.f32.mrf.mxu0
    %2723 = vdwg.mxu0
    %v2724 = vxor.u32 %v2643, 2147483648
    %v2725 = vxor.u32 %v2669, 2147483648
    %v2726 = vxor.u32 %v2695, 2147483648
    %v2727 = vmul.f32 %v2724, 1.442695
    %v2728 = vpow.pop %v2727
    %v2729 = vmul.f32 %v2725, 1.442695
    %v2730 = vpow.pop %v2729
    %v2731 = vmul.f32 %v2726, 1.442695
    %v2732 = vpow.pop %v2731
    %v2733 = vadd.f32 %v2728, 1.0
    %v2734 = vadd.f32 %v2730, 1.0
    %v2735 = vadd.f32 %v2732, 1.0
    %v2736 = vrcp.pop %v2733
    %v2737 = vmul.f32 %v2733, %v2736
    %v2738 = vsub.f32 1.0, %v2737
    %v2739 = vmul.f32 %v2736, %v2738
    %v2740 = vadd.f32 %v2736, %v2739
    %vm2741 = vweird.f32 %v2733
    %vm2742 = vweird.f32 %v2736
    %vm2743 = vmor %vm2741, %vm2742
    %v2744 = vsel %vm2743, %v2736, %v2740
    %v2745 = vand.u32 2147483647, %v2733
    %vm2746 = vcmp.eq.f32.partialorder %v2745, 8.507059e+37
    %v2747 = vand.u32 %v2733, 2147483648
    %v2748 = vor.u32 1.1754944e-38, %v2747
    %v2749 = vsel %vm2746, %v2748, %v2744
    %v2750 = vmul.f32 1.0, %v2749
    %v2751 = vrcp.pop %v2734
    %v2752 = vmul.f32 %v2734, %v2751
    %v2753 = vsub.f32 1.0, %v2752
    %v2754 = vmul.f32 %v2751, %v2753
    %v2755 = vadd.f32 %v2751, %v2754
    %vm2756 = vweird.f32 %v2734
    %vm2757 = vweird.f32 %v2751
    %vm2758 = vmor %vm2756, %vm2757
    %v2759 = vsel %vm2758, %v2751, %v2755
    %v2760 = vand.u32 2147483647, %v2734
    %vm2761 = vcmp.eq.f32.partialorder %v2760, 8.507059e+37
    %v2762 = vand.u32 %v2734, 2147483648
    %v2763 = vor.u32 1.1754944e-38, %v2762
    %v2764 = vsel %vm2761, %v2763, %v2759
    %v2765 = vmul.f32 1.0, %v2764
    %v2766 = vrcp.pop %v2735
    %v2767 = vmul.f32 %v2735, %v2766
    %v2768 = vsub.f32 1.0, %v2767
    %v2769 = vmul.f32 %v2766, %v2768
    %v2770 = vadd.f32 %v2766, %v2769
    %vm2771 = vweird.f32 %v2735
    %vm2772 = vweird.f32 %v2766
    %vm2773 = vmor %vm2771, %vm2772
    %v2774 = vsel %vm2773, %v2766, %v2770
    %v2775 = vand.u32 2147483647, %v2735
    %vm2776 = vcmp.eq.f32.partialorder %v2775, 8.507059e+37
    %v2777 = vand.u32 %v2735, 2147483648
    %v2778 = vor.u32 1.1754944e-38, %v2777
    %v2779 = vsel %vm2776, %v2778, %v2774
    %v2780 = vmul.f32 1.0, %v2779
    %v2781 = vtanh.pop %v2721
    %v2782 = vmul.f32 %v2765, %v2316
    %v2783 = vmul.f32 %v2750, %v2781
    %v2784 = vadd.f32 %v2782, %v2783
    %v2785 = vtanh.pop %v2784
    %v2786 = vmul.f32 %v2780, %v2785
    %v2787 = vpack.c.bf16 %v2786, %v2786
    %2788 = vmatpush.bf16.msra.mxu0 %v1284
    %2789 = vmatpush.bf16.msra.mxu0 %v1280
    %2790 = vmatpush.bf16.msra.mxu0 %v1276
    %2791 = vmatpush.bf16.msra.mxu0 %v1272
    %2792 = vmatpush.bf16.msra.mxu0 %v1268
    %2793 = vmatpush.bf16.msra.mxu0 %v1264
    %2794 = vmatpush.bf16.msra.mxu0 %v1260
    %2795 = vmatpush.bf16.msra.mxu0 %v1256
    %2796 = vmatmul.bf16.gmra.mxu0 %v2787
    %v2797 = vpop.f32.mrf.mxu0
    %v2798 = vadd.f32 %v1060, %v2797
    %v2799 = vpop.f32.mrf.mxu0
    %2800 = vdwg.mxu0
    %2801 = vmatpush.bf16.msra.mxu0 %v1316
    %2802 = vmatpush.bf16.msra.mxu0 %v1312
    %2803 = vmatpush.bf16.msra.mxu0 %v1308
    %2804 = vmatpush.bf16.msra.mxu0 %v1304
    %2805 = vmatpush.bf16.msra.mxu0 %v1300
    %2806 = vmatpush.bf16.msra.mxu0 %v1296
    %2807 = vmatpush.bf16.msra.mxu0 %v1292
    %2808 = vmatpush.bf16.msra.mxu0 %v1288
    %2809 = vmatmul.bf16.gmra.mxu0 %v2487
    %v2810 = vpop.f32.mrf.mxu0
    %v2811 = vadd.f32 %v2798, %v2810
    %v2812 = vpop.f32.mrf.mxu0
    %2813 = vdwg.mxu0
    %2814 = vmatpush.bf16.msra.mxu0 %v1285
    %2815 = vmatpush.bf16.msra.mxu0 %v1281
    %2816 = vmatpush.bf16.msra.mxu0 %v1277
    %2817 = vmatpush.bf16.msra.mxu0 %v1273
    %2818 = vmatpush.bf16.msra.mxu0 %v1269
    %2819 = vmatpush.bf16.msra.mxu0 %v1265
    %2820 = vmatpush.bf16.msra.mxu0 %v1261
    %2821 = vmatpush.bf16.msra.mxu0 %v1257
    %2822 = vmatmul.bf16.gmra.mxu0 %v2787
    %v2823 = vpop.f32.mrf.mxu0
    %v2824 = vadd.f32 %v1061, %v2823
    %v2825 = vpop.f32.mrf.mxu0
    %2826 = vdwg.mxu0
    %2827 = vmatpush.bf16.msra.mxu0 %v1317
    %2828 = vmatpush.bf16.msra.mxu0 %v1313
    %2829 = vmatpush.bf16.msra.mxu0 %v1309
    %2830 = vmatpush.bf16.msra.mxu0 %v1305
    %2831 = vmatpush.bf16.msra.mxu0 %v1301
    %2832 = vmatpush.bf16.msra.mxu0 %v1297
    %2833 = vmatpush.bf16.msra.mxu0 %v1293
    %2834 = vmatpush.bf16.msra.mxu0 %v1289
    %2835 = vmatmul.bf16.gmra.mxu0 %v2487
    %v2836 = vpop.f32.mrf.mxu0
    %v2837 = vadd.f32 %v2824, %v2836
    %v2838 = vpop.f32.mrf.mxu0
    %2839 = vdwg.mxu0
    %2840 = vmatpush.bf16.msra.mxu0 %v1286
    %2841 = vmatpush.bf16.msra.mxu0 %v1282
    %2842 = vmatpush.bf16.msra.mxu0 %v1278
    %2843 = vmatpush.bf16.msra.mxu0 %v1274
    %2844 = vmatpush.bf16.msra.mxu0 %v1270
    %2845 = vmatpush.bf16.msra.mxu0 %v1266
    %2846 = vmatpush.bf16.msra.mxu0 %v1262
    %2847 = vmatpush.bf16.msra.mxu0 %v1258
    %2848 = vmatmul.bf16.gmra.mxu0 %v2787
    %v2849 = vpop.f32.mrf.mxu0
    %v2850 = vadd.f32 %v1062, %v2849
    %v2851 = vpop.f32.mrf.mxu0
    %2852 = vdwg.mxu0
    %2853 = vmatpush.bf16.msra.mxu0 %v1318
    %2854 = vmatpush.bf16.msra.mxu0 %v1314
    %2855 = vmatpush.bf16.msra.mxu0 %v1310
    %2856 = vmatpush.bf16.msra.mxu0 %v1306
    %2857 = vmatpush.bf16.msra.mxu0 %v1302
    %2858 = vmatpush.bf16.msra.mxu0 %v1298
    %2859 = vmatpush.bf16.msra.mxu0 %v1294
    %2860 = vmatpush.bf16.msra.mxu0 %v1290
    %2861 = vmatmul.bf16.gmra.mxu0 %v2487
    %v2862 = vpop.f32.mrf.mxu0
    %v2863 = vadd.f32 %v2850, %v2862
    %v2864 = vpop.f32.mrf.mxu0
    %2865 = vdwg.mxu0
    %2866 = vmatpush.bf16.msra.mxu0 %v1287
    %2867 = vmatpush.bf16.msra.mxu0 %v1283
    %2868 = vmatpush.bf16.msra.mxu0 %v1279
    %2869 = vmatpush.bf16.msra.mxu0 %v1275
    %2870 = vmatpush.bf16.msra.mxu0 %v1271
    %2871 = vmatpush.bf16.msra.mxu0 %v1267
    %2872 = vmatpush.bf16.msra.mxu0 %v1263
    %2873 = vmatpush.bf16.msra.mxu0 %v1259
    %2874 = vmatmul.bf16.gmra.mxu0 %v2787
    %v2875 = vpop.f32.mrf.mxu0
    %v2876 = vadd.f32 %v1063, %v2875
    %v2877 = vpop.f32.mrf.mxu0
    %2878 = vdwg.mxu0
    %2879 = vmatpush.bf16.msra.mxu0 %v1319
    %2880 = vmatpush.bf16.msra.mxu0 %v1315
    %2881 = vmatpush.bf16.msra.mxu0 %v1311
    %2882 = vmatpush.bf16.msra.mxu0 %v1307
    %2883 = vmatpush.bf16.msra.mxu0 %v1303
    %2884 = vmatpush.bf16.msra.mxu0 %v1299
    %2885 = vmatpush.bf16.msra.mxu0 %v1295
    %2886 = vmatpush.bf16.msra.mxu0 %v1291
    %2887 = vmatmul.bf16.gmra.mxu0 %v2487
    %v2888 = vpop.f32.mrf.mxu0
    %v2889 = vadd.f32 %v2876, %v2888
    %v2890 = vpop.f32.mrf.mxu0
    %2891 = vdwg.mxu0
    %v2892 = vxor.u32 %v2811, 2147483648
    %v2893 = vxor.u32 %v2837, 2147483648
    %v2894 = vxor.u32 %v2863, 2147483648
    %v2895 = vmul.f32 %v2892, 1.442695
    %v2896 = vpow.pop %v2895
    %v2897 = vmul.f32 %v2893, 1.442695
    %v2898 = vpow.pop %v2897
    %v2899 = vmul.f32 %v2894, 1.442695
    %v2900 = vpow.pop %v2899
    %v2901 = vadd.f32 %v2896, 1.0
    %v2902 = vadd.f32 %v2898, 1.0
    %v2903 = vadd.f32 %v2900, 1.0
    %v2904 = vrcp.pop %v2901
    %v2905 = vmul.f32 %v2901, %v2904
    %v2906 = vsub.f32 1.0, %v2905
    %v2907 = vmul.f32 %v2904, %v2906
    %v2908 = vadd.f32 %v2904, %v2907
    %vm2909 = vweird.f32 %v2901
    %vm2910 = vweird.f32 %v2904
    %vm2911 = vmor %vm2909, %vm2910
    %v2912 = vsel %vm2911, %v2904, %v2908
    %v2913 = vand.u32 2147483647, %v2901
    %vm2914 = vcmp.eq.f32.partialorder %v2913, 8.507059e+37
    %v2915 = vand.u32 %v2901, 2147483648
    %v2916 = vor.u32 1.1754944e-38, %v2915
    %v2917 = vsel %vm2914, %v2916, %v2912
    %v2918 = vmul.f32 1.0, %v2917
    %v2919 = vrcp.pop %v2902
    %v2920 = vmul.f32 %v2902, %v2919
    %v2921 = vsub.f32 1.0, %v2920
    %v2922 = vmul.f32 %v2919, %v2921
    %v2923 = vadd.f32 %v2919, %v2922
    %vm2924 = vweird.f32 %v2902
    %vm2925 = vweird.f32 %v2919
    %vm2926 = vmor %vm2924, %vm2925
    %v2927 = vsel %vm2926, %v2919, %v2923
    %v2928 = vand.u32 2147483647, %v2902
    %vm2929 = vcmp.eq.f32.partialorder %v2928, 8.507059e+37
    %v2930 = vand.u32 %v2902, 2147483648
    %v2931 = vor.u32 1.1754944e-38, %v2930
    %v2932 = vsel %vm2929, %v2931, %v2927
    %v2933 = vmul.f32 1.0, %v2932
    %v2934 = vrcp.pop %v2903
    %v2935 = vmul.f32 %v2903, %v2934
    %v2936 = vsub.f32 1.0, %v2935
    %v2937 = vmul.f32 %v2934, %v2936
    %v2938 = vadd.f32 %v2934, %v2937
    %vm2939 = vweird.f32 %v2903
    %vm2940 = vweird.f32 %v2934
    %vm2941 = vmor %vm2939, %vm2940
    %v2942 = vsel %vm2941, %v2934, %v2938
    %v2943 = vand.u32 2147483647, %v2903
    %vm2944 = vcmp.eq.f32.partialorder %v2943, 8.507059e+37
    %v2945 = vand.u32 %v2903, 2147483648
    %v2946 = vor.u32 1.1754944e-38, %v2945
    %v2947 = vsel %vm2944, %v2946, %v2942
    %v2948 = vmul.f32 1.0, %v2947
    %v2949 = vtanh.pop %v2889
    %v2950 = vmul.f32 %v2933, %v2484
    %v2951 = vmul.f32 %v2918, %v2949
    %v2952 = vadd.f32 %v2950, %v2951
    %v2953 = vtanh.pop %v2952
    %v2954 = vmul.f32 %v2948, %v2953
    %v2955 = vpack.c.bf16 %v2954, %v2954
    %2956 = vset.pattern.permute.xlu0 4
    %2957 = vperm.xlu0 %2956, %v103
    %v2958 = vpop.permute.xlu0 %2957
    %v2960 = vmul.f32 %v2958, %v104
    %v2961 = vmul.f32 %v2958, %v105
    %v2962 = vmul.f32 %v2958, %v106
    %v2963 = vmul.f32 %v2958, %v107
    %2964 = vmatpush.bf16.msra.mxu0 %v273
    %2965 = vmatpush.bf16.msra.mxu0 %v269
    %2966 = vmatpush.bf16.msra.mxu0 %v265
    %2967 = vmatpush.bf16.msra.mxu0 %v261
    %2968 = vmatpush.bf16.msra.mxu0 %v257
    %2969 = vmatpush.bf16.msra.mxu0 %v253
    %2970 = vmatpush.bf16.msra.mxu0 %v249
    %2971 = vmatpush.bf16.msra.mxu0 %v245
    %2972 = vmatmul.bf16.gmra.mxu0 %v2619
    %v2973 = vpop.f32.mrf.mxu0
    %v2974 = vadd.f32 0.0, %v2973
    %v2975 = vpop.f32.mrf.mxu0
    %2976 = vdwg.mxu0
    %2977 = vmatpush.bf16.msra.mxu0 %v274
    %2978 = vmatpush.bf16.msra.mxu0 %v270
    %2979 = vmatpush.bf16.msra.mxu0 %v266
    %2980 = vmatpush.bf16.msra.mxu0 %v262
    %2981 = vmatpush.bf16.msra.mxu0 %v258
    %2982 = vmatpush.bf16.msra.mxu0 %v254
    %2983 = vmatpush.bf16.msra.mxu0 %v250
    %2984 = vmatpush.bf16.msra.mxu0 %v246
    %2985 = vmatmul.bf16.gmra.mxu0 %v2619
    %v2986 = vpop.f32.mrf.mxu0
    %v2987 = vadd.f32 0.0, %v2986
    %v2988 = vpop.f32.mrf.mxu0
    %2989 = vdwg.mxu0
    %2990 = vmatpush.bf16.msra.mxu0 %v275
    %2991 = vmatpush.bf16.msra.mxu0 %v271
    %2992 = vmatpush.bf16.msra.mxu0 %v267
    %2993 = vmatpush.bf16.msra.mxu0 %v263
    %2994 = vmatpush.bf16.msra.mxu0 %v259
    %2995 = vmatpush.bf16.msra.mxu0 %v255
    %2996 = vmatpush.bf16.msra.mxu0 %v251
    %2997 = vmatpush.bf16.msra.mxu0 %v247
    %2998 = vmatmul.bf16.gmra.mxu0 %v2619
    %v2999 = vpop.f32.mrf.mxu0
    %v3000 = vadd.f32 0.0, %v2999
    %v3001 = vpop.f32.mrf.mxu0
    %3002 = vdwg.mxu0
    %3003 = vmatpush.bf16.msra.mxu0 %v276
    %3004 = vmatpush.bf16.msra.mxu0 %v272
    %3005 = vmatpush.bf16.msra.mxu0 %v268
    %3006 = vmatpush.bf16.msra.mxu0 %v264
    %3007 = vmatpush.bf16.msra.mxu0 %v260
    %3008 = vmatpush.bf16.msra.mxu0 %v256
    %3009 = vmatpush.bf16.msra.mxu0 %v252
    %3010 = vmatpush.bf16.msra.mxu0 %v248
    %3011 = vmatmul.bf16.gmra.mxu0 %v2619
    %v3012 = vpop.f32.mrf.mxu0
    %v3013 = vadd.f32 0.0, %v3012
    %v3014 = vpop.f32.mrf.mxu0
    %3015 = vdwg.mxu0
    %v3016 = vadd.f32 %v2960, %v2974
    %v3017 = vadd.f32 %v2961, %v2987
    %v3018 = vadd.f32 %v2962, %v3000
    %v3019 = vadd.f32 %v2963, %v3013
    %v3020 = vadd.f32 %v3016, %v365
    %v3021 = vadd.f32 %v3017, %v366
    %v3022 = vadd.f32 %v3018, %v367
    %v3023 = vadd.f32 %v3019, %v368
    %v3024 = vxor.u32 %v3020, 2147483648
    %v3025 = vxor.u32 %v3021, 2147483648
    %v3026 = vxor.u32 %v3022, 2147483648
    %v3027 = vmul.f32 %v3024, 1.442695
    %v3028 = vpow.pop %v3027
    %v3029 = vmul.f32 %v3025, 1.442695
    %v3030 = vpow.pop %v3029
    %v3031 = vmul.f32 %v3026, 1.442695
    %v3032 = vpow.pop %v3031
    %v3033 = vadd.f32 %v3028, 1.0
    %v3034 = vadd.f32 %v3030, 1.0
    %v3035 = vadd.f32 %v3032, 1.0
    %v3036 = vrcp.pop %v3033
    %v3037 = vmul.f32 %v3033, %v3036
    %v3038 = vsub.f32 1.0, %v3037
    %v3039 = vmul.f32 %v3036, %v3038
    %v3040 = vadd.f32 %v3036, %v3039
    %vm3041 = vweird.f32 %v3033
    %vm3042 = vweird.f32 %v3036
    %vm3043 = vmor %vm3041, %vm3042
    %v3044 = vsel %vm3043, %v3036, %v3040
    %v3045 = vand.u32 2147483647, %v3033
    %vm3046 = vcmp.eq.f32.partialorder %v3045, 8.507059e+37
    %v3047 = vand.u32 %v3033, 2147483648
    %v3048 = vor.u32 1.1754944e-38, %v3047
    %v3049 = vsel %vm3046, %v3048, %v3044
    %v3050 = vmul.f32 1.0, %v3049
    %v3051 = vrcp.pop %v3034
    %v3052 = vmul.f32 %v3034, %v3051
    %v3053 = vsub.f32 1.0, %v3052
    %v3054 = vmul.f32 %v3051, %v3053
    %v3055 = vadd.f32 %v3051, %v3054
    %vm3056 = vweird.f32 %v3034
    %vm3057 = vweird.f32 %v3051
    %vm3058 = vmor %vm3056, %vm3057
    %v3059 = vsel %vm3058, %v3051, %v3055
    %v3060 = vand.u32 2147483647, %v3034
    %vm3061 = vcmp.eq.f32.partialorder %v3060, 8.507059e+37
    %v3062 = vand.u32 %v3034, 2147483648
    %v3063 = vor.u32 1.1754944e-38, %v3062
    %v3064 = vsel %vm3061, %v3063, %v3059
    %v3065 = vmul.f32 1.0, %v3064
    %v3066 = vrcp.pop %v3035
    %v3067 = vmul.f32 %v3035, %v3066
    %v3068 = vsub.f32 1.0, %v3067
    %v3069 = vmul.f32 %v3066, %v3068
    %v3070 = vadd.f32 %v3066, %v3069
    %vm3071 = vweird.f32 %v3035
    %vm3072 = vweird.f32 %v3066
    %vm3073 = vmor %vm3071, %vm3072
    %v3074 = vsel %vm3073, %v3066, %v3070
    %v3075 = vand.u32 2147483647, %v3035
    %vm3076 = vcmp.eq.f32.partialorder %v3075, 8.507059e+37
    %v3077 = vand.u32 %v3035, 2147483648
    %v3078 = vor.u32 1.1754944e-38, %v3077
    %v3079 = vsel %vm3076, %v3078, %v3074
    %v3080 = vmul.f32 1.0, %v3079
    %v3081 = vtanh.pop %v3023
    %v3082 = vmul.f32 %v3065, %v2616
    %v3083 = vmul.f32 %v3050, %v3081
    %v3084 = vadd.f32 %v3082, %v3083
    %v3085 = vtanh.pop %v3084
    %v3086 = vmul.f32 %v3080, %v3085
    %v3087 = vpack.c.bf16 %v3086, %v3086
    %3088 = vmatpush.bf16.msra.mxu0 %v726
    %3089 = vmatpush.bf16.msra.mxu0 %v722
    %3090 = vmatpush.bf16.msra.mxu0 %v718
    %3091 = vmatpush.bf16.msra.mxu0 %v714
    %3092 = vmatpush.bf16.msra.mxu0 %v710
    %3093 = vmatpush.bf16.msra.mxu0 %v706
    %3094 = vmatpush.bf16.msra.mxu0 %v702
    %3095 = vmatpush.bf16.msra.mxu0 %v698
    %3096 = vmatmul.bf16.gmra.mxu0 %v3087
    %v3097 = vpop.f32.mrf.mxu0
    %v3098 = vadd.f32 %v502, %v3097
    %v3099 = vpop.f32.mrf.mxu0
    %3100 = vdwg.mxu0
    %3101 = vmatpush.bf16.msra.mxu0 %v758
    %3102 = vmatpush.bf16.msra.mxu0 %v754
    %3103 = vmatpush.bf16.msra.mxu0 %v750
    %3104 = vmatpush.bf16.msra.mxu0 %v746
    %3105 = vmatpush.bf16.msra.mxu0 %v742
    %3106 = vmatpush.bf16.msra.mxu0 %v738
    %3107 = vmatpush.bf16.msra.mxu0 %v734
    %3108 = vmatpush.bf16.msra.mxu0 %v730
    %3109 = vmatmul.bf16.gmra.mxu0 %v2787
    %v3110 = vpop.f32.mrf.mxu0
    %v3111 = vadd.f32 %v3098, %v3110
    %v3112 = vpop.f32.mrf.mxu0
    %3113 = vdwg.mxu0
    %3114 = vmatpush.bf16.msra.mxu0 %v727
    %3115 = vmatpush.bf16.msra.mxu0 %v723
    %3116 = vmatpush.bf16.msra.mxu0 %v719
    %3117 = vmatpush.bf16.msra.mxu0 %v715
    %3118 = vmatpush.bf16.msra.mxu0 %v711
    %3119 = vmatpush.bf16.msra.mxu0 %v707
    %3120 = vmatpush.bf16.msra.mxu0 %v703
    %3121 = vmatpush.bf16.msra.mxu0 %v699
    %3122 = vmatmul.bf16.gmra.mxu0 %v3087
    %v3123 = vpop.f32.mrf.mxu0
    %v3124 = vadd.f32 %v503, %v3123
    %v3125 = vpop.f32.mrf.mxu0
    %3126 = vdwg.mxu0
    %3127 = vmatpush.bf16.msra.mxu0 %v759
    %3128 = vmatpush.bf16.msra.mxu0 %v755
    %3129 = vmatpush.bf16.msra.mxu0 %v751
    %3130 = vmatpush.bf16.msra.mxu0 %v747
    %3131 = vmatpush.bf16.msra.mxu0 %v743
    %3132 = vmatpush.bf16.msra.mxu0 %v739
    %3133 = vmatpush.bf16.msra.mxu0 %v735
    %3134 = vmatpush.bf16.msra.mxu0 %v731
    %3135 = vmatmul.bf16.gmra.mxu0 %v2787
    %v3136 = vpop.f32.mrf.mxu0
    %v3137 = vadd.f32 %v3124, %v3136
    %v3138 = vpop.f32.mrf.mxu0
    %3139 = vdwg.mxu0
    %3140 = vmatpush.bf16.msra.mxu0 %v728
    %3141 = vmatpush.bf16.msra.mxu0 %v724
    %3142 = vmatpush.bf16.msra.mxu0 %v720
    %3143 = vmatpush.bf16.msra.mxu0 %v716
    %3144 = vmatpush.bf16.msra.mxu0 %v712
    %3145 = vmatpush.bf16.msra.mxu0 %v708
    %3146 = vmatpush.bf16.msra.mxu0 %v704
    %3147 = vmatpush.bf16.msra.mxu0 %v700
    %3148 = vmatmul.bf16.gmra.mxu0 %v3087
    %v3149 = vpop.f32.mrf.mxu0
    %v3150 = vadd.f32 %v504, %v3149
    %v3151 = vpop.f32.mrf.mxu0
    %3152 = vdwg.mxu0
    %3153 = vmatpush.bf16.msra.mxu0 %v760
    %3154 = vmatpush.bf16.msra.mxu0 %v756
    %3155 = vmatpush.bf16.msra.mxu0 %v752
    %3156 = vmatpush.bf16.msra.mxu0 %v748
    %3157 = vmatpush.bf16.msra.mxu0 %v744
    %3158 = vmatpush.bf16.msra.mxu0 %v740
    %3159 = vmatpush.bf16.msra.mxu0 %v736
    %3160 = vmatpush.bf16.msra.mxu0 %v732
    %3161 = vmatmul.bf16.gmra.mxu0 %v2787
    %v3162 = vpop.f32.mrf.mxu0
    %v3163 = vadd.f32 %v3150, %v3162
    %v3164 = vpop.f32.mrf.mxu0
    %3165 = vdwg.mxu0
    %3166 = vmatpush.bf16.msra.mxu0 %v729
    %3167 = vmatpush.bf16.msra.mxu0 %v725
    %3168 = vmatpush.bf16.msra.mxu0 %v721
    %3169 = vmatpush.bf16.msra.mxu0 %v717
    %3170 = vmatpush.bf16.msra.mxu0 %v713
    %3171 = vmatpush.bf16.msra.mxu0 %v709
    %3172 = vmatpush.bf16.msra.mxu0 %v705
    %3173 = vmatpush.bf16.msra.mxu0 %v701
    %3174 = vmatmul.bf16.gmra.mxu0 %v3087
    %v3175 = vpop.f32.mrf.mxu0
    %v3176 = vadd.f32 %v505, %v3175
    %v3177 = vpop.f32.mrf.mxu0
    %3178 = vdwg.mxu0
    %3179 = vmatpush.bf16.msra.mxu0 %v761
    %3180 = vmatpush.bf16.msra.mxu0 %v757
    %3181 = vmatpush.bf16.msra.mxu0 %v753
    %3182 = vmatpush.bf16.msra.mxu0 %v749
    %3183 = vmatpush.bf16.msra.mxu0 %v745
    %3184 = vmatpush.bf16.msra.mxu0 %v741
    %3185 = vmatpush.bf16.msra.mxu0 %v737
    %3186 = vmatpush.bf16.msra.mxu0 %v733
    %3187 = vmatmul.bf16.gmra.mxu0 %v2787
    %v3188 = vpop.f32.mrf.mxu0
    %v3189 = vadd.f32 %v3176, %v3188
    %v3190 = vpop.f32.mrf.mxu0
    %3191 = vdwg.mxu0
    %v3192 = vxor.u32 %v3111, 2147483648
    %v3193 = vxor.u32 %v3137, 2147483648
    %v3194 = vxor.u32 %v3163, 2147483648
    %v3195 = vmul.f32 %v3192, 1.442695
    %v3196 = vpow.pop %v3195
    %v3197 = vmul.f32 %v3193, 1.442695
    %v3198 = vpow.pop %v3197
    %v3199 = vmul.f32 %v3194, 1.442695
    %v3200 = vpow.pop %v3199
    %v3201 = vadd.f32 %v3196, 1.0
    %v3202 = vadd.f32 %v3198, 1.0
    %v3203 = vadd.f32 %v3200, 1.0
    %v3204 = vrcp.pop %v3201
    %v3205 = vmul.f32 %v3201, %v3204
    %v3206 = vsub.f32 1.0, %v3205
    %v3207 = vmul.f32 %v3204, %v3206
    %v3208 = vadd.f32 %v3204, %v3207
    %vm3209 = vweird.f32 %v3201
    %vm3210 = vweird.f32 %v3204
    %vm3211 = vmor %vm3209, %vm3210
    %v3212 = vsel %vm3211, %v3204, %v3208
    %v3213 = vand.u32 2147483647, %v3201
    %vm3214 = vcmp.eq.f32.partialorder %v3213, 8.507059e+37
    %v3215 = vand.u32 %v3201, 2147483648
    %v3216 = vor.u32 1.1754944e-38, %v3215
    %v3217 = vsel %vm3214, %v3216, %v3212
    %v3218 = vmul.f32 1.0, %v3217
    %v3219 = vrcp.pop %v3202
    %v3220 = vmul.f32 %v3202, %v3219
    %v3221 = vsub.f32 1.0, %v3220
    %v3222 = vmul.f32 %v3219, %v3221
    %v3223 = vadd.f32 %v3219, %v3222
    %vm3224 = vweird.f32 %v3202
    %vm3225 = vweird.f32 %v3219
    %vm3226 = vmor %vm3224, %vm3225
    %v3227 = vsel %vm3226, %v3219, %v3223
    %v3228 = vand.u32 2147483647, %v3202
    %vm3229 = vcmp.eq.f32.partialorder %v3228, 8.507059e+37
    %v3230 = vand.u32 %v3202, 2147483648
    %v3231 = vor.u32 1.1754944e-38, %v3230
    %v3232 = vsel %vm3229, %v3231, %v3227
    %v3233 = vmul.f32 1.0, %v3232
    %v3234 = vrcp.pop %v3203
    %v3235 = vmul.f32 %v3203, %v3234
    %v3236 = vsub.f32 1.0, %v3235
    %v3237 = vmul.f32 %v3234, %v3236
    %v3238 = vadd.f32 %v3234, %v3237
    %vm3239 = vweird.f32 %v3203
    %vm3240 = vweird.f32 %v3234
    %vm3241 = vmor %vm3239, %vm3240
    %v3242 = vsel %vm3241, %v3234, %v3238
    %v3243 = vand.u32 2147483647, %v3203
    %vm3244 = vcmp.eq.f32.partialorder %v3243, 8.507059e+37
    %v3245 = vand.u32 %v3203, 2147483648
    %v3246 = vor.u32 1.1754944e-38, %v3245
    %v3247 = vsel %vm3244, %v3246, %v3242
    %v3248 = vmul.f32 1.0, %v3247
    %v3249 = vtanh.pop %v3189
    %v3250 = vmul.f32 %v3233, %v2784
    %v3251 = vmul.f32 %v3218, %v3249
    %v3252 = vadd.f32 %v3250, %v3251
    %v3253 = vtanh.pop %v3252
    %v3254 = vmul.f32 %v3248, %v3253
    %v3255 = vpack.c.bf16 %v3254, %v3254
    %3256 = vmatpush.bf16.msra.mxu0 %v1284
    %3257 = vmatpush.bf16.msra.mxu0 %v1280
    %3258 = vmatpush.bf16.msra.mxu0 %v1276
    %3259 = vmatpush.bf16.msra.mxu0 %v1272
    %3260 = vmatpush.bf16.msra.mxu0 %v1268
    %3261 = vmatpush.bf16.msra.mxu0 %v1264
    %3262 = vmatpush.bf16.msra.mxu0 %v1260
    %3263 = vmatpush.bf16.msra.mxu0 %v1256
    %3264 = vmatmul.bf16.gmra.mxu0 %v3255
    %v3265 = vpop.f32.mrf.mxu0
    %v3266 = vadd.f32 %v1060, %v3265
    %v3267 = vpop.f32.mrf.mxu0
    %3268 = vdwg.mxu0
    %3269 = vmatpush.bf16.msra.mxu0 %v1316
    %3270 = vmatpush.bf16.msra.mxu0 %v1312
    %3271 = vmatpush.bf16.msra.mxu0 %v1308
    %3272 = vmatpush.bf16.msra.mxu0 %v1304
    %3273 = vmatpush.bf16.msra.mxu0 %v1300
    %3274 = vmatpush.bf16.msra.mxu0 %v1296
    %3275 = vmatpush.bf16.msra.mxu0 %v1292
    %3276 = vmatpush.bf16.msra.mxu0 %v1288
    %3277 = vmatmul.bf16.gmra.mxu0 %v2955
    %v3278 = vpop.f32.mrf.mxu0
    %v3279 = vadd.f32 %v3266, %v3278
    %v3280 = vpop.f32.mrf.mxu0
    %3281 = vdwg.mxu0
    %3282 = vmatpush.bf16.msra.mxu0 %v1285
    %3283 = vmatpush.bf16.msra.mxu0 %v1281
    %3284 = vmatpush.bf16.msra.mxu0 %v1277
    %3285 = vmatpush.bf16.msra.mxu0 %v1273
    %3286 = vmatpush.bf16.msra.mxu0 %v1269
    %3287 = vmatpush.bf16.msra.mxu0 %v1265
    %3288 = vmatpush.bf16.msra.mxu0 %v1261
    %3289 = vmatpush.bf16.msra.mxu0 %v1257
    %3290 = vmatmul.bf16.gmra.mxu0 %v3255
    %v3291 = vpop.f32.mrf.mxu0
    %v3292 = vadd.f32 %v1061, %v3291
    %v3293 = vpop.f32.mrf.mxu0
    %3294 = vdwg.mxu0
    %3295 = vmatpush.bf16.msra.mxu0 %v1317
    %3296 = vmatpush.bf16.msra.mxu0 %v1313
    %3297 = vmatpush.bf16.msra.mxu0 %v1309
    %3298 = vmatpush.bf16.msra.mxu0 %v1305
    %3299 = vmatpush.bf16.msra.mxu0 %v1301
    %3300 = vmatpush.bf16.msra.mxu0 %v1297
    %3301 = vmatpush.bf16.msra.mxu0 %v1293
    %3302 = vmatpush.bf16.msra.mxu0 %v1289
    %3303 = vmatmul.bf16.gmra.mxu0 %v2955
    %v3304 = vpop.f32.mrf.mxu0
    %v3305 = vadd.f32 %v3292, %v3304
    %v3306 = vpop.f32.mrf.mxu0
    %3307 = vdwg.mxu0
    %3308 = vmatpush.bf16.msra.mxu0 %v1286
    %3309 = vmatpush.bf16.msra.mxu0 %v1282
    %3310 = vmatpush.bf16.msra.mxu0 %v1278
    %3311 = vmatpush.bf16.msra.mxu0 %v1274
    %3312 = vmatpush.bf16.msra.mxu0 %v1270
    %3313 = vmatpush.bf16.msra.mxu0 %v1266
    %3314 = vmatpush.bf16.msra.mxu0 %v1262
    %3315 = vmatpush.bf16.msra.mxu0 %v1258
    %3316 = vmatmul.bf16.gmra.mxu0 %v3255
    %v3317 = vpop.f32.mrf.mxu0
    %v3318 = vadd.f32 %v1062, %v3317
    %v3319 = vpop.f32.mrf.mxu0
    %3320 = vdwg.mxu0
    %3321 = vmatpush.bf16.msra.mxu0 %v1318
    %3322 = vmatpush.bf16.msra.mxu0 %v1314
    %3323 = vmatpush.bf16.msra.mxu0 %v1310
    %3324 = vmatpush.bf16.msra.mxu0 %v1306
    %3325 = vmatpush.bf16.msra.mxu0 %v1302
    %3326 = vmatpush.bf16.msra.mxu0 %v1298
    %3327 = vmatpush.bf16.msra.mxu0 %v1294
    %3328 = vmatpush.bf16.msra.mxu0 %v1290
    %3329 = vmatmul.bf16.gmra.mxu0 %v2955
    %v3330 = vpop.f32.mrf.mxu0
    %v3331 = vadd.f32 %v3318, %v3330
    %v3332 = vpop.f32.mrf.mxu0
    %3333 = vdwg.mxu0
    %3334 = vmatpush.bf16.msra.mxu0 %v1287
    %3335 = vmatpush.bf16.msra.mxu0 %v1283
    %3336 = vmatpush.bf16.msra.mxu0 %v1279
    %3337 = vmatpush.bf16.msra.mxu0 %v1275
    %3338 = vmatpush.bf16.msra.mxu0 %v1271
    %3339 = vmatpush.bf16.msra.mxu0 %v1267
    %3340 = vmatpush.bf16.msra.mxu0 %v1263
    %3341 = vmatpush.bf16.msra.mxu0 %v1259
    %3342 = vmatmul.bf16.gmra.mxu0 %v3255
    %v3343 = vpop.f32.mrf.mxu0
    %v3344 = vadd.f32 %v1063, %v3343
    %v3345 = vpop.f32.mrf.mxu0
    %3346 = vdwg.mxu0
    %3347 = vmatpush.bf16.msra.mxu0 %v1319
    %3348 = vmatpush.bf16.msra.mxu0 %v1315
    %3349 = vmatpush.bf16.msra.mxu0 %v1311
    %3350 = vmatpush.bf16.msra.mxu0 %v1307
    %3351 = vmatpush.bf16.msra.mxu0 %v1303
    %3352 = vmatpush.bf16.msra.mxu0 %v1299
    %3353 = vmatpush.bf16.msra.mxu0 %v1295
    %3354 = vmatpush.bf16.msra.mxu0 %v1291
    %3355 = vmatmul.bf16.gmra.mxu0 %v2955
    %v3356 = vpop.f32.mrf.mxu0
    %v3357 = vadd.f32 %v3344, %v3356
    %v3358 = vpop.f32.mrf.mxu0
    %3359 = vdwg.mxu0
    %v3360 = vxor.u32 %v3279, 2147483648
    %v3361 = vxor.u32 %v3305, 2147483648
    %v3362 = vxor.u32 %v3331, 2147483648
    %v3363 = vmul.f32 %v3360, 1.442695
    %v3364 = vpow.pop %v3363
    %v3365 = vmul.f32 %v3361, 1.442695
    %v3366 = vpow.pop %v3365
    %v3367 = vmul.f32 %v3362, 1.442695
    %v3368 = vpow.pop %v3367
    %v3369 = vadd.f32 %v3364, 1.0
    %v3370 = vadd.f32 %v3366, 1.0
    %v3371 = vadd.f32 %v3368, 1.0
    %v3372 = vrcp.pop %v3369
    %v3373 = vmul.f32 %v3369, %v3372
    %v3374 = vsub.f32 1.0, %v3373
    %v3375 = vmul.f32 %v3372, %v3374
    %v3376 = vadd.f32 %v3372, %v3375
    %vm3377 = vweird.f32 %v3369
    %vm3378 = vweird.f32 %v3372
    %vm3379 = vmor %vm3377, %vm3378
    %v3380 = vsel %vm3379, %v3372, %v3376
    %v3381 = vand.u32 2147483647, %v3369
    %vm3382 = vcmp.eq.f32.partialorder %v3381, 8.507059e+37
    %v3383 = vand.u32 %v3369, 2147483648
    %v3384 = vor.u32 1.1754944e-38, %v3383
    %v3385 = vsel %vm3382, %v3384, %v3380
    %v3386 = vmul.f32 1.0, %v3385
    %v3387 = vrcp.pop %v3370
    %v3388 = vmul.f32 %v3370, %v3387
    %v3389 = vsub.f32 1.0, %v3388
    %v3390 = vmul.f32 %v3387, %v3389
    %v3391 = vadd.f32 %v3387, %v3390
    %vm3392 = vweird.f32 %v3370
    %vm3393 = vweird.f32 %v3387
    %vm3394 = vmor %vm3392, %vm3393
    %v3395 = vsel %vm3394, %v3387, %v3391
    %v3396 = vand.u32 2147483647, %v3370
    %vm3397 = vcmp.eq.f32.partialorder %v3396, 8.507059e+37
    %v3398 = vand.u32 %v3370, 2147483648
    %v3399 = vor.u32 1.1754944e-38, %v3398
    %v3400 = vsel %vm3397, %v3399, %v3395
    %v3401 = vmul.f32 1.0, %v3400
    %v3402 = vrcp.pop %v3371
    %v3403 = vmul.f32 %v3371, %v3402
    %v3404 = vsub.f32 1.0, %v3403
    %v3405 = vmul.f32 %v3402, %v3404
    %v3406 = vadd.f32 %v3402, %v3405
    %vm3407 = vweird.f32 %v3371
    %vm3408 = vweird.f32 %v3402
    %vm3409 = vmor %vm3407, %vm3408
    %v3410 = vsel %vm3409, %v3402, %v3406
    %v3411 = vand.u32 2147483647, %v3371
    %vm3412 = vcmp.eq.f32.partialorder %v3411, 8.507059e+37
    %v3413 = vand.u32 %v3371, 2147483648
    %v3414 = vor.u32 1.1754944e-38, %v3413
    %v3415 = vsel %vm3412, %v3414, %v3410
    %v3416 = vmul.f32 1.0, %v3415
    %v3417 = vtanh.pop %v3357
    %v3418 = vmul.f32 %v3401, %v2952
    %v3419 = vmul.f32 %v3386, %v3417
    %v3420 = vadd.f32 %v3418, %v3419
    %v3421 = vtanh.pop %v3420
    %v3422 = vmul.f32 %v3416, %v3421
    %v3423 = vpack.c.bf16 %v3422, %v3422
    %3424 = vset.pattern.permute.xlu0 5
    %3425 = vperm.xlu0 %3424, %v103
    %v3426 = vpop.permute.xlu0 %3425
    %v3428 = vmul.f32 %v3426, %v104
    %v3429 = vmul.f32 %v3426, %v105
    %v3430 = vmul.f32 %v3426, %v106
    %v3431 = vmul.f32 %v3426, %v107
    %3432 = vmatpush.bf16.msra.mxu0 %v273
    %3433 = vmatpush.bf16.msra.mxu0 %v269
    %3434 = vmatpush.bf16.msra.mxu0 %v265
    %3435 = vmatpush.bf16.msra.mxu0 %v261
    %3436 = vmatpush.bf16.msra.mxu0 %v257
    %3437 = vmatpush.bf16.msra.mxu0 %v253
    %3438 = vmatpush.bf16.msra.mxu0 %v249
    %3439 = vmatpush.bf16.msra.mxu0 %v245
    %3440 = vmatmul.bf16.gmra.mxu0 %v3087
    %v3441 = vpop.f32.mrf.mxu0
    %v3442 = vadd.f32 0.0, %v3441
    %v3443 = vpop.f32.mrf.mxu0
    %3444 = vdwg.mxu0
    %3445 = vmatpush.bf16.msra.mxu0 %v274
    %3446 = vmatpush.bf16.msra.mxu0 %v270
    %3447 = vmatpush.bf16.msra.mxu0 %v266
    %3448 = vmatpush.bf16.msra.mxu0 %v262
    %3449 = vmatpush.bf16.msra.mxu0 %v258
    %3450 = vmatpush.bf16.msra.mxu0 %v254
    %3451 = vmatpush.bf16.msra.mxu0 %v250
    %3452 = vmatpush.bf16.msra.mxu0 %v246
    %3453 = vmatmul.bf16.gmra.mxu0 %v3087
    %v3454 = vpop.f32.mrf.mxu0
    %v3455 = vadd.f32 0.0, %v3454
    %v3456 = vpop.f32.mrf.mxu0
    %3457 = vdwg.mxu0
    %3458 = vmatpush.bf16.msra.mxu0 %v275
    %3459 = vmatpush.bf16.msra.mxu0 %v271
    %3460 = vmatpush.bf16.msra.mxu0 %v267
    %3461 = vmatpush.bf16.msra.mxu0 %v263
    %3462 = vmatpush.bf16.msra.mxu0 %v259
    %3463 = vmatpush.bf16.msra.mxu0 %v255
    %3464 = vmatpush.bf16.msra.mxu0 %v251
    %3465 = vmatpush.bf16.msra.mxu0 %v247
    %3466 = vmatmul.bf16.gmra.mxu0 %v3087
    %v3467 = vpop.f32.mrf.mxu0
    %v3468 = vadd.f32 0.0, %v3467
    %v3469 = vpop.f32.mrf.mxu0
    %3470 = vdwg.mxu0
    %3471 = vmatpush.bf16.msra.mxu0 %v276
    %3472 = vmatpush.bf16.msra.mxu0 %v272
    %3473 = vmatpush.bf16.msra.mxu0 %v268
    %3474 = vmatpush.bf16.msra.mxu0 %v264
    %3475 = vmatpush.bf16.msra.mxu0 %v260
    %3476 = vmatpush.bf16.msra.mxu0 %v256
    %3477 = vmatpush.bf16.msra.mxu0 %v252
    %3478 = vmatpush.bf16.msra.mxu0 %v248
    %3479 = vmatmul.bf16.gmra.mxu0 %v3087
    %v3480 = vpop.f32.mrf.mxu0
    %v3481 = vadd.f32 0.0, %v3480
    %v3482 = vpop.f32.mrf.mxu0
    %3483 = vdwg.mxu0
    %v3484 = vadd.f32 %v3428, %v3442
    %v3485 = vadd.f32 %v3429, %v3455
    %v3486 = vadd.f32 %v3430, %v3468
    %v3487 = vadd.f32 %v3431, %v3481
    %v3488 = vadd.f32 %v3484, %v365
    %v3489 = vadd.f32 %v3485, %v366
    %v3490 = vadd.f32 %v3486, %v367
    %v3491 = vadd.f32 %v3487, %v368
    %v3492 = vxor.u32 %v3488, 2147483648
    %v3493 = vxor.u32 %v3489, 2147483648
    %v3494 = vxor.u32 %v3490, 2147483648
    %v3495 = vmul.f32 %v3492, 1.442695
    %v3496 = vpow.pop %v3495
    %v3497 = vmul.f32 %v3493, 1.442695
    %v3498 = vpow.pop %v3497
    %v3499 = vmul.f32 %v3494, 1.442695
    %v3500 = vpow.pop %v3499
    %v3501 = vadd.f32 %v3496, 1.0
    %v3502 = vadd.f32 %v3498, 1.0
    %v3503 = vadd.f32 %v3500, 1.0
    %v3504 = vrcp.pop %v3501
    %v3505 = vmul.f32 %v3501, %v3504
    %v3506 = vsub.f32 1.0, %v3505
    %v3507 = vmul.f32 %v3504, %v3506
    %v3508 = vadd.f32 %v3504, %v3507
    %vm3509 = vweird.f32 %v3501
    %vm3510 = vweird.f32 %v3504
    %vm3511 = vmor %vm3509, %vm3510
    %v3512 = vsel %vm3511, %v3504, %v3508
    %v3513 = vand.u32 2147483647, %v3501
    %vm3514 = vcmp.eq.f32.partialorder %v3513, 8.507059e+37
    %v3515 = vand.u32 %v3501, 2147483648
    %v3516 = vor.u32 1.1754944e-38, %v3515
    %v3517 = vsel %vm3514, %v3516, %v3512
    %v3518 = vmul.f32 1.0, %v3517
    %v3519 = vrcp.pop %v3502
    %v3520 = vmul.f32 %v3502, %v3519
    %v3521 = vsub.f32 1.0, %v3520
    %v3522 = vmul.f32 %v3519, %v3521
    %v3523 = vadd.f32 %v3519, %v3522
    %vm3524 = vweird.f32 %v3502
    %vm3525 = vweird.f32 %v3519
    %vm3526 = vmor %vm3524, %vm3525
    %v3527 = vsel %vm3526, %v3519, %v3523
    %v3528 = vand.u32 2147483647, %v3502
    %vm3529 = vcmp.eq.f32.partialorder %v3528, 8.507059e+37
    %v3530 = vand.u32 %v3502, 2147483648
    %v3531 = vor.u32 1.1754944e-38, %v3530
    %v3532 = vsel %vm3529, %v3531, %v3527
    %v3533 = vmul.f32 1.0, %v3532
    %v3534 = vrcp.pop %v3503
    %v3535 = vmul.f32 %v3503, %v3534
    %v3536 = vsub.f32 1.0, %v3535
    %v3537 = vmul.f32 %v3534, %v3536
    %v3538 = vadd.f32 %v3534, %v3537
    %vm3539 = vweird.f32 %v3503
    %vm3540 = vweird.f32 %v3534
    %vm3541 = vmor %vm3539, %vm3540
    %v3542 = vsel %vm3541, %v3534, %v3538
    %v3543 = vand.u32 2147483647, %v3503
    %vm3544 = vcmp.eq.f32.partialorder %v3543, 8.507059e+37
    %v3545 = vand.u32 %v3503, 2147483648
    %v3546 = vor.u32 1.1754944e-38, %v3545
    %v3547 = vsel %vm3544, %v3546, %v3542
    %v3548 = vmul.f32 1.0, %v3547
    %v3549 = vtanh.pop %v3491
    %v3550 = vmul.f32 %v3533, %v3084
    %v3551 = vmul.f32 %v3518, %v3549
    %v3552 = vadd.f32 %v3550, %v3551
    %v3553 = vtanh.pop %v3552
    %v3554 = vmul.f32 %v3548, %v3553
    %v3555 = vpack.c.bf16 %v3554, %v3554
    %3556 = vmatpush.bf16.msra.mxu0 %v726
    %3557 = vmatpush.bf16.msra.mxu0 %v722
    %3558 = vmatpush.bf16.msra.mxu0 %v718
    %3559 = vmatpush.bf16.msra.mxu0 %v714
    %3560 = vmatpush.bf16.msra.mxu0 %v710
    %3561 = vmatpush.bf16.msra.mxu0 %v706
    %3562 = vmatpush.bf16.msra.mxu0 %v702
    %3563 = vmatpush.bf16.msra.mxu0 %v698
    %3564 = vmatmul.bf16.gmra.mxu0 %v3555
    %v3565 = vpop.f32.mrf.mxu0
    %v3566 = vadd.f32 %v502, %v3565
    %v3567 = vpop.f32.mrf.mxu0
    %3568 = vdwg.mxu0
    %3569 = vmatpush.bf16.msra.mxu0 %v758
    %3570 = vmatpush.bf16.msra.mxu0 %v754
    %3571 = vmatpush.bf16.msra.mxu0 %v750
    %3572 = vmatpush.bf16.msra.mxu0 %v746
    %3573 = vmatpush.bf16.msra.mxu0 %v742
    %3574 = vmatpush.bf16.msra.mxu0 %v738
    %3575 = vmatpush.bf16.msra.mxu0 %v734
    %3576 = vmatpush.bf16.msra.mxu0 %v730
    %3577 = vmatmul.bf16.gmra.mxu0 %v3255
    %v3578 = vpop.f32.mrf.mxu0
    %v3579 = vadd.f32 %v3566, %v3578
    %v3580 = vpop.f32.mrf.mxu0
    %3581 = vdwg.mxu0
    %3582 = vmatpush.bf16.msra.mxu0 %v727
    %3583 = vmatpush.bf16.msra.mxu0 %v723
    %3584 = vmatpush.bf16.msra.mxu0 %v719
    %3585 = vmatpush.bf16.msra.mxu0 %v715
    %3586 = vmatpush.bf16.msra.mxu0 %v711
    %3587 = vmatpush.bf16.msra.mxu0 %v707
    %3588 = vmatpush.bf16.msra.mxu0 %v703
    %3589 = vmatpush.bf16.msra.mxu0 %v699
    %3590 = vmatmul.bf16.gmra.mxu0 %v3555
    %v3591 = vpop.f32.mrf.mxu0
    %v3592 = vadd.f32 %v503, %v3591
    %v3593 = vpop.f32.mrf.mxu0
    %3594 = vdwg.mxu0
    %3595 = vmatpush.bf16.msra.mxu0 %v759
    %3596 = vmatpush.bf16.msra.mxu0 %v755
    %3597 = vmatpush.bf16.msra.mxu0 %v751
    %3598 = vmatpush.bf16.msra.mxu0 %v747
    %3599 = vmatpush.bf16.msra.mxu0 %v743
    %3600 = vmatpush.bf16.msra.mxu0 %v739
    %3601 = vmatpush.bf16.msra.mxu0 %v735
    %3602 = vmatpush.bf16.msra.mxu0 %v731
    %3603 = vmatmul.bf16.gmra.mxu0 %v3255
    %v3604 = vpop.f32.mrf.mxu0
    %v3605 = vadd.f32 %v3592, %v3604
    %v3606 = vpop.f32.mrf.mxu0
    %3607 = vdwg.mxu0
    %3608 = vmatpush.bf16.msra.mxu0 %v728
    %3609 = vmatpush.bf16.msra.mxu0 %v724
    %3610 = vmatpush.bf16.msra.mxu0 %v720
    %3611 = vmatpush.bf16.msra.mxu0 %v716
    %3612 = vmatpush.bf16.msra.mxu0 %v712
    %3613 = vmatpush.bf16.msra.mxu0 %v708
    %3614 = vmatpush.bf16.msra.mxu0 %v704
    %3615 = vmatpush.bf16.msra.mxu0 %v700
    %3616 = vmatmul.bf16.gmra.mxu0 %v3555
    %v3617 = vpop.f32.mrf.mxu0
    %v3618 = vadd.f32 %v504, %v3617
    %v3619 = vpop.f32.mrf.mxu0
    %3620 = vdwg.mxu0
    %3621 = vmatpush.bf16.msra.mxu0 %v760
    %3622 = vmatpush.bf16.msra.mxu0 %v756
    %3623 = vmatpush.bf16.msra.mxu0 %v752
    %3624 = vmatpush.bf16.msra.mxu0 %v748
    %3625 = vmatpush.bf16.msra.mxu0 %v744
    %3626 = vmatpush.bf16.msra.mxu0 %v740
    %3627 = vmatpush.bf16.msra.mxu0 %v736
    %3628 = vmatpush.bf16.msra.mxu0 %v732
    %3629 = vmatmul.bf16.gmra.mxu0 %v3255
    %v3630 = vpop.f32.mrf.mxu0
    %v3631 = vadd.f32 %v3618, %v3630
    %v3632 = vpop.f32.mrf.mxu0
    %3633 = vdwg.mxu0
    %3634 = vmatpush.bf16.msra.mxu0 %v729
    %3635 = vmatpush.bf16.msra.mxu0 %v725
    %3636 = vmatpush.bf16.msra.mxu0 %v721
    %3637 = vmatpush.bf16.msra.mxu0 %v717
    %3638 = vmatpush.bf16.msra.mxu0 %v713
    %3639 = vmatpush.bf16.msra.mxu0 %v709
    %3640 = vmatpush.bf16.msra.mxu0 %v705
    %3641 = vmatpush.bf16.msra.mxu0 %v701
    %3642 = vmatmul.bf16.gmra.mxu0 %v3555
    %v3643 = vpop.f32.mrf.mxu0
    %v3644 = vadd.f32 %v505, %v3643
    %v3645 = vpop.f32.mrf.mxu0
    %3646 = vdwg.mxu0
    %3647 = vmatpush.bf16.msra.mxu0 %v761
    %3648 = vmatpush.bf16.msra.mxu0 %v757
    %3649 = vmatpush.bf16.msra.mxu0 %v753
    %3650 = vmatpush.bf16.msra.mxu0 %v749
    %3651 = vmatpush.bf16.msra.mxu0 %v745
    %3652 = vmatpush.bf16.msra.mxu0 %v741
    %3653 = vmatpush.bf16.msra.mxu0 %v737
    %3654 = vmatpush.bf16.msra.mxu0 %v733
    %3655 = vmatmul.bf16.gmra.mxu0 %v3255
    %v3656 = vpop.f32.mrf.mxu0
    %v3657 = vadd.f32 %v3644, %v3656
    %v3658 = vpop.f32.mrf.mxu0
    %3659 = vdwg.mxu0
    %v3660 = vxor.u32 %v3579, 2147483648
    %v3661 = vxor.u32 %v3605, 2147483648
    %v3662 = vxor.u32 %v3631, 2147483648
    %v3663 = vmul.f32 %v3660, 1.442695
    %v3664 = vpow.pop %v3663
    %v3665 = vmul.f32 %v3661, 1.442695
    %v3666 = vpow.pop %v3665
    %v3667 = vmul.f32 %v3662, 1.442695
    %v3668 = vpow.pop %v3667
    %v3669 = vadd.f32 %v3664, 1.0
    %v3670 = vadd.f32 %v3666, 1.0
    %v3671 = vadd.f32 %v3668, 1.0
    %v3672 = vrcp.pop %v3669
    %v3673 = vmul.f32 %v3669, %v3672
    %v3674 = vsub.f32 1.0, %v3673
    %v3675 = vmul.f32 %v3672, %v3674
    %v3676 = vadd.f32 %v3672, %v3675
    %vm3677 = vweird.f32 %v3669
    %vm3678 = vweird.f32 %v3672
    %vm3679 = vmor %vm3677, %vm3678
    %v3680 = vsel %vm3679, %v3672, %v3676
    %v3681 = vand.u32 2147483647, %v3669
    %vm3682 = vcmp.eq.f32.partialorder %v3681, 8.507059e+37
    %v3683 = vand.u32 %v3669, 2147483648
    %v3684 = vor.u32 1.1754944e-38, %v3683
    %v3685 = vsel %vm3682, %v3684, %v3680
    %v3686 = vmul.f32 1.0, %v3685
    %v3687 = vrcp.pop %v3670
    %v3688 = vmul.f32 %v3670, %v3687
    %v3689 = vsub.f32 1.0, %v3688
    %v3690 = vmul.f32 %v3687, %v3689
    %v3691 = vadd.f32 %v3687, %v3690
    %vm3692 = vweird.f32 %v3670
    %vm3693 = vweird.f32 %v3687
    %vm3694 = vmor %vm3692, %vm3693
    %v3695 = vsel %vm3694, %v3687, %v3691
    %v3696 = vand.u32 2147483647, %v3670
    %vm3697 = vcmp.eq.f32.partialorder %v3696, 8.507059e+37
    %v3698 = vand.u32 %v3670, 2147483648
    %v3699 = vor.u32 1.1754944e-38, %v3698
    %v3700 = vsel %vm3697, %v3699, %v3695
    %v3701 = vmul.f32 1.0, %v3700
    %v3702 = vrcp.pop %v3671
    %v3703 = vmul.f32 %v3671, %v3702
    %v3704 = vsub.f32 1.0, %v3703
    %v3705 = vmul.f32 %v3702, %v3704
    %v3706 = vadd.f32 %v3702, %v3705
    %vm3707 = vweird.f32 %v3671
    %vm3708 = vweird.f32 %v3702
    %vm3709 = vmor %vm3707, %vm3708
    %v3710 = vsel %vm3709, %v3702, %v3706
    %v3711 = vand.u32 2147483647, %v3671
    %vm3712 = vcmp.eq.f32.partialorder %v3711, 8.507059e+37
    %v3713 = vand.u32 %v3671, 2147483648
    %v3714 = vor.u32 1.1754944e-38, %v3713
    %v3715 = vsel %vm3712, %v3714, %v3710
    %v3716 = vmul.f32 1.0, %v3715
    %v3717 = vtanh.pop %v3657
    %v3718 = vmul.f32 %v3701, %v3252
    %v3719 = vmul.f32 %v3686, %v3717
    %v3720 = vadd.f32 %v3718, %v3719
    %v3721 = vtanh.pop %v3720
    %v3722 = vmul.f32 %v3716, %v3721
    %v3723 = vpack.c.bf16 %v3722, %v3722
    %3724 = vmatpush.bf16.msra.mxu0 %v1284
    %3725 = vmatpush.bf16.msra.mxu0 %v1280
    %3726 = vmatpush.bf16.msra.mxu0 %v1276
    %3727 = vmatpush.bf16.msra.mxu0 %v1272
    %3728 = vmatpush.bf16.msra.mxu0 %v1268
    %3729 = vmatpush.bf16.msra.mxu0 %v1264
    %3730 = vmatpush.bf16.msra.mxu0 %v1260
    %3731 = vmatpush.bf16.msra.mxu0 %v1256
    %3732 = vmatmul.bf16.gmra.mxu0 %v3723
    %v3733 = vpop.f32.mrf.mxu0
    %v3734 = vadd.f32 %v1060, %v3733
    %v3735 = vpop.f32.mrf.mxu0
    %3736 = vdwg.mxu0
    %3737 = vmatpush.bf16.msra.mxu0 %v1316
    %3738 = vmatpush.bf16.msra.mxu0 %v1312
    %3739 = vmatpush.bf16.msra.mxu0 %v1308
    %3740 = vmatpush.bf16.msra.mxu0 %v1304
    %3741 = vmatpush.bf16.msra.mxu0 %v1300
    %3742 = vmatpush.bf16.msra.mxu0 %v1296
    %3743 = vmatpush.bf16.msra.mxu0 %v1292
    %3744 = vmatpush.bf16.msra.mxu0 %v1288
    %3745 = vmatmul.bf16.gmra.mxu0 %v3423
    %v3746 = vpop.f32.mrf.mxu0
    %v3747 = vadd.f32 %v3734, %v3746
    %v3748 = vpop.f32.mrf.mxu0
    %3749 = vdwg.mxu0
    %3750 = vmatpush.bf16.msra.mxu0 %v1285
    %3751 = vmatpush.bf16.msra.mxu0 %v1281
    %3752 = vmatpush.bf16.msra.mxu0 %v1277
    %3753 = vmatpush.bf16.msra.mxu0 %v1273
    %3754 = vmatpush.bf16.msra.mxu0 %v1269
    %3755 = vmatpush.bf16.msra.mxu0 %v1265
    %3756 = vmatpush.bf16.msra.mxu0 %v1261
    %3757 = vmatpush.bf16.msra.mxu0 %v1257
    %3758 = vmatmul.bf16.gmra.mxu0 %v3723
    %v3759 = vpop.f32.mrf.mxu0
    %v3760 = vadd.f32 %v1061, %v3759
    %v3761 = vpop.f32.mrf.mxu0
    %3762 = vdwg.mxu0
    %3763 = vmatpush.bf16.msra.mxu0 %v1317
    %3764 = vmatpush.bf16.msra.mxu0 %v1313
    %3765 = vmatpush.bf16.msra.mxu0 %v1309
    %3766 = vmatpush.bf16.msra.mxu0 %v1305
    %3767 = vmatpush.bf16.msra.mxu0 %v1301
    %3768 = vmatpush.bf16.msra.mxu0 %v1297
    %3769 = vmatpush.bf16.msra.mxu0 %v1293
    %3770 = vmatpush.bf16.msra.mxu0 %v1289
    %3771 = vmatmul.bf16.gmra.mxu0 %v3423
    %v3772 = vpop.f32.mrf.mxu0
    %v3773 = vadd.f32 %v3760, %v3772
    %v3774 = vpop.f32.mrf.mxu0
    %3775 = vdwg.mxu0
    %3776 = vmatpush.bf16.msra.mxu0 %v1286
    %3777 = vmatpush.bf16.msra.mxu0 %v1282
    %3778 = vmatpush.bf16.msra.mxu0 %v1278
    %3779 = vmatpush.bf16.msra.mxu0 %v1274
    %3780 = vmatpush.bf16.msra.mxu0 %v1270
    %3781 = vmatpush.bf16.msra.mxu0 %v1266
    %3782 = vmatpush.bf16.msra.mxu0 %v1262
    %3783 = vmatpush.bf16.msra.mxu0 %v1258
    %3784 = vmatmul.bf16.gmra.mxu0 %v3723
    %v3785 = vpop.f32.mrf.mxu0
    %v3786 = vadd.f32 %v1062, %v3785
    %v3787 = vpop.f32.mrf.mxu0
    %3788 = vdwg.mxu0
    %3789 = vmatpush.bf16.msra.mxu0 %v1318
    %3790 = vmatpush.bf16.msra.mxu0 %v1314
    %3791 = vmatpush.bf16.msra.mxu0 %v1310
    %3792 = vmatpush.bf16.msra.mxu0 %v1306
    %3793 = vmatpush.bf16.msra.mxu0 %v1302
    %3794 = vmatpush.bf16.msra.mxu0 %v1298
    %3795 = vmatpush.bf16.msra.mxu0 %v1294
    %3796 = vmatpush.bf16.msra.mxu0 %v1290
    %3797 = vmatmul.bf16.gmra.mxu0 %v3423
    %v3798 = vpop.f32.mrf.mxu0
    %v3799 = vadd.f32 %v3786, %v3798
    %v3800 = vpop.f32.mrf.mxu0
    %3801 = vdwg.mxu0
    %3802 = vmatpush.bf16.msra.mxu0 %v1287
    %3803 = vmatpush.bf16.msra.mxu0 %v1283
    %3804 = vmatpush.bf16.msra.mxu0 %v1279
    %3805 = vmatpush.bf16.msra.mxu0 %v1275
    %3806 = vmatpush.bf16.msra.mxu0 %v1271
    %3807 = vmatpush.bf16.msra.mxu0 %v1267
    %3808 = vmatpush.bf16.msra.mxu0 %v1263
    %3809 = vmatpush.bf16.msra.mxu0 %v1259
    %3810 = vmatmul.bf16.gmra.mxu0 %v3723
    %v3811 = vpop.f32.mrf.mxu0
    %v3812 = vadd.f32 %v1063, %v3811
    %v3813 = vpop.f32.mrf.mxu0
    %3814 = vdwg.mxu0
    %3815 = vmatpush.bf16.msra.mxu0 %v1319
    %3816 = vmatpush.bf16.msra.mxu0 %v1315
    %3817 = vmatpush.bf16.msra.mxu0 %v1311
    %3818 = vmatpush.bf16.msra.mxu0 %v1307
    %3819 = vmatpush.bf16.msra.mxu0 %v1303
    %3820 = vmatpush.bf16.msra.mxu0 %v1299
    %3821 = vmatpush.bf16.msra.mxu0 %v1295
    %3822 = vmatpush.bf16.msra.mxu0 %v1291
    %3823 = vmatmul.bf16.gmra.mxu0 %v3423
    %v3824 = vpop.f32.mrf.mxu0
    %v3825 = vadd.f32 %v3812, %v3824
    %v3826 = vpop.f32.mrf.mxu0
    %3827 = vdwg.mxu0
    %v3828 = vxor.u32 %v3747, 2147483648
    %v3829 = vxor.u32 %v3773, 2147483648
    %v3830 = vxor.u32 %v3799, 2147483648
    %v3831 = vmul.f32 %v3828, 1.442695
    %v3832 = vpow.pop %v3831
    %v3833 = vmul.f32 %v3829, 1.442695
    %v3834 = vpow.pop %v3833
    %v3835 = vmul.f32 %v3830, 1.442695
    %v3836 = vpow.pop %v3835
    %v3837 = vadd.f32 %v3832, 1.0
    %v3838 = vadd.f32 %v3834, 1.0
    %v3839 = vadd.f32 %v3836, 1.0
    %v3840 = vrcp.pop %v3837
    %v3841 = vmul.f32 %v3837, %v3840
    %v3842 = vsub.f32 1.0, %v3841
    %v3843 = vmul.f32 %v3840, %v3842
    %v3844 = vadd.f32 %v3840, %v3843
    %vm3845 = vweird.f32 %v3837
    %vm3846 = vweird.f32 %v3840
    %vm3847 = vmor %vm3845, %vm3846
    %v3848 = vsel %vm3847, %v3840, %v3844
    %v3849 = vand.u32 2147483647, %v3837
    %vm3850 = vcmp.eq.f32.partialorder %v3849, 8.507059e+37
    %v3851 = vand.u32 %v3837, 2147483648
    %v3852 = vor.u32 1.1754944e-38, %v3851
    %v3853 = vsel %vm3850, %v3852, %v3848
    %v3854 = vmul.f32 1.0, %v3853
    %v3855 = vrcp.pop %v3838
    %v3856 = vmul.f32 %v3838, %v3855
    %v3857 = vsub.f32 1.0, %v3856
    %v3858 = vmul.f32 %v3855, %v3857
    %v3859 = vadd.f32 %v3855, %v3858
    %vm3860 = vweird.f32 %v3838
    %vm3861 = vweird.f32 %v3855
    %vm3862 = vmor %vm3860, %vm3861
    %v3863 = vsel %vm3862, %v3855, %v3859
    %v3864 = vand.u32 2147483647, %v3838
    %vm3865 = vcmp.eq.f32.partialorder %v3864, 8.507059e+37
    %v3866 = vand.u32 %v3838, 2147483648
    %v3867 = vor.u32 1.1754944e-38, %v3866
    %v3868 = vsel %vm3865, %v3867, %v3863
    %v3869 = vmul.f32 1.0, %v3868
    %v3870 = vrcp.pop %v3839
    %v3871 = vmul.f32 %v3839, %v3870
    %v3872 = vsub.f32 1.0, %v3871
    %v3873 = vmul.f32 %v3870, %v3872
    %v3874 = vadd.f32 %v3870, %v3873
    %vm3875 = vweird.f32 %v3839
    %vm3876 = vweird.f32 %v3870
    %vm3877 = vmor %vm3875, %vm3876
    %v3878 = vsel %vm3877, %v3870, %v3874
    %v3879 = vand.u32 2147483647, %v3839
    %vm3880 = vcmp.eq.f32.partialorder %v3879, 8.507059e+37
    %v3881 = vand.u32 %v3839, 2147483648
    %v3882 = vor.u32 1.1754944e-38, %v3881
    %v3883 = vsel %vm3880, %v3882, %v3878
    %v3884 = vmul.f32 1.0, %v3883
    %v3885 = vtanh.pop %v3825
    %v3886 = vmul.f32 %v3869, %v3420
    %v3887 = vmul.f32 %v3854, %v3885
    %v3888 = vadd.f32 %v3886, %v3887
    %v3889 = vtanh.pop %v3888
    %v3890 = vmul.f32 %v3884, %v3889
    %v3891 = vpack.c.bf16 %v3890, %v3890
    %3892 = vset.pattern.permute.xlu0 6
    %3893 = vperm.xlu0 %3892, %v103
    %v3894 = vpop.permute.xlu0 %3893
    %v3896 = vmul.f32 %v3894, %v104
    %v3897 = vmul.f32 %v3894, %v105
    %v3898 = vmul.f32 %v3894, %v106
    %v3899 = vmul.f32 %v3894, %v107
    %3900 = vmatpush.bf16.msra.mxu0 %v273
    %3901 = vmatpush.bf16.msra.mxu0 %v269
    %3902 = vmatpush.bf16.msra.mxu0 %v265
    %3903 = vmatpush.bf16.msra.mxu0 %v261
    %3904 = vmatpush.bf16.msra.mxu0 %v257
    %3905 = vmatpush.bf16.msra.mxu0 %v253
    %3906 = vmatpush.bf16.msra.mxu0 %v249
    %3907 = vmatpush.bf16.msra.mxu0 %v245
    %3908 = vmatmul.bf16.gmra.mxu0 %v3555
    %v3909 = vpop.f32.mrf.mxu0
    %v3910 = vadd.f32 0.0, %v3909
    %v3911 = vpop.f32.mrf.mxu0
    %3912 = vdwg.mxu0
    %3913 = vmatpush.bf16.msra.mxu0 %v274
    %3914 = vmatpush.bf16.msra.mxu0 %v270
    %3915 = vmatpush.bf16.msra.mxu0 %v266
    %3916 = vmatpush.bf16.msra.mxu0 %v262
    %3917 = vmatpush.bf16.msra.mxu0 %v258
    %3918 = vmatpush.bf16.msra.mxu0 %v254
    %3919 = vmatpush.bf16.msra.mxu0 %v250
    %3920 = vmatpush.bf16.msra.mxu0 %v246
    %3921 = vmatmul.bf16.gmra.mxu0 %v3555
    %v3922 = vpop.f32.mrf.mxu0
    %v3923 = vadd.f32 0.0, %v3922
    %v3924 = vpop.f32.mrf.mxu0
    %3925 = vdwg.mxu0
    %3926 = vmatpush.bf16.msra.mxu0 %v275
    %3927 = vmatpush.bf16.msra.mxu0 %v271
    %3928 = vmatpush.bf16.msra.mxu0 %v267
    %3929 = vmatpush.bf16.msra.mxu0 %v263
    %3930 = vmatpush.bf16.msra.mxu0 %v259
    %3931 = vmatpush.bf16.msra.mxu0 %v255
    %3932 = vmatpush.bf16.msra.mxu0 %v251
    %3933 = vmatpush.bf16.msra.mxu0 %v247
    %3934 = vmatmul.bf16.gmra.mxu0 %v3555
    %v3935 = vpop.f32.mrf.mxu0
    %v3936 = vadd.f32 0.0, %v3935
    %v3937 = vpop.f32.mrf.mxu0
    %3938 = vdwg.mxu0
    %3939 = vmatpush.bf16.msra.mxu0 %v276
    %3940 = vmatpush.bf16.msra.mxu0 %v272
    %3941 = vmatpush.bf16.msra.mxu0 %v268
    %3942 = vmatpush.bf16.msra.mxu0 %v264
    %3943 = vmatpush.bf16.msra.mxu0 %v260
    %3944 = vmatpush.bf16.msra.mxu0 %v256
    %3945 = vmatpush.bf16.msra.mxu0 %v252
    %3946 = vmatpush.bf16.msra.mxu0 %v248
    %3947 = vmatmul.bf16.gmra.mxu0 %v3555
    %v3948 = vpop.f32.mrf.mxu0
    %v3949 = vadd.f32 0.0, %v3948
    %v3950 = vpop.f32.mrf.mxu0
    %3951 = vdwg.mxu0
    %v3952 = vadd.f32 %v3896, %v3910
    %v3953 = vadd.f32 %v3897, %v3923
    %v3954 = vadd.f32 %v3898, %v3936
    %v3955 = vadd.f32 %v3899, %v3949
    %v3956 = vadd.f32 %v3952, %v365
    %v3957 = vadd.f32 %v3953, %v366
    %v3958 = vadd.f32 %v3954, %v367
    %v3959 = vadd.f32 %v3955, %v368
    %v3960 = vxor.u32 %v3956, 2147483648
    %v3961 = vxor.u32 %v3957, 2147483648
    %v3962 = vxor.u32 %v3958, 2147483648
    %v3963 = vmul.f32 %v3960, 1.442695
    %v3964 = vpow.pop %v3963
    %v3965 = vmul.f32 %v3961, 1.442695
    %v3966 = vpow.pop %v3965
    %v3967 = vmul.f32 %v3962, 1.442695
    %v3968 = vpow.pop %v3967
    %v3969 = vadd.f32 %v3964, 1.0
    %v3970 = vadd.f32 %v3966, 1.0
    %v3971 = vadd.f32 %v3968, 1.0
    %v3972 = vrcp.pop %v3969
    %v3973 = vmul.f32 %v3969, %v3972
    %v3974 = vsub.f32 1.0, %v3973
    %v3975 = vmul.f32 %v3972, %v3974
    %v3976 = vadd.f32 %v3972, %v3975
    %vm3977 = vweird.f32 %v3969
    %vm3978 = vweird.f32 %v3972
    %vm3979 = vmor %vm3977, %vm3978
    %v3980 = vsel %vm3979, %v3972, %v3976
    %v3981 = vand.u32 2147483647, %v3969
    %vm3982 = vcmp.eq.f32.partialorder %v3981, 8.507059e+37
    %v3983 = vand.u32 %v3969, 2147483648
    %v3984 = vor.u32 1.1754944e-38, %v3983
    %v3985 = vsel %vm3982, %v3984, %v3980
    %v3986 = vmul.f32 1.0, %v3985
    %v3987 = vrcp.pop %v3970
    %v3988 = vmul.f32 %v3970, %v3987
    %v3989 = vsub.f32 1.0, %v3988
    %v3990 = vmul.f32 %v3987, %v3989
    %v3991 = vadd.f32 %v3987, %v3990
    %vm3992 = vweird.f32 %v3970
    %vm3993 = vweird.f32 %v3987
    %vm3994 = vmor %vm3992, %vm3993
    %v3995 = vsel %vm3994, %v3987, %v3991
    %v3996 = vand.u32 2147483647, %v3970
    %vm3997 = vcmp.eq.f32.partialorder %v3996, 8.507059e+37
    %v3998 = vand.u32 %v3970, 2147483648
    %v3999 = vor.u32 1.1754944e-38, %v3998
    %v4000 = vsel %vm3997, %v3999, %v3995
    %v4001 = vmul.f32 1.0, %v4000
    %v4002 = vrcp.pop %v3971
    %v4003 = vmul.f32 %v3971, %v4002
    %v4004 = vsub.f32 1.0, %v4003
    %v4005 = vmul.f32 %v4002, %v4004
    %v4006 = vadd.f32 %v4002, %v4005
    %vm4007 = vweird.f32 %v3971
    %vm4008 = vweird.f32 %v4002
    %vm4009 = vmor %vm4007, %vm4008
    %v4010 = vsel %vm4009, %v4002, %v4006
    %v4011 = vand.u32 2147483647, %v3971
    %vm4012 = vcmp.eq.f32.partialorder %v4011, 8.507059e+37
    %v4013 = vand.u32 %v3971, 2147483648
    %v4014 = vor.u32 1.1754944e-38, %v4013
    %v4015 = vsel %vm4012, %v4014, %v4010
    %v4016 = vmul.f32 1.0, %v4015
    %v4017 = vtanh.pop %v3959
    %v4018 = vmul.f32 %v4001, %v3552
    %v4019 = vmul.f32 %v3986, %v4017
    %v4020 = vadd.f32 %v4018, %v4019
    %v4021 = vtanh.pop %v4020
    %v4022 = vmul.f32 %v4016, %v4021
    %v4023 = vpack.c.bf16 %v4022, %v4022
    %4024 = vmatpush.bf16.msra.mxu0 %v726
    %4025 = vmatpush.bf16.msra.mxu0 %v722
    %4026 = vmatpush.bf16.msra.mxu0 %v718
    %4027 = vmatpush.bf16.msra.mxu0 %v714
    %4028 = vmatpush.bf16.msra.mxu0 %v710
    %4029 = vmatpush.bf16.msra.mxu0 %v706
    %4030 = vmatpush.bf16.msra.mxu0 %v702
    %4031 = vmatpush.bf16.msra.mxu0 %v698
    %4032 = vmatmul.bf16.gmra.mxu0 %v4023
    %v4033 = vpop.f32.mrf.mxu0
    %v4034 = vadd.f32 %v502, %v4033
    %v4035 = vpop.f32.mrf.mxu0
    %4036 = vdwg.mxu0
    %4037 = vmatpush.bf16.msra.mxu0 %v758
    %4038 = vmatpush.bf16.msra.mxu0 %v754
    %4039 = vmatpush.bf16.msra.mxu0 %v750
    %4040 = vmatpush.bf16.msra.mxu0 %v746
    %4041 = vmatpush.bf16.msra.mxu0 %v742
    %4042 = vmatpush.bf16.msra.mxu0 %v738
    %4043 = vmatpush.bf16.msra.mxu0 %v734
    %4044 = vmatpush.bf16.msra.mxu0 %v730
    %4045 = vmatmul.bf16.gmra.mxu0 %v3723
    %v4046 = vpop.f32.mrf.mxu0
    %v4047 = vadd.f32 %v4034, %v4046
    %v4048 = vpop.f32.mrf.mxu0
    %4049 = vdwg.mxu0
    %4050 = vmatpush.bf16.msra.mxu0 %v727
    %4051 = vmatpush.bf16.msra.mxu0 %v723
    %4052 = vmatpush.bf16.msra.mxu0 %v719
    %4053 = vmatpush.bf16.msra.mxu0 %v715
    %4054 = vmatpush.bf16.msra.mxu0 %v711
    %4055 = vmatpush.bf16.msra.mxu0 %v707
    %4056 = vmatpush.bf16.msra.mxu0 %v703
    %4057 = vmatpush.bf16.msra.mxu0 %v699
    %4058 = vmatmul.bf16.gmra.mxu0 %v4023
    %v4059 = vpop.f32.mrf.mxu0
    %v4060 = vadd.f32 %v503, %v4059
    %v4061 = vpop.f32.mrf.mxu0
    %4062 = vdwg.mxu0
    %4063 = vmatpush.bf16.msra.mxu0 %v759
    %4064 = vmatpush.bf16.msra.mxu0 %v755
    %4065 = vmatpush.bf16.msra.mxu0 %v751
    %4066 = vmatpush.bf16.msra.mxu0 %v747
    %4067 = vmatpush.bf16.msra.mxu0 %v743
    %4068 = vmatpush.bf16.msra.mxu0 %v739
    %4069 = vmatpush.bf16.msra.mxu0 %v735
    %4070 = vmatpush.bf16.msra.mxu0 %v731
    %4071 = vmatmul.bf16.gmra.mxu0 %v3723
    %v4072 = vpop.f32.mrf.mxu0
    %v4073 = vadd.f32 %v4060, %v4072
    %v4074 = vpop.f32.mrf.mxu0
    %4075 = vdwg.mxu0
    %4076 = vmatpush.bf16.msra.mxu0 %v728
    %4077 = vmatpush.bf16.msra.mxu0 %v724
    %4078 = vmatpush.bf16.msra.mxu0 %v720
    %4079 = vmatpush.bf16.msra.mxu0 %v716
    %4080 = vmatpush.bf16.msra.mxu0 %v712
    %4081 = vmatpush.bf16.msra.mxu0 %v708
    %4082 = vmatpush.bf16.msra.mxu0 %v704
    %4083 = vmatpush.bf16.msra.mxu0 %v700
    %4084 = vmatmul.bf16.gmra.mxu0 %v4023
    %v4085 = vpop.f32.mrf.mxu0
    %v4086 = vadd.f32 %v504, %v4085
    %v4087 = vpop.f32.mrf.mxu0
    %4088 = vdwg.mxu0
    %4089 = vmatpush.bf16.msra.mxu0 %v760
    %4090 = vmatpush.bf16.msra.mxu0 %v756
    %4091 = vmatpush.bf16.msra.mxu0 %v752
    %4092 = vmatpush.bf16.msra.mxu0 %v748
    %4093 = vmatpush.bf16.msra.mxu0 %v744
    %4094 = vmatpush.bf16.msra.mxu0 %v740
    %4095 = vmatpush.bf16.msra.mxu0 %v736
    %4096 = vmatpush.bf16.msra.mxu0 %v732
    %4097 = vmatmul.bf16.gmra.mxu0 %v3723
    %v4098 = vpop.f32.mrf.mxu0
    %v4099 = vadd.f32 %v4086, %v4098
    %v4100 = vpop.f32.mrf.mxu0
    %4101 = vdwg.mxu0
    %4102 = vmatpush.bf16.msra.mxu0 %v729
    %4103 = vmatpush.bf16.msra.mxu0 %v725
    %4104 = vmatpush.bf16.msra.mxu0 %v721
    %4105 = vmatpush.bf16.msra.mxu0 %v717
    %4106 = vmatpush.bf16.msra.mxu0 %v713
    %4107 = vmatpush.bf16.msra.mxu0 %v709
    %4108 = vmatpush.bf16.msra.mxu0 %v705
    %4109 = vmatpush.bf16.msra.mxu0 %v701
    %4110 = vmatmul.bf16.gmra.mxu0 %v4023
    %v4111 = vpop.f32.mrf.mxu0
    %v4112 = vadd.f32 %v505, %v4111
    %v4113 = vpop.f32.mrf.mxu0
    %4114 = vdwg.mxu0
    %4115 = vmatpush.bf16.msra.mxu0 %v761
    %4116 = vmatpush.bf16.msra.mxu0 %v757
    %4117 = vmatpush.bf16.msra.mxu0 %v753
    %4118 = vmatpush.bf16.msra.mxu0 %v749
    %4119 = vmatpush.bf16.msra.mxu0 %v745
    %4120 = vmatpush.bf16.msra.mxu0 %v741
    %4121 = vmatpush.bf16.msra.mxu0 %v737
    %4122 = vmatpush.bf16.msra.mxu0 %v733
    %4123 = vmatmul.bf16.gmra.mxu0 %v3723
    %v4124 = vpop.f32.mrf.mxu0
    %v4125 = vadd.f32 %v4112, %v4124
    %v4126 = vpop.f32.mrf.mxu0
    %4127 = vdwg.mxu0
    %v4128 = vxor.u32 %v4047, 2147483648
    %v4129 = vxor.u32 %v4073, 2147483648
    %v4130 = vxor.u32 %v4099, 2147483648
    %v4131 = vmul.f32 %v4128, 1.442695
    %v4132 = vpow.pop %v4131
    %v4133 = vmul.f32 %v4129, 1.442695
    %v4134 = vpow.pop %v4133
    %v4135 = vmul.f32 %v4130, 1.442695
    %v4136 = vpow.pop %v4135
    %v4137 = vadd.f32 %v4132, 1.0
    %v4138 = vadd.f32 %v4134, 1.0
    %v4139 = vadd.f32 %v4136, 1.0
    %v4140 = vrcp.pop %v4137
    %v4141 = vmul.f32 %v4137, %v4140
    %v4142 = vsub.f32 1.0, %v4141
    %v4143 = vmul.f32 %v4140, %v4142
    %v4144 = vadd.f32 %v4140, %v4143
    %vm4145 = vweird.f32 %v4137
    %vm4146 = vweird.f32 %v4140
    %vm4147 = vmor %vm4145, %vm4146
    %v4148 = vsel %vm4147, %v4140, %v4144
    %v4149 = vand.u32 2147483647, %v4137
    %vm4150 = vcmp.eq.f32.partialorder %v4149, 8.507059e+37
    %v4151 = vand.u32 %v4137, 2147483648
    %v4152 = vor.u32 1.1754944e-38, %v4151
    %v4153 = vsel %vm4150, %v4152, %v4148
    %v4154 = vmul.f32 1.0, %v4153
    %v4155 = vrcp.pop %v4138
    %v4156 = vmul.f32 %v4138, %v4155
    %v4157 = vsub.f32 1.0, %v4156
    %v4158 = vmul.f32 %v4155, %v4157
    %v4159 = vadd.f32 %v4155, %v4158
    %vm4160 = vweird.f32 %v4138
    %vm4161 = vweird.f32 %v4155
    %vm4162 = vmor %vm4160, %vm4161
    %v4163 = vsel %vm4162, %v4155, %v4159
    %v4164 = vand.u32 2147483647, %v4138
    %vm4165 = vcmp.eq.f32.partialorder %v4164, 8.507059e+37
    %v4166 = vand.u32 %v4138, 2147483648
    %v4167 = vor.u32 1.1754944e-38, %v4166
    %v4168 = vsel %vm4165, %v4167, %v4163
    %v4169 = vmul.f32 1.0, %v4168
    %v4170 = vrcp.pop %v4139
    %v4171 = vmul.f32 %v4139, %v4170
    %v4172 = vsub.f32 1.0, %v4171
    %v4173 = vmul.f32 %v4170, %v4172
    %v4174 = vadd.f32 %v4170, %v4173
    %vm4175 = vweird.f32 %v4139
    %vm4176 = vweird.f32 %v4170
    %vm4177 = vmor %vm4175, %vm4176
    %v4178 = vsel %vm4177, %v4170, %v4174
    %v4179 = vand.u32 2147483647, %v4139
    %vm4180 = vcmp.eq.f32.partialorder %v4179, 8.507059e+37
    %v4181 = vand.u32 %v4139, 2147483648
    %v4182 = vor.u32 1.1754944e-38, %v4181
    %v4183 = vsel %vm4180, %v4182, %v4178
    %v4184 = vmul.f32 1.0, %v4183
    %v4185 = vtanh.pop %v4125
    %v4186 = vmul.f32 %v4169, %v3720
    %v4187 = vmul.f32 %v4154, %v4185
    %v4188 = vadd.f32 %v4186, %v4187
    %v4189 = vtanh.pop %v4188
    %v4190 = vmul.f32 %v4184, %v4189
    %v4191 = vpack.c.bf16 %v4190, %v4190
    %4192 = vmatpush.bf16.msra.mxu0 %v1284
    %4193 = vmatpush.bf16.msra.mxu0 %v1280
    %4194 = vmatpush.bf16.msra.mxu0 %v1276
    %4195 = vmatpush.bf16.msra.mxu0 %v1272
    %4196 = vmatpush.bf16.msra.mxu0 %v1268
    %4197 = vmatpush.bf16.msra.mxu0 %v1264
    %4198 = vmatpush.bf16.msra.mxu0 %v1260
    %4199 = vmatpush.bf16.msra.mxu0 %v1256
    %4200 = vmatmul.bf16.gmra.mxu0 %v4191
    %v4201 = vpop.f32.mrf.mxu0
    %v4202 = vadd.f32 %v1060, %v4201
    %v4203 = vpop.f32.mrf.mxu0
    %4204 = vdwg.mxu0
    %4205 = vmatpush.bf16.msra.mxu0 %v1316
    %4206 = vmatpush.bf16.msra.mxu0 %v1312
    %4207 = vmatpush.bf16.msra.mxu0 %v1308
    %4208 = vmatpush.bf16.msra.mxu0 %v1304
    %4209 = vmatpush.bf16.msra.mxu0 %v1300
    %4210 = vmatpush.bf16.msra.mxu0 %v1296
    %4211 = vmatpush.bf16.msra.mxu0 %v1292
    %4212 = vmatpush.bf16.msra.mxu0 %v1288
    %4213 = vmatmul.bf16.gmra.mxu0 %v3891
    %v4214 = vpop.f32.mrf.mxu0
    %v4215 = vadd.f32 %v4202, %v4214
    %v4216 = vpop.f32.mrf.mxu0
    %4217 = vdwg.mxu0
    %4218 = vmatpush.bf16.msra.mxu0 %v1285
    %4219 = vmatpush.bf16.msra.mxu0 %v1281
    %4220 = vmatpush.bf16.msra.mxu0 %v1277
    %4221 = vmatpush.bf16.msra.mxu0 %v1273
    %4222 = vmatpush.bf16.msra.mxu0 %v1269
    %4223 = vmatpush.bf16.msra.mxu0 %v1265
    %4224 = vmatpush.bf16.msra.mxu0 %v1261
    %4225 = vmatpush.bf16.msra.mxu0 %v1257
    %4226 = vmatmul.bf16.gmra.mxu0 %v4191
    %v4227 = vpop.f32.mrf.mxu0
    %v4228 = vadd.f32 %v1061, %v4227
    %v4229 = vpop.f32.mrf.mxu0
    %4230 = vdwg.mxu0
    %4231 = vmatpush.bf16.msra.mxu0 %v1317
    %4232 = vmatpush.bf16.msra.mxu0 %v1313
    %4233 = vmatpush.bf16.msra.mxu0 %v1309
    %4234 = vmatpush.bf16.msra.mxu0 %v1305
    %4235 = vmatpush.bf16.msra.mxu0 %v1301
    %4236 = vmatpush.bf16.msra.mxu0 %v1297
    %4237 = vmatpush.bf16.msra.mxu0 %v1293
    %4238 = vmatpush.bf16.msra.mxu0 %v1289
    %4239 = vmatmul.bf16.gmra.mxu0 %v3891
    %v4240 = vpop.f32.mrf.mxu0
    %v4241 = vadd.f32 %v4228, %v4240
    %v4242 = vpop.f32.mrf.mxu0
    %4243 = vdwg.mxu0
    %4244 = vmatpush.bf16.msra.mxu0 %v1286
    %4245 = vmatpush.bf16.msra.mxu0 %v1282
    %4246 = vmatpush.bf16.msra.mxu0 %v1278
    %4247 = vmatpush.bf16.msra.mxu0 %v1274
    %4248 = vmatpush.bf16.msra.mxu0 %v1270
    %4249 = vmatpush.bf16.msra.mxu0 %v1266
    %4250 = vmatpush.bf16.msra.mxu0 %v1262
    %4251 = vmatpush.bf16.msra.mxu0 %v1258
    %4252 = vmatmul.bf16.gmra.mxu0 %v4191
    %v4253 = vpop.f32.mrf.mxu0
    %v4254 = vadd.f32 %v1062, %v4253
    %v4255 = vpop.f32.mrf.mxu0
    %4256 = vdwg.mxu0
    %4257 = vmatpush.bf16.msra.mxu0 %v1318
    %4258 = vmatpush.bf16.msra.mxu0 %v1314
    %4259 = vmatpush.bf16.msra.mxu0 %v1310
    %4260 = vmatpush.bf16.msra.mxu0 %v1306
    %4261 = vmatpush.bf16.msra.mxu0 %v1302
    %4262 = vmatpush.bf16.msra.mxu0 %v1298
    %4263 = vmatpush.bf16.msra.mxu0 %v1294
    %4264 = vmatpush.bf16.msra.mxu0 %v1290
    %4265 = vmatmul.bf16.gmra.mxu0 %v3891
    %v4266 = vpop.f32.mrf.mxu0
    %v4267 = vadd.f32 %v4254, %v4266
    %v4268 = vpop.f32.mrf.mxu0
    %4269 = vdwg.mxu0
    %4270 = vmatpush.bf16.msra.mxu0 %v1287
    %4271 = vmatpush.bf16.msra.mxu0 %v1283
    %4272 = vmatpush.bf16.msra.mxu0 %v1279
    %4273 = vmatpush.bf16.msra.mxu0 %v1275
    %4274 = vmatpush.bf16.msra.mxu0 %v1271
    %4275 = vmatpush.bf16.msra.mxu0 %v1267
    %4276 = vmatpush.bf16.msra.mxu0 %v1263
    %4277 = vmatpush.bf16.msra.mxu0 %v1259
    %4278 = vmatmul.bf16.gmra.mxu0 %v4191
    %v4279 = vpop.f32.mrf.mxu0
    %v4280 = vadd.f32 %v1063, %v4279
    %v4281 = vpop.f32.mrf.mxu0
    %4282 = vdwg.mxu0
    %4283 = vmatpush.bf16.msra.mxu0 %v1319
    %4284 = vmatpush.bf16.msra.mxu0 %v1315
    %4285 = vmatpush.bf16.msra.mxu0 %v1311
    %4286 = vmatpush.bf16.msra.mxu0 %v1307
    %4287 = vmatpush.bf16.msra.mxu0 %v1303
    %4288 = vmatpush.bf16.msra.mxu0 %v1299
    %4289 = vmatpush.bf16.msra.mxu0 %v1295
    %4290 = vmatpush.bf16.msra.mxu0 %v1291
    %4291 = vmatmul.bf16.gmra.mxu0 %v3891
    %v4292 = vpop.f32.mrf.mxu0
    %v4293 = vadd.f32 %v4280, %v4292
    %v4294 = vpop.f32.mrf.mxu0
    %4295 = vdwg.mxu0
    %v4296 = vxor.u32 %v4215, 2147483648
    %v4297 = vxor.u32 %v4241, 2147483648
    %v4298 = vxor.u32 %v4267, 2147483648
    %v4299 = vmul.f32 %v4296, 1.442695
    %v4300 = vpow.pop %v4299
    %v4301 = vmul.f32 %v4297, 1.442695
    %v4302 = vpow.pop %v4301
    %v4303 = vmul.f32 %v4298, 1.442695
    %v4304 = vpow.pop %v4303
    %v4305 = vadd.f32 %v4300, 1.0
    %v4306 = vadd.f32 %v4302, 1.0
    %v4307 = vadd.f32 %v4304, 1.0
    %v4308 = vrcp.pop %v4305
    %v4309 = vmul.f32 %v4305, %v4308
    %v4310 = vsub.f32 1.0, %v4309
    %v4311 = vmul.f32 %v4308, %v4310
    %v4312 = vadd.f32 %v4308, %v4311
    %vm4313 = vweird.f32 %v4305
    %vm4314 = vweird.f32 %v4308
    %vm4315 = vmor %vm4313, %vm4314
    %v4316 = vsel %vm4315, %v4308, %v4312
    %v4317 = vand.u32 2147483647, %v4305
    %vm4318 = vcmp.eq.f32.partialorder %v4317, 8.507059e+37
    %v4319 = vand.u32 %v4305, 2147483648
    %v4320 = vor.u32 1.1754944e-38, %v4319
    %v4321 = vsel %vm4318, %v4320, %v4316
    %v4322 = vmul.f32 1.0, %v4321
    %v4323 = vrcp.pop %v4306
    %v4324 = vmul.f32 %v4306, %v4323
    %v4325 = vsub.f32 1.0, %v4324
    %v4326 = vmul.f32 %v4323, %v4325
    %v4327 = vadd.f32 %v4323, %v4326
    %vm4328 = vweird.f32 %v4306
    %vm4329 = vweird.f32 %v4323
    %vm4330 = vmor %vm4328, %vm4329
    %v4331 = vsel %vm4330, %v4323, %v4327
    %v4332 = vand.u32 2147483647, %v4306
    %vm4333 = vcmp.eq.f32.partialorder %v4332, 8.507059e+37
    %v4334 = vand.u32 %v4306, 2147483648
    %v4335 = vor.u32 1.1754944e-38, %v4334
    %v4336 = vsel %vm4333, %v4335, %v4331
    %v4337 = vmul.f32 1.0, %v4336
    %v4338 = vrcp.pop %v4307
    %v4339 = vmul.f32 %v4307, %v4338
    %v4340 = vsub.f32 1.0, %v4339
    %v4341 = vmul.f32 %v4338, %v4340
    %v4342 = vadd.f32 %v4338, %v4341
    %vm4343 = vweird.f32 %v4307
    %vm4344 = vweird.f32 %v4338
    %vm4345 = vmor %vm4343, %vm4344
    %v4346 = vsel %vm4345, %v4338, %v4342
    %v4347 = vand.u32 2147483647, %v4307
    %vm4348 = vcmp.eq.f32.partialorder %v4347, 8.507059e+37
    %v4349 = vand.u32 %v4307, 2147483648
    %v4350 = vor.u32 1.1754944e-38, %v4349
    %v4351 = vsel %vm4348, %v4350, %v4346
    %v4352 = vmul.f32 1.0, %v4351
    %v4353 = vtanh.pop %v4293
    %v4354 = vmul.f32 %v4337, %v3888
    %v4355 = vmul.f32 %v4322, %v4353
    %v4356 = vadd.f32 %v4354, %v4355
    %v4357 = vtanh.pop %v4356
    %v4358 = vmul.f32 %v4352, %v4357
    %v4359 = vpack.c.bf16 %v4358, %v4358
    %4360 = vset.pattern.permute.xlu0 7
    %4361 = vperm.xlu0 %4360, %v103
    %v4362 = vpop.permute.xlu0 %4361
    %v4364 = vmul.f32 %v4362, %v104
    %v4365 = vmul.f32 %v4362, %v105
    %v4366 = vmul.f32 %v4362, %v106
    %v4367 = vmul.f32 %v4362, %v107
    %4368 = vmatpush.bf16.msra.mxu0 %v273
    %4369 = vmatpush.bf16.msra.mxu0 %v269
    %4370 = vmatpush.bf16.msra.mxu0 %v265
    %4371 = vmatpush.bf16.msra.mxu0 %v261
    %4372 = vmatpush.bf16.msra.mxu0 %v257
    %4373 = vmatpush.bf16.msra.mxu0 %v253
    %4374 = vmatpush.bf16.msra.mxu0 %v249
    %4375 = vmatpush.bf16.msra.mxu0 %v245
    %4376 = vmatmul.bf16.gmra.mxu0 %v4023
    %v4377 = vpop.f32.mrf.mxu0
    %v4378 = vadd.f32 0.0, %v4377
    %v4379 = vpop.f32.mrf.mxu0
    %4380 = vdwg.mxu0
    %4381 = vmatpush.bf16.msra.mxu0 %v274
    %4382 = vmatpush.bf16.msra.mxu0 %v270
    %4383 = vmatpush.bf16.msra.mxu0 %v266
    %4384 = vmatpush.bf16.msra.mxu0 %v262
    %4385 = vmatpush.bf16.msra.mxu0 %v258
    %4386 = vmatpush.bf16.msra.mxu0 %v254
    %4387 = vmatpush.bf16.msra.mxu0 %v250
    %4388 = vmatpush.bf16.msra.mxu0 %v246
    %4389 = vmatmul.bf16.gmra.mxu0 %v4023
    %v4390 = vpop.f32.mrf.mxu0
    %v4391 = vadd.f32 0.0, %v4390
    %v4392 = vpop.f32.mrf.mxu0
    %4393 = vdwg.mxu0
    %4394 = vmatpush.bf16.msra.mxu0 %v275
    %4395 = vmatpush.bf16.msra.mxu0 %v271
    %4396 = vmatpush.bf16.msra.mxu0 %v267
    %4397 = vmatpush.bf16.msra.mxu0 %v263
    %4398 = vmatpush.bf16.msra.mxu0 %v259
    %4399 = vmatpush.bf16.msra.mxu0 %v255
    %4400 = vmatpush.bf16.msra.mxu0 %v251
    %4401 = vmatpush.bf16.msra.mxu0 %v247
    %4402 = vmatmul.bf16.gmra.mxu0 %v4023
    %v4403 = vpop.f32.mrf.mxu0
    %v4404 = vadd.f32 0.0, %v4403
    %v4405 = vpop.f32.mrf.mxu0
    %4406 = vdwg.mxu0
    %4407 = vmatpush.bf16.msra.mxu0 %v276
    %4408 = vmatpush.bf16.msra.mxu0 %v272
    %4409 = vmatpush.bf16.msra.mxu0 %v268
    %4410 = vmatpush.bf16.msra.mxu0 %v264
    %4411 = vmatpush.bf16.msra.mxu0 %v260
    %4412 = vmatpush.bf16.msra.mxu0 %v256
    %4413 = vmatpush.bf16.msra.mxu0 %v252
    %4414 = vmatpush.bf16.msra.mxu0 %v248
    %4415 = vmatmul.bf16.gmra.mxu0 %v4023
    %v4416 = vpop.f32.mrf.mxu0
    %v4417 = vadd.f32 0.0, %v4416
    %v4418 = vpop.f32.mrf.mxu0
    %4419 = vdwg.mxu0
    %v4420 = vadd.f32 %v4364, %v4378
    %v4421 = vadd.f32 %v4365, %v4391
    %v4422 = vadd.f32 %v4366, %v4404
    %v4423 = vadd.f32 %v4367, %v4417
    %v4424 = vadd.f32 %v4420, %v365
    %v4425 = vadd.f32 %v4421, %v366
    %v4426 = vadd.f32 %v4422, %v367
    %v4427 = vadd.f32 %v4423, %v368
    %v4428 = vxor.u32 %v4424, 2147483648
    %v4429 = vxor.u32 %v4425, 2147483648
    %v4430 = vxor.u32 %v4426, 2147483648
    %v4431 = vmul.f32 %v4428, 1.442695
    %v4432 = vpow.pop %v4431
    %v4433 = vmul.f32 %v4429, 1.442695
    %v4434 = vpow.pop %v4433
    %v4435 = vmul.f32 %v4430, 1.442695
    %v4436 = vpow.pop %v4435
    %v4437 = vadd.f32 %v4432, 1.0
    %v4438 = vadd.f32 %v4434, 1.0
    %v4439 = vadd.f32 %v4436, 1.0
    %v4440 = vrcp.pop %v4437
    %v4441 = vmul.f32 %v4437, %v4440
    %v4442 = vsub.f32 1.0, %v4441
    %v4443 = vmul.f32 %v4440, %v4442
    %v4444 = vadd.f32 %v4440, %v4443
    %vm4445 = vweird.f32 %v4437
    %vm4446 = vweird.f32 %v4440
    %vm4447 = vmor %vm4445, %vm4446
    %v4448 = vsel %vm4447, %v4440, %v4444
    %v4449 = vand.u32 2147483647, %v4437
    %vm4450 = vcmp.eq.f32.partialorder %v4449, 8.507059e+37
    %v4451 = vand.u32 %v4437, 2147483648
    %v4452 = vor.u32 1.1754944e-38, %v4451
    %v4453 = vsel %vm4450, %v4452, %v4448
    %v4454 = vmul.f32 1.0, %v4453
    %v4455 = vrcp.pop %v4438
    %v4456 = vmul.f32 %v4438, %v4455
    %v4457 = vsub.f32 1.0, %v4456
    %v4458 = vmul.f32 %v4455, %v4457
    %v4459 = vadd.f32 %v4455, %v4458
    %vm4460 = vweird.f32 %v4438
    %vm4461 = vweird.f32 %v4455
    %vm4462 = vmor %vm4460, %vm4461
    %v4463 = vsel %vm4462, %v4455, %v4459
    %v4464 = vand.u32 2147483647, %v4438
    %vm4465 = vcmp.eq.f32.partialorder %v4464, 8.507059e+37
    %v4466 = vand.u32 %v4438, 2147483648
    %v4467 = vor.u32 1.1754944e-38, %v4466
    %v4468 = vsel %vm4465, %v4467, %v4463
    %v4469 = vmul.f32 1.0, %v4468
    %v4470 = vrcp.pop %v4439
    %v4471 = vmul.f32 %v4439, %v4470
    %v4472 = vsub.f32 1.0, %v4471
    %v4473 = vmul.f32 %v4470, %v4472
    %v4474 = vadd.f32 %v4470, %v4473
    %vm4475 = vweird.f32 %v4439
    %vm4476 = vweird.f32 %v4470
    %vm4477 = vmor %vm4475, %vm4476
    %v4478 = vsel %vm4477, %v4470, %v4474
    %v4479 = vand.u32 2147483647, %v4439
    %vm4480 = vcmp.eq.f32.partialorder %v4479, 8.507059e+37
    %v4481 = vand.u32 %v4439, 2147483648
    %v4482 = vor.u32 1.1754944e-38, %v4481
    %v4483 = vsel %vm4480, %v4482, %v4478
    %v4484 = vmul.f32 1.0, %v4483
    %v4485 = vtanh.pop %v4427
    %v4486 = vmul.f32 %v4469, %v4020
    %v4487 = vmul.f32 %v4454, %v4485
    %v4488 = vadd.f32 %v4486, %v4487
    %v4489 = vtanh.pop %v4488
    %v4490 = vmul.f32 %v4484, %v4489
    %v4491 = vpack.c.bf16 %v4490, %v4490
    %4492 = vmatpush.bf16.msra.mxu0 %v726
    %4493 = vmatpush.bf16.msra.mxu0 %v722
    %4494 = vmatpush.bf16.msra.mxu0 %v718
    %4495 = vmatpush.bf16.msra.mxu0 %v714
    %4496 = vmatpush.bf16.msra.mxu0 %v710
    %4497 = vmatpush.bf16.msra.mxu0 %v706
    %4498 = vmatpush.bf16.msra.mxu0 %v702
    %4499 = vmatpush.bf16.msra.mxu0 %v698
    %4500 = vmatmul.bf16.gmra.mxu0 %v4491
    %v4501 = vpop.f32.mrf.mxu0
    %v4502 = vadd.f32 %v502, %v4501
    %v4503 = vpop.f32.mrf.mxu0
    %4504 = vdwg.mxu0
    %4505 = vmatpush.bf16.msra.mxu0 %v758
    %4506 = vmatpush.bf16.msra.mxu0 %v754
    %4507 = vmatpush.bf16.msra.mxu0 %v750
    %4508 = vmatpush.bf16.msra.mxu0 %v746
    %4509 = vmatpush.bf16.msra.mxu0 %v742
    %4510 = vmatpush.bf16.msra.mxu0 %v738
    %4511 = vmatpush.bf16.msra.mxu0 %v734
    %4512 = vmatpush.bf16.msra.mxu0 %v730
    %4513 = vmatmul.bf16.gmra.mxu0 %v4191
    %v4514 = vpop.f32.mrf.mxu0
    %v4515 = vadd.f32 %v4502, %v4514
    %v4516 = vpop.f32.mrf.mxu0
    %4517 = vdwg.mxu0
    %4518 = vmatpush.bf16.msra.mxu0 %v727
    %4519 = vmatpush.bf16.msra.mxu0 %v723
    %4520 = vmatpush.bf16.msra.mxu0 %v719
    %4521 = vmatpush.bf16.msra.mxu0 %v715
    %4522 = vmatpush.bf16.msra.mxu0 %v711
    %4523 = vmatpush.bf16.msra.mxu0 %v707
    %4524 = vmatpush.bf16.msra.mxu0 %v703
    %4525 = vmatpush.bf16.msra.mxu0 %v699
    %4526 = vmatmul.bf16.gmra.mxu0 %v4491
    %v4527 = vpop.f32.mrf.mxu0
    %v4528 = vadd.f32 %v503, %v4527
    %v4529 = vpop.f32.mrf.mxu0
    %4530 = vdwg.mxu0
    %4531 = vmatpush.bf16.msra.mxu0 %v759
    %4532 = vmatpush.bf16.msra.mxu0 %v755
    %4533 = vmatpush.bf16.msra.mxu0 %v751
    %4534 = vmatpush.bf16.msra.mxu0 %v747
    %4535 = vmatpush.bf16.msra.mxu0 %v743
    %4536 = vmatpush.bf16.msra.mxu0 %v739
    %4537 = vmatpush.bf16.msra.mxu0 %v735
    %4538 = vmatpush.bf16.msra.mxu0 %v731
    %4539 = vmatmul.bf16.gmra.mxu0 %v4191
    %v4540 = vpop.f32.mrf.mxu0
    %v4541 = vadd.f32 %v4528, %v4540
    %v4542 = vpop.f32.mrf.mxu0
    %4543 = vdwg.mxu0
    %4544 = vmatpush.bf16.msra.mxu0 %v728
    %4545 = vmatpush.bf16.msra.mxu0 %v724
    %4546 = vmatpush.bf16.msra.mxu0 %v720
    %4547 = vmatpush.bf16.msra.mxu0 %v716
    %4548 = vmatpush.bf16.msra.mxu0 %v712
    %4549 = vmatpush.bf16.msra.mxu0 %v708
    %4550 = vmatpush.bf16.msra.mxu0 %v704
    %4551 = vmatpush.bf16.msra.mxu0 %v700
    %4552 = vmatmul.bf16.gmra.mxu0 %v4491
    %v4553 = vpop.f32.mrf.mxu0
    %v4554 = vadd.f32 %v504, %v4553
    %v4555 = vpop.f32.mrf.mxu0
    %4556 = vdwg.mxu0
    %4557 = vmatpush.bf16.msra.mxu0 %v760
    %4558 = vmatpush.bf16.msra.mxu0 %v756
    %4559 = vmatpush.bf16.msra.mxu0 %v752
    %4560 = vmatpush.bf16.msra.mxu0 %v748
    %4561 = vmatpush.bf16.msra.mxu0 %v744
    %4562 = vmatpush.bf16.msra.mxu0 %v740
    %4563 = vmatpush.bf16.msra.mxu0 %v736
    %4564 = vmatpush.bf16.msra.mxu0 %v732
    %4565 = vmatmul.bf16.gmra.mxu0 %v4191
    %v4566 = vpop.f32.mrf.mxu0
    %v4567 = vadd.f32 %v4554, %v4566
    %v4568 = vpop.f32.mrf.mxu0
    %4569 = vdwg.mxu0
    %4570 = vmatpush.bf16.msra.mxu0 %v729
    %4571 = vmatpush.bf16.msra.mxu0 %v725
    %4572 = vmatpush.bf16.msra.mxu0 %v721
    %4573 = vmatpush.bf16.msra.mxu0 %v717
    %4574 = vmatpush.bf16.msra.mxu0 %v713
    %4575 = vmatpush.bf16.msra.mxu0 %v709
    %4576 = vmatpush.bf16.msra.mxu0 %v705
    %4577 = vmatpush.bf16.msra.mxu0 %v701
    %4578 = vmatmul.bf16.gmra.mxu0 %v4491
    %v4579 = vpop.f32.mrf.mxu0
    %v4580 = vadd.f32 %v505, %v4579
    %v4581 = vpop.f32.mrf.mxu0
    %4582 = vdwg.mxu0
    %4583 = vmatpush.bf16.msra.mxu0 %v761
    %4584 = vmatpush.bf16.msra.mxu0 %v757
    %4585 = vmatpush.bf16.msra.mxu0 %v753
    %4586 = vmatpush.bf16.msra.mxu0 %v749
    %4587 = vmatpush.bf16.msra.mxu0 %v745
    %4588 = vmatpush.bf16.msra.mxu0 %v741
    %4589 = vmatpush.bf16.msra.mxu0 %v737
    %4590 = vmatpush.bf16.msra.mxu0 %v733
    %4591 = vmatmul.bf16.gmra.mxu0 %v4191
    %v4592 = vpop.f32.mrf.mxu0
    %v4593 = vadd.f32 %v4580, %v4592
    %v4594 = vpop.f32.mrf.mxu0
    %4595 = vdwg.mxu0
    %v4596 = vxor.u32 %v4515, 2147483648
    %v4597 = vxor.u32 %v4541, 2147483648
    %v4598 = vxor.u32 %v4567, 2147483648
    %v4599 = vmul.f32 %v4596, 1.442695
    %v4600 = vpow.pop %v4599
    %v4601 = vmul.f32 %v4597, 1.442695
    %v4602 = vpow.pop %v4601
    %v4603 = vmul.f32 %v4598, 1.442695
    %v4604 = vpow.pop %v4603
    %v4605 = vadd.f32 %v4600, 1.0
    %v4606 = vadd.f32 %v4602, 1.0
    %v4607 = vadd.f32 %v4604, 1.0
    %v4608 = vrcp.pop %v4605
    %v4609 = vmul.f32 %v4605, %v4608
    %v4610 = vsub.f32 1.0, %v4609
    %v4611 = vmul.f32 %v4608, %v4610
    %v4612 = vadd.f32 %v4608, %v4611
    %vm4613 = vweird.f32 %v4605
    %vm4614 = vweird.f32 %v4608
    %vm4615 = vmor %vm4613, %vm4614
    %v4616 = vsel %vm4615, %v4608, %v4612
    %v4617 = vand.u32 2147483647, %v4605
    %vm4618 = vcmp.eq.f32.partialorder %v4617, 8.507059e+37
    %v4619 = vand.u32 %v4605, 2147483648
    %v4620 = vor.u32 1.1754944e-38, %v4619
    %v4621 = vsel %vm4618, %v4620, %v4616
    %v4622 = vmul.f32 1.0, %v4621
    %v4623 = vrcp.pop %v4606
    %v4624 = vmul.f32 %v4606, %v4623
    %v4625 = vsub.f32 1.0, %v4624
    %v4626 = vmul.f32 %v4623, %v4625
    %v4627 = vadd.f32 %v4623, %v4626
    %vm4628 = vweird.f32 %v4606
    %vm4629 = vweird.f32 %v4623
    %vm4630 = vmor %vm4628, %vm4629
    %v4631 = vsel %vm4630, %v4623, %v4627
    %v4632 = vand.u32 2147483647, %v4606
    %vm4633 = vcmp.eq.f32.partialorder %v4632, 8.507059e+37
    %v4634 = vand.u32 %v4606, 2147483648
    %v4635 = vor.u32 1.1754944e-38, %v4634
    %v4636 = vsel %vm4633, %v4635, %v4631
    %v4637 = vmul.f32 1.0, %v4636
    %v4638 = vrcp.pop %v4607
    %v4639 = vmul.f32 %v4607, %v4638
    %v4640 = vsub.f32 1.0, %v4639
    %v4641 = vmul.f32 %v4638, %v4640
    %v4642 = vadd.f32 %v4638, %v4641
    %vm4643 = vweird.f32 %v4607
    %vm4644 = vweird.f32 %v4638
    %vm4645 = vmor %vm4643, %vm4644
    %v4646 = vsel %vm4645, %v4638, %v4642
    %v4647 = vand.u32 2147483647, %v4607
    %vm4648 = vcmp.eq.f32.partialorder %v4647, 8.507059e+37
    %v4649 = vand.u32 %v4607, 2147483648
    %v4650 = vor.u32 1.1754944e-38, %v4649
    %v4651 = vsel %vm4648, %v4650, %v4646
    %v4652 = vmul.f32 1.0, %v4651
    %v4653 = vtanh.pop %v4593
    %v4654 = vmul.f32 %v4637, %v4188
    %v4655 = vmul.f32 %v4622, %v4653
    %v4656 = vadd.f32 %v4654, %v4655
    %v4657 = vtanh.pop %v4656
    %v4658 = vmul.f32 %v4652, %v4657
    %v4659 = vpack.c.bf16 %v4658, %v4658
    %4660 = vmatpush.bf16.msra.mxu0 %v1284
    %4661 = vmatpush.bf16.msra.mxu0 %v1280
    %4662 = vmatpush.bf16.msra.mxu0 %v1276
    %4663 = vmatpush.bf16.msra.mxu0 %v1272
    %4664 = vmatpush.bf16.msra.mxu0 %v1268
    %4665 = vmatpush.bf16.msra.mxu0 %v1264
    %4666 = vmatpush.bf16.msra.mxu0 %v1260
    %4667 = vmatpush.bf16.msra.mxu0 %v1256
    %4668 = vmatmul.bf16.gmra.mxu0 %v4659
    %v4669 = vpop.f32.mrf.mxu0
    %v4670 = vadd.f32 %v1060, %v4669
    %v4671 = vpop.f32.mrf.mxu0
    %4672 = vdwg.mxu0
    %4673 = vmatpush.bf16.msra.mxu0 %v1316
    %4674 = vmatpush.bf16.msra.mxu0 %v1312
    %4675 = vmatpush.bf16.msra.mxu0 %v1308
    %4676 = vmatpush.bf16.msra.mxu0 %v1304
    %4677 = vmatpush.bf16.msra.mxu0 %v1300
    %4678 = vmatpush.bf16.msra.mxu0 %v1296
    %4679 = vmatpush.bf16.msra.mxu0 %v1292
    %4680 = vmatpush.bf16.msra.mxu0 %v1288
    %4681 = vmatmul.bf16.gmra.mxu0 %v4359
    %v4682 = vpop.f32.mrf.mxu0
    %v4683 = vadd.f32 %v4670, %v4682
    %v4684 = vpop.f32.mrf.mxu0
    %4685 = vdwg.mxu0
    %4686 = vmatpush.bf16.msra.mxu0 %v1285
    %4687 = vmatpush.bf16.msra.mxu0 %v1281
    %4688 = vmatpush.bf16.msra.mxu0 %v1277
    %4689 = vmatpush.bf16.msra.mxu0 %v1273
    %4690 = vmatpush.bf16.msra.mxu0 %v1269
    %4691 = vmatpush.bf16.msra.mxu0 %v1265
    %4692 = vmatpush.bf16.msra.mxu0 %v1261
    %4693 = vmatpush.bf16.msra.mxu0 %v1257
    %4694 = vmatmul.bf16.gmra.mxu0 %v4659
    %v4695 = vpop.f32.mrf.mxu0
    %v4696 = vadd.f32 %v1061, %v4695
    %v4697 = vpop.f32.mrf.mxu0
    %4698 = vdwg.mxu0
    %4699 = vmatpush.bf16.msra.mxu0 %v1317
    %4700 = vmatpush.bf16.msra.mxu0 %v1313
    %4701 = vmatpush.bf16.msra.mxu0 %v1309
    %4702 = vmatpush.bf16.msra.mxu0 %v1305
    %4703 = vmatpush.bf16.msra.mxu0 %v1301
    %4704 = vmatpush.bf16.msra.mxu0 %v1297
    %4705 = vmatpush.bf16.msra.mxu0 %v1293
    %4706 = vmatpush.bf16.msra.mxu0 %v1289
    %4707 = vmatmul.bf16.gmra.mxu0 %v4359
    %v4708 = vpop.f32.mrf.mxu0
    %v4709 = vadd.f32 %v4696, %v4708
    %v4710 = vpop.f32.mrf.mxu0
    %4711 = vdwg.mxu0
    %4712 = vmatpush.bf16.msra.mxu0 %v1286
    %4713 = vmatpush.bf16.msra.mxu0 %v1282
    %4714 = vmatpush.bf16.msra.mxu0 %v1278
    %4715 = vmatpush.bf16.msra.mxu0 %v1274
    %4716 = vmatpush.bf16.msra.mxu0 %v1270
    %4717 = vmatpush.bf16.msra.mxu0 %v1266
    %4718 = vmatpush.bf16.msra.mxu0 %v1262
    %4719 = vmatpush.bf16.msra.mxu0 %v1258
    %4720 = vmatmul.bf16.gmra.mxu0 %v4659
    %v4721 = vpop.f32.mrf.mxu0
    %v4722 = vadd.f32 %v1062, %v4721
    %v4723 = vpop.f32.mrf.mxu0
    %4724 = vdwg.mxu0
    %4725 = vmatpush.bf16.msra.mxu0 %v1318
    %4726 = vmatpush.bf16.msra.mxu0 %v1314
    %4727 = vmatpush.bf16.msra.mxu0 %v1310
    %4728 = vmatpush.bf16.msra.mxu0 %v1306
    %4729 = vmatpush.bf16.msra.mxu0 %v1302
    %4730 = vmatpush.bf16.msra.mxu0 %v1298
    %4731 = vmatpush.bf16.msra.mxu0 %v1294
    %4732 = vmatpush.bf16.msra.mxu0 %v1290
    %4733 = vmatmul.bf16.gmra.mxu0 %v4359
    %v4734 = vpop.f32.mrf.mxu0
    %v4735 = vadd.f32 %v4722, %v4734
    %v4736 = vpop.f32.mrf.mxu0
    %4737 = vdwg.mxu0
    %4738 = vmatpush.bf16.msra.mxu0 %v1287
    %4739 = vmatpush.bf16.msra.mxu0 %v1283
    %4740 = vmatpush.bf16.msra.mxu0 %v1279
    %4741 = vmatpush.bf16.msra.mxu0 %v1275
    %4742 = vmatpush.bf16.msra.mxu0 %v1271
    %4743 = vmatpush.bf16.msra.mxu0 %v1267
    %4744 = vmatpush.bf16.msra.mxu0 %v1263
    %4745 = vmatpush.bf16.msra.mxu0 %v1259
    %4746 = vmatmul.bf16.gmra.mxu0 %v4659
    %v4747 = vpop.f32.mrf.mxu0
    %v4748 = vadd.f32 %v1063, %v4747
    %v4749 = vpop.f32.mrf.mxu0
    %4750 = vdwg.mxu0
    %4751 = vmatpush.bf16.msra.mxu0 %v1319
    %4752 = vmatpush.bf16.msra.mxu0 %v1315
    %4753 = vmatpush.bf16.msra.mxu0 %v1311
    %4754 = vmatpush.bf16.msra.mxu0 %v1307
    %4755 = vmatpush.bf16.msra.mxu0 %v1303
    %4756 = vmatpush.bf16.msra.mxu0 %v1299
    %4757 = vmatpush.bf16.msra.mxu0 %v1295
    %4758 = vmatpush.bf16.msra.mxu0 %v1291
    %4759 = vmatmul.bf16.gmra.mxu0 %v4359
    %v4760 = vpop.f32.mrf.mxu0
    %v4761 = vadd.f32 %v4748, %v4760
    %v4762 = vpop.f32.mrf.mxu0
    %4763 = vdwg.mxu0
    %v4764 = vxor.u32 %v4683, 2147483648
    %v4765 = vxor.u32 %v4709, 2147483648
    %v4766 = vxor.u32 %v4735, 2147483648
    %v4767 = vmul.f32 %v4764, 1.442695
    %v4768 = vpow.pop %v4767
    %v4769 = vmul.f32 %v4765, 1.442695
    %v4770 = vpow.pop %v4769
    %v4771 = vmul.f32 %v4766, 1.442695
    %v4772 = vpow.pop %v4771
    %v4773 = vadd.f32 %v4768, 1.0
    %v4774 = vadd.f32 %v4770, 1.0
    %v4775 = vadd.f32 %v4772, 1.0
    %v4776 = vrcp.pop %v4773
    %v4777 = vmul.f32 %v4773, %v4776
    %v4778 = vsub.f32 1.0, %v4777
    %v4779 = vmul.f32 %v4776, %v4778
    %v4780 = vadd.f32 %v4776, %v4779
    %vm4781 = vweird.f32 %v4773
    %vm4782 = vweird.f32 %v4776
    %vm4783 = vmor %vm4781, %vm4782
    %v4784 = vsel %vm4783, %v4776, %v4780
    %v4785 = vand.u32 2147483647, %v4773
    %vm4786 = vcmp.eq.f32.partialorder %v4785, 8.507059e+37
    %v4787 = vand.u32 %v4773, 2147483648
    %v4788 = vor.u32 1.1754944e-38, %v4787
    %v4789 = vsel %vm4786, %v4788, %v4784
    %v4790 = vmul.f32 1.0, %v4789
    %v4791 = vrcp.pop %v4774
    %v4792 = vmul.f32 %v4774, %v4791
    %v4793 = vsub.f32 1.0, %v4792
    %v4794 = vmul.f32 %v4791, %v4793
    %v4795 = vadd.f32 %v4791, %v4794
    %vm4796 = vweird.f32 %v4774
    %vm4797 = vweird.f32 %v4791
    %vm4798 = vmor %vm4796, %vm4797
    %v4799 = vsel %vm4798, %v4791, %v4795
    %v4800 = vand.u32 2147483647, %v4774
    %vm4801 = vcmp.eq.f32.partialorder %v4800, 8.507059e+37
    %v4802 = vand.u32 %v4774, 2147483648
    %v4803 = vor.u32 1.1754944e-38, %v4802
    %v4804 = vsel %vm4801, %v4803, %v4799
    %v4805 = vmul.f32 1.0, %v4804
    %v4806 = vrcp.pop %v4775
    %v4807 = vmul.f32 %v4775, %v4806
    %v4808 = vsub.f32 1.0, %v4807
    %v4809 = vmul.f32 %v4806, %v4808
    %v4810 = vadd.f32 %v4806, %v4809
    %vm4811 = vweird.f32 %v4775
    %vm4812 = vweird.f32 %v4806
    %vm4813 = vmor %vm4811, %vm4812
    %v4814 = vsel %vm4813, %v4806, %v4810
    %v4815 = vand.u32 2147483647, %v4775
    %vm4816 = vcmp.eq.f32.partialorder %v4815, 8.507059e+37
    %v4817 = vand.u32 %v4775, 2147483648
    %v4818 = vor.u32 1.1754944e-38, %v4817
    %v4819 = vsel %vm4816, %v4818, %v4814
    %v4820 = vmul.f32 1.0, %v4819
    %v4821 = vtanh.pop %v4761
    %v4822 = vmul.f32 %v4805, %v4356
    %v4823 = vmul.f32 %v4790, %v4821
    %v4824 = vadd.f32 %v4822, %v4823
    %v4825 = vtanh.pop %v4824
    %v4826 = vmul.f32 %v4820, %v4825
    %v4827 = vld [vmem:[#allocation9] sm:$0xff]
    %v4828 = vld [vmem:[#allocation9 + $0x8] sm:$0xff]
    %v4829 = vld [vmem:[#allocation9 + $0x10] sm:$0xff]
    %v4830 = vld [vmem:[#allocation9 + $0x18] sm:$0xff]
    %v4831 = vld [vmem:[#allocation9 + $0x20] sm:$0xff]
    %v4832 = vld [vmem:[#allocation9 + $0x28] sm:$0xff]
    %v4833 = vld [vmem:[#allocation9 + $0x30] sm:$0xff]
    %v4834 = vld [vmem:[#allocation9 + $0x38] sm:$0xff]
    %v4835 = vld [vmem:[#allocation9 + $0x40] sm:$0xff]
    %v4836 = vld [vmem:[#allocation9 + $0x48] sm:$0xff]
    %v4837 = vld [vmem:[#allocation9 + $0x50] sm:$0xff]
    %v4838 = vld [vmem:[#allocation9 + $0x58] sm:$0xff]
    %v4839 = vld [vmem:[#allocation9 + $0x60] sm:$0xff]
    %v4840 = vld [vmem:[#allocation9 + $0x68] sm:$0xff]
    %v4841 = vld [vmem:[#allocation9 + $0x70] sm:$0xff]
    %v4842 = vld [vmem:[#allocation9 + $0x78] sm:$0xff]
    %v4843 = vld [vmem:[%s6] sm:$0x1]
    %v4845 = vperm.slane %v4843, 0
    %4847 = vmatpush.msra.mxu0 %v4842
    %4848 = vmatpush.msra.mxu0 %v4841
    %4849 = vmatpush.msra.mxu0 %v4840
    %4850 = vmatpush.msra.mxu0 %v4839
    %4851 = vmatpush.msra.mxu0 %v4838
    %4852 = vmatpush.msra.mxu0 %v4837
    %4853 = vmatpush.msra.mxu0 %v4836
    %4854 = vmatpush.msra.mxu0 %v4835
    %4855 = vmatpush.msra.mxu0 %v4834
    %4856 = vmatpush.msra.mxu0 %v4833
    %4857 = vmatpush.msra.mxu0 %v4832
    %4858 = vmatpush.msra.mxu0 %v4831
    %4859 = vmatpush.msra.mxu0 %v4830
    %4860 = vmatpush.msra.mxu0 %v4829
    %4861 = vmatpush.msra.mxu0 %v4828
    %4862 = vmatpush.msra.mxu0 %v4827
    %4863 = vmatmul.f32.gmra.mxu0 %v4826
    %v4864 = vpop.f32.mrf.mxu0
    %v4865 = vadd.f32 %v4845, %v4864
    %4866 = vdwg.mxu0
    %4867 = vst [vmem:[%s7] sm:$0xff] %v4865
    // Predicated region
    $region50: #{lstm_model_forward.1} parent=1 // pred_check
      _
    $region51: #{lstm_model_forward.1} parent=1 // pred_check_branch
      %4869 = sbr.rel (0) target = $region53
    $region52: #{lstm_model_forward.1} parent=1 // pred_region
      _
    $region53: #{lstm_model_forward.1} parent=1 // pred_fallthru
      _
    // Predicated region
    $region54: #{lstm_model_forward.1} parent=1 // pred_check
      _
    $region55: #{lstm_model_forward.1} parent=1 // pred_check_branch
      %4871 = sbr.rel (0) target = $region57
    $region56: #{lstm_model_forward.1} parent=1 // pred_region
      _
    $region57: #{lstm_model_forward.1} parent=1 // pred_fallthru
      _
    %4872 = vsyncpa [#allocation3], 1
    %4873 = vsyncpa [#allocation5], 1
    %4874 = vsyncpa [#allocation8], 1

</llo_original>
